<compile_context>
chip_gen: v7x
topology: tpu7x:2x2x1
jax: 0.10.0
libtpu: 0.0.40
codegen_flags: <defaults>
</compile_context>

<pallas_src>
import math

import jax
import jax.numpy as jnp
from jax.experimental import pallas as pl
from jax.experimental.pallas import tpu as pltpu

# ---- model hyper-parameters (from NetTGCN.__init__) ----
F1, G1, K1, H1 = 1, 32, 25, 15     # ChebTimeConv(f1, g1, K=k1, H=h1)
G2, K2 = 64, 25                    # ChebConv(g1, g2, K=k2)
C_FC = 512                         # fc1 hidden width
D_OUT = 6                          # number of classes
LANE = 128                         # lane-dense logits slab width
K_PAD = 256                        # conv1 contraction dim padded 240 -> 256

# ---- small example sizes ----
B = 2        # batch
N = 16       # graph nodes (n2 = graphs[0].shape[0])
T = H1       # time samples; the temporal filter spans the whole window

TB_MAX = 128  # batch tile (MXU M dim) once the batch is large enough


def _round_up(v, m):
    return (v + m - 1) // m * m


# --------------------------------------------------------------------------
# Fused Pallas kernel body (one grid step = one batch tile):
# conv1 + ReLU + conv2 + ReLU + fc1 + fc2 + masked log_softmax.
# Weights are bf16 (VMEM-resident across grid steps), accumulation is f32.
# --------------------------------------------------------------------------
def _net_tgcn_kernel(x_ref, w1_ref, b1_ref, w2_ref, b2_ref,
                     fw1_ref, fb1_ref, fw2_ref, fb2_ref, o_ref):
    # Layer 1: ChebTimeConv (real-FFT + Chebyshev basis folded into w1) + bias + ReLU.
    h = jnp.dot(x_ref[...], w1_ref[...], preferred_element_type=jnp.float32) + b1_ref[...]
    h = jnp.maximum(h, 0.0)                                  # (TB, N*G1), f32
    # Layer 2: ChebConv (Chebyshev basis folded into w2) + bias + ReLU.
    h = jnp.dot(h.astype(w2_ref.dtype), w2_ref[...],
                preferred_element_type=jnp.float32) + b2_ref[...]
    h = jnp.maximum(h, 0.0)                                  # (TB, N*G2) == x.view(B, -1)
    # fc1 -> fc2 (no ReLU in between, matching the PyTorch module).
    h = jnp.dot(h.astype(fw1_ref.dtype), fw1_ref[...],
                preferred_element_type=jnp.float32) + fb1_ref[...]
    logits = jnp.dot(h.astype(fw2_ref.dtype), fw2_ref[...],
                     preferred_element_type=jnp.float32) + fb2_ref[...]
    # Masked log_softmax over the lane-dense 128-wide slab (only first D_OUT lanes real).
    lane = jax.lax.broadcasted_iota(jnp.int32, logits.shape, 1)
    logits = jnp.where(lane < D_OUT, logits, -1e30)
    m = jnp.max(logits, axis=-1, keepdims=True)
    s = logits - m
    lse = jnp.log(jnp.sum(jnp.exp(s), axis=-1, keepdims=True))
    o_ref[...] = s - lse


@jax.jit
def net_tgcn_forward(pp, x):
    """pp: prepared (folded, bf16) params; x: (B, N, T) f32 -> (B, D_OUT) log-probs."""
    bx, n, t_len = x.shape
    assert n * t_len <= K_PAD
    wdt = pp["W1"].dtype

    # Flatten (column index = n*T + t), pad contraction 240 -> 256, cast to bf16.
    x_flat = x.reshape(bx, n * t_len)
    x_flat = jnp.pad(x_flat, ((0, 0), (0, K_PAD - n * t_len)))
    # Pad the batch to a multiple of the batch tile.
    tb = TB_MAX if bx >= TB_MAX else _round_up(bx, 8)
    bp = _round_up(bx, tb)
    x_flat = jnp.pad(x_flat, ((0, bp - bx), (0, 0))).astype(wdt)

    const = lambda shape: pl.BlockSpec(shape, lambda b: (0, 0))  # weights: same block
    out_pad = pl.pallas_call(
        _net_tgcn_kernel,
        out_shape=jax.ShapeDtypeStruct((bp, LANE), jnp.float32),
        grid_spec=pltpu.PrefetchScalarGridSpec(
            num_scalar_prefetch=0,
            grid=(bp // tb,),
            in_specs=[
                pl.BlockSpec((tb, K_PAD), lambda b: (b, 0)),     # activations: tiled
                const((K_PAD, N * G1)),                          # W1  (bf16)
                const((1, N * G1)),                              # b1  (f32)
                const((N * G1, N * G2)),                         # W2  (bf16)
                const((1, N * G2)),                              # b2  (f32)
                const((N * G2, C_FC)),                           # fw1 (bf16)
                const((1, C_FC)),                                # fb1 (f32)
                const((C_FC, LANE)),                             # fw2 (bf16, lane-padded)
                const((1, LANE)),                                # fb2 (f32, lane-padded)
            ],
            out_specs=pl.BlockSpec((tb, LANE), lambda b: (b, 0)),
        ),
        compiler_params=pltpu.CompilerParams(
            dimension_semantics=("parallel",)),                  # both TCs on v7x
    )(x_flat, pp["W1"], pp["b1"], pp["W2"], pp["b2"],
      pp["fw1"], pp["fb1"], pp["fw2"], pp["fb2"])
    return out_pad[:bx, :D_OUT]


# --------------------------------------------------------------------------
# Parameter preparation (plain JAX, run once): fold real-FFT and the Chebyshev
# basis into dense per-layer weights so each conv layer is one wide matmul.
#   out[b, n, g] = sum_{k, n', m} T_k[n, n'] * x[b, n', m] * W[k, m, g] + bias[g]
#   =>  W_big[(n', m), (n, g)] = sum_k T_k[n, n'] W[k, m, g]
# Weights are stored in bf16 (halves HBM traffic); biases stay f32.
# --------------------------------------------------------------------------
def build_scaled_laplacian(edge_index, num_nodes):
    src, dst = edge_index
    A = jnp.zeros((num_nodes, num_nodes), jnp.float32).at[src, dst].set(1.0)
    deg = A.sum(axis=1)
    dinv = jnp.where(deg > 0, 1.0 / jnp.sqrt(deg), 0.0)
    A_norm = A * dinv[:, None] * dinv[None, :]
    # ChebConv with sym normalization and lambda_max = 2:  L_hat = -A_norm
    return -A_norm


def chebyshev_basis(L_hat, K):
    """T_0 = I, T_1 = L_hat, T_k = 2 L_hat T_{k-1} - T_{k-2}  ->  (K, N, N)."""
    n = L_hat.shape[0]
    Ts = [jnp.eye(n, dtype=jnp.float32), L_hat]
    for _ in range(2, K):
        Ts.append(2.0 * jnp.dot(L_hat, Ts[-1]) - Ts[-2])
    return jnp.stack(Ts[:K], axis=0)


def prepare_params(params, L_hat, t_len, weight_dtype=jnp.bfloat16):
    n = L_hat.shape[0]
    Tch = chebyshev_basis(L_hat, K1)                         # K1 == K2, shared basis
    # real(fft(x, axis=2))[..., u] = sum_t x[..., t] * cos(2*pi*t*u/T)  (exact, linear)
    t = jnp.arange(t_len, dtype=jnp.float32)
    C = jnp.cos(2.0 * jnp.pi * jnp.outer(t, t) / t_len)      # (T, T)
    w1f = jnp.einsum('tu,kug->ktg', C, params["w1"])         # FFT folded into conv1
    # Fold Chebyshev basis into the weights -> one (K, N*G) matmul per layer.
    W1 = jnp.einsum('knp,ktg->ptng', Tch, w1f).reshape(n * t_len, n * G1)
    W1 = jnp.pad(W1, ((0, K_PAD - n * t_len), (0, 0)))       # K pad 240 -> 256 (zeros)
    W2 = jnp.einsum('knp,kmg->pmng', Tch, params["w2"]).reshape(n * G1, n * G2)
    b1 = jnp.broadcast_to(params["b1"][None, :], (n, G1)).reshape(1, n * G1)
    b2 = jnp.broadcast_to(params["b2"][None, :], (n, G2)).reshape(1, n * G2)
    # Pad fc2 to a lane-dense 128-wide output slab (sliced back to D_OUT in the wrapper).
    fw2 = jnp.zeros((C_FC, LANE), jnp.float32).at[:, :D_OUT].set(params["fw2"])
    fb2 = jnp.zeros((1, LANE), jnp.float32).at[:, :D_OUT].set(params["fb2"][None, :])
    wd = weight_dtype
    return dict(W1=W1.astype(wd), b1=b1, W2=W2.astype(wd), b2=b2,
                fw1=params["fw1"].astype(wd), fb1=params["fb1"][None, :],
                fw2=fw2.astype(wd), fb2=fb2)


def init_params(key):
    ks = jax.random.split(key, 8)
    w1 = jax.random.normal(ks[0], (K1, H1 * F1, G1), jnp.float32) / math.sqrt(K1 * H1 * F1)
    b1 = jax.random.normal(ks[1], (G1,), jnp.float32) * 0.01
    w2 = jax.random.normal(ks[2], (K2, G1, G2), jnp.float32) / math.sqrt(K2 * G1)
    b2 = jax.random.normal(ks[3], (G2,), jnp.float32) * 0.01
    fw1 = jax.random.normal(ks[4], (N * G2, C_FC), jnp.float32) / math.sqrt(N * G2)
    fb1 = jax.random.normal(ks[5], (C_FC,), jnp.float32) * 0.01
    fw2 = jax.random.normal(ks[6], (C_FC, D_OUT), jnp.float32) / math.sqrt(C_FC)
    fb2 = jax.random.normal(ks[7], (D_OUT,), jnp.float32) * 0.01
    return dict(w1=w1, b1=b1, w2=w2, b2=b2, fw1=fw1, fb1=fb1, fw2=fw2, fb2=fb2)


# --------------------------------------------------------------------------
# References for correctness checking.
# --------------------------------------------------------------------------
@jax.jit
def folded_forward_ref(pp, x):
    """Plain-JAX forward on the FOLDED params (same quantization as the kernel)."""
    bx, n, t_len = x.shape
    wdt = pp["W1"].dtype
    xf = jnp.pad(x.reshape(bx, n * t_len),
                 ((0, 0), (0, K_PAD - n * t_len))).astype(wdt)
    h = jnp.dot(xf, pp["W1"], preferred_element_type=jnp.float32) + pp["b1"]
    h = jnp.maximum(h, 0.0)
    h = jnp.dot(h.astype(wdt), pp["W2"], preferred_element_type=jnp.float32) + pp["b2"]
    h = jnp.maximum(h, 0.0)
    h = jnp.dot(h.astype(wdt), pp["fw1"], preferred_element_type=jnp.float32) + pp["fb1"]
    logits = jnp.dot(h.astype(wdt), pp["fw2"],
                     preferred_element_type=jnp.float32) + pp["fb2"]
    return jax.nn.log_softmax(logits[:, :D_OUT], axis=1)


def _cheb_layer_ref(L_hat, x, W, b):
    K = W.shape[0]
    z_prev = x
    z_cur = jnp.einsum('pq,bqm->bpm', L_hat, x)
    acc = jnp.einsum('bnm,mg->bng', x, W[0]) + jnp.einsum('bnm,mg->bng', z_cur, W[1])
    for k in range(2, K):
        z_next = 2.0 * jnp.einsum('pq,bqm->bpm', L_hat, z_cur) - z_prev
        acc = acc + jnp.einsum('bnm,mg->bng', z_next, W[k])
        z_prev, z_cur = z_cur, z_next
    return acc + b.reshape(1, 1, -1)


@jax.jit
def reference_forward(params, x, L_hat):
    """Unfolded f32 reference: FFT (cos matrix) + explicit Chebyshev recurrence."""
    bx, n, t_len = x.shape
    t = jnp.arange(t_len, dtype=jnp.float32)
    C = jnp.cos(2.0 * jnp.pi * jnp.outer(t, t) / t_len)
    xf = jnp.einsum('bnt,tu->bnu', x, C)                     # == real(fft(x, axis=2))
    h = jax.nn.relu(_cheb_layer_ref(L_hat, xf, params["w1"], params["b1"]))
    h = jax.nn.relu(_cheb_layer_ref(L_hat, h, params["w2"], params["b2"]))
    h = h.reshape(bx, -1)
    h = h @ params["fw1"] + params["fb1"]
    logits = h @ params["fw2"] + params["fb2"]
    return jax.nn.log_softmax(logits, axis=1)


if __name__ == "__main__":
    key = jax.random.PRNGKey(0)
    k_x, k_p, k_big = jax.random.split(key, 3)

    # deterministic input and ring graph
    x = jax.random.normal(k_x, (B, N, T), jnp.float32)
    idx = jnp.arange(N)
    edge_index = jnp.stack([jnp.concatenate([idx, (idx + 1) % N]),
                            jnp.concatenate([(idx + 1) % N, idx])])
    L_hat = build_scaled_laplacian(edge_index, N)

    params = init_params(k_p)
    pp = prepare_params(params, L_hat, T, weight_dtype=jnp.bfloat16)   # one-time fold
    pp_f32 = prepare_params(params, L_hat, T, weight_dtype=jnp.float32)

    out = jax.block_until_ready(net_tgcn_forward(pp, x))
    assert out.shape == (B, D_OUT)
    assert bool(jnp.all(jnp.isfinite(out)))
    # rows of log_softmax must exponentiate-sum to ~1
    assert bool(jnp.allclose(jnp.sum(jnp.exp(out), axis=1), 1.0, atol=1e-4))

    # (1) fold exactness: f32 folded forward vs unfolded FFT+Chebyshev reference.
    ref_f32 = jax.block_until_ready(reference_forward(params, x, L_hat))
    fold_f32 = jax.block_until_ready(folded_forward_ref(pp_f32, x))
    err_fold = float(jnp.max(jnp.abs(fold_f32 - ref_f32)))
    assert err_fold < 5e-3, f"fold mismatch vs reference: max abs err = {err_fold}"

    # (2) kernel exactness: Pallas kernel vs plain-JAX forward on the same bf16 params.
    ref_bf16 = jax.block_until_ready(folded_forward_ref(pp, x))
    err_kernel = float(jnp.max(jnp.abs(out - ref_bf16)))
    assert err_kernel < 2e-3, f"kernel mismatch vs folded ref: max abs err = {err_kernel}"

    # (3) end-to-end vs the f32 reference (loose bound: bf16 weight/activation quantization).
    err_total = float(jnp.max(jnp.abs(out - ref_f32)))
    assert err_total < 0.25, f"bf16 quantization error too large: max abs err = {err_total}"

    # (4) batched call: multiple grid steps (TB=128), weights VMEM-resident across steps.
    x_big = jax.random.normal(k_big, (256, N, T), jnp.float32)
    out_big = jax.block_until_ready(net_tgcn_forward(pp, x_big))
    ref_big = jax.block_until_ready(folded_forward_ref(pp, x_big))
    assert out_big.shape == (256, D_OUT)
    assert bool(jnp.all(jnp.isfinite(out_big)))
    err_big = float(jnp.max(jnp.abs(out_big - ref_big)))
    assert err_big < 2e-3, f"batched kernel mismatch: max abs err = {err_big}"

    print("KERNEL_OK")
</pallas_src>

<mosaic_0001>
module attributes {stable_mosaic.version = 11 : i64} {
  func.func @_net_tgcn_kernel(%arg0: i32, %arg1: memref<8x256xbf16, #tpu.memory_space<vmem>>, %arg2: memref<256x512xbf16, #tpu.memory_space<vmem>>, %arg3: memref<1x512xf32, #tpu.memory_space<vmem>>, %arg4: memref<512x1024xbf16, #tpu.memory_space<vmem>>, %arg5: memref<1x1024xf32, #tpu.memory_space<vmem>>, %arg6: memref<1024x512xbf16, #tpu.memory_space<vmem>>, %arg7: memref<1x512xf32, #tpu.memory_space<vmem>>, %arg8: memref<512x128xbf16, #tpu.memory_space<vmem>>, %arg9: memref<1x128xf32, #tpu.memory_space<vmem>>, %arg10: memref<8x128xf32, #tpu.memory_space<vmem>>) attributes {dimension_semantics = [#tpu.dimension_semantics<parallel>], iteration_bounds = array<i64: 1>, scalar_prefetch = 0 : i64, scratch_operands = 0 : i64, tpu.core_type = #tpu.core_type<tc>, window_params = [{transform_indices = @transform_0, window_bounds = array<i64: 8, 256>}, {pipeline_mode = #tpu.pipeline_mode<synchronous>, transform_indices = @transform_1, window_bounds = array<i64: 256, 512>}, {pipeline_mode = #tpu.pipeline_mode<synchronous>, transform_indices = @transform_2, window_bounds = array<i64: 1, 512>}, {pipeline_mode = #tpu.pipeline_mode<synchronous>, transform_indices = @transform_3, window_bounds = array<i64: 512, 1024>}, {pipeline_mode = #tpu.pipeline_mode<synchronous>, transform_indices = @transform_4, window_bounds = array<i64: 1, 1024>}, {pipeline_mode = #tpu.pipeline_mode<synchronous>, transform_indices = @transform_5, window_bounds = array<i64: 1024, 512>}, {pipeline_mode = #tpu.pipeline_mode<synchronous>, transform_indices = @transform_6, window_bounds = array<i64: 1, 512>}, {pipeline_mode = #tpu.pipeline_mode<synchronous>, transform_indices = @transform_7, window_bounds = array<i64: 512, 128>}, {pipeline_mode = #tpu.pipeline_mode<synchronous>, transform_indices = @transform_8, window_bounds = array<i64: 1, 128>}, {transform_indices = @transform_9, window_bounds = array<i64: 8, 128>}]} {
    %c0 = arith.constant 0 : index
    %c0_0 = arith.constant 0 : index
    %0 = vector.load %arg1[%c0, %c0_0] : memref<8x256xbf16, #tpu.memory_space<vmem>>, vector<8x256xbf16>
    %c0_1 = arith.constant 0 : index
    %c0_2 = arith.constant 0 : index
    %1 = vector.load %arg2[%c0_1, %c0_2] : memref<256x512xbf16, #tpu.memory_space<vmem>>, vector<256x512xbf16>
    %cst = arith.constant dense<0.000000e+00> : vector<8x512xf32>
    %2 = tpu.matmul %0, %1, %cst {dimension_numbers = #tpu.dot_dimension_numbers<[1], [0], [0], [1], [0, 0, 1, 1], [], []>} : vector<8x256xbf16>, vector<256x512xbf16>, vector<8x512xf32> -> vector<8x512xf32>
    %c0_3 = arith.constant 0 : index
    %c0_4 = arith.constant 0 : index
    %3 = vector.load %arg3[%c0_3, %c0_4] : memref<1x512xf32, #tpu.memory_space<vmem>>, vector<1x512xf32>
    %4 = vector.broadcast %3 : vector<1x512xf32> to vector<8x512xf32>
    %5 = arith.addf %2, %4 : vector<8x512xf32>
    %cst_5 = arith.constant 0.000000e+00 : f32
    %6 = vector.broadcast %cst_5 : f32 to vector<8x512xf32>
    %7 = arith.maximumf %5, %6 : vector<8x512xf32>
    %8 = arith.truncf %7 : vector<8x512xf32> to vector<8x512xbf16>
    %c0_6 = arith.constant 0 : index
    %c0_7 = arith.constant 0 : index
    %9 = vector.load %arg4[%c0_6, %c0_7] : memref<512x1024xbf16, #tpu.memory_space<vmem>>, vector<512x1024xbf16>
    %cst_8 = arith.constant dense<0.000000e+00> : vector<8x1024xf32>
    %10 = tpu.matmul %8, %9, %cst_8 {dimension_numbers = #tpu.dot_dimension_numbers<[1], [0], [0], [1], [0, 0, 1, 1], [], []>} : vector<8x512xbf16>, vector<512x1024xbf16>, vector<8x1024xf32> -> vector<8x1024xf32>
    %c0_9 = arith.constant 0 : index
    %c0_10 = arith.constant 0 : index
    %11 = vector.load %arg5[%c0_9, %c0_10] : memref<1x1024xf32, #tpu.memory_space<vmem>>, vector<1x1024xf32>
    %12 = vector.broadcast %11 : vector<1x1024xf32> to vector<8x1024xf32>
    %13 = arith.addf %10, %12 : vector<8x1024xf32>
    %cst_11 = arith.constant 0.000000e+00 : f32
    %14 = vector.broadcast %cst_11 : f32 to vector<8x1024xf32>
    %15 = arith.maximumf %13, %14 : vector<8x1024xf32>
    %16 = arith.truncf %15 : vector<8x1024xf32> to vector<8x1024xbf16>
    %c0_12 = arith.constant 0 : index
    %c0_13 = arith.constant 0 : index
    %17 = vector.load %arg6[%c0_12, %c0_13] : memref<1024x512xbf16, #tpu.memory_space<vmem>>, vector<1024x512xbf16>
    %cst_14 = arith.constant dense<0.000000e+00> : vector<8x512xf32>
    %18 = tpu.matmul %16, %17, %cst_14 {dimension_numbers = #tpu.dot_dimension_numbers<[1], [0], [0], [1], [0, 0, 1, 1], [], []>} : vector<8x1024xbf16>, vector<1024x512xbf16>, vector<8x512xf32> -> vector<8x512xf32>
    %c0_15 = arith.constant 0 : index
    %c0_16 = arith.constant 0 : index
    %19 = vector.load %arg7[%c0_15, %c0_16] : memref<1x512xf32, #tpu.memory_space<vmem>>, vector<1x512xf32>
    %20 = vector.broadcast %19 : vector<1x512xf32> to vector<8x512xf32>
    %21 = arith.addf %18, %20 : vector<8x512xf32>
    %22 = arith.truncf %21 : vector<8x512xf32> to vector<8x512xbf16>
    %c0_17 = arith.constant 0 : index
    %c0_18 = arith.constant 0 : index
    %23 = vector.load %arg8[%c0_17, %c0_18] : memref<512x128xbf16, #tpu.memory_space<vmem>>, vector<512x128xbf16>
    %cst_19 = arith.constant dense<0.000000e+00> : vector<8x128xf32>
    %24 = tpu.matmul %22, %23, %cst_19 {dimension_numbers = #tpu.dot_dimension_numbers<[1], [0], [0], [1], [0, 0, 1, 1], [], []>} : vector<8x512xbf16>, vector<512x128xbf16>, vector<8x128xf32> -> vector<8x128xf32>
    %c0_20 = arith.constant 0 : index
    %c0_21 = arith.constant 0 : index
    %25 = vector.load %arg9[%c0_20, %c0_21] : memref<1x128xf32, #tpu.memory_space<vmem>>, vector<1x128xf32>
    %26 = vector.broadcast %25 : vector<1x128xf32> to vector<8x128xf32>
    %27 = arith.addf %24, %26 : vector<8x128xf32>
    %28 = tpu.iota {dimensions = array<i32: 1>} : vector<8x128xi32>
    %c6_i32 = arith.constant 6 : i32
    %29 = vector.broadcast %c6_i32 : i32 to vector<8x128xi32>
    %30 = arith.cmpi slt, %28, %29 : vector<8x128xi32>
    %cst_22 = arith.constant -1.000000e+30 : f32
    %31 = vector.broadcast %cst_22 : f32 to vector<8x128xf32>
    %32 = arith.select %30, %27, %31 : vector<8x128xi1>, vector<8x128xf32>
    %cst_23 = arith.constant dense<0xFF800000> : vector<8xf32>
    %33 = vector.multi_reduction <maximumf>, %32, %cst_23 [1] : vector<8x128xf32> to vector<8xf32>
    %34 = vector.shape_cast %33 : vector<8xf32> to vector<8x1xf32>
    %35 = vector.broadcast %34 : vector<8x1xf32> to vector<8x128xf32>
    %36 = arith.subf %32, %35 : vector<8x128xf32>
    %37 = math.exp %36 : vector<8x128xf32>
    %cst_24 = arith.constant dense<0.000000e+00> : vector<8xf32>
    %38 = vector.multi_reduction <add>, %37, %cst_24 [1] : vector<8x128xf32> to vector<8xf32>
    %39 = vector.shape_cast %38 : vector<8xf32> to vector<8x1xf32>
    %40 = math.log %39 : vector<8x1xf32>
    %41 = vector.broadcast %40 : vector<8x1xf32> to vector<8x128xf32>
    %42 = arith.subf %36, %41 : vector<8x128xf32>
    %c0_25 = arith.constant 0 : index
    %c0_26 = arith.constant 0 : index
    %43 = vector.load %arg10[%c0_25, %c0_26] : memref<8x128xf32, #tpu.memory_space<vmem>>, vector<8x128xf32>
    tpu.vector_store %arg10[%c0_25, %c0_26], %42 {strides = array<i32>} : memref<8x128xf32, #tpu.memory_space<vmem>>, vector<8x128xf32>,
    return
  }
  func.func @transform_0(%arg0: i32) -> (i32, i32) {
    %c0_i32 = arith.constant 0 : i32
    %c0_i32_0 = arith.constant 0 : i32
    return %arg0, %c0_i32 : i32, i32
  }
  func.func @transform_1(%arg0: i32) -> (i32, i32) {
    %c0_i32 = arith.constant 0 : i32
    %c0_i32_0 = arith.constant 0 : i32
    %c0_i32_1 = arith.constant 0 : i32
    return %c0_i32, %c0_i32_0 : i32, i32
  }
  func.func @transform_2(%arg0: i32) -> (i32, i32) {
    %c0_i32 = arith.constant 0 : i32
    %c0_i32_0 = arith.constant 0 : i32
    %c0_i32_1 = arith.constant 0 : i32
    return %c0_i32, %c0_i32_0 : i32, i32
  }
  func.func @transform_3(%arg0: i32) -> (i32, i32) {
    %c0_i32 = arith.constant 0 : i32
    %c0_i32_0 = arith.constant 0 : i32
    %c0_i32_1 = arith.constant 0 : i32
    return %c0_i32, %c0_i32_0 : i32, i32
  }
  func.func @transform_4(%arg0: i32) -> (i32, i32) {
    %c0_i32 = arith.constant 0 : i32
    %c0_i32_0 = arith.constant 0 : i32
    %c0_i32_1 = arith.constant 0 : i32
    return %c0_i32, %c0_i32_0 : i32, i32
  }
  func.func @transform_5(%arg0: i32) -> (i32, i32) {
    %c0_i32 = arith.constant 0 : i32
    %c0_i32_0 = arith.constant 0 : i32
    %c0_i32_1 = arith.constant 0 : i32
    return %c0_i32, %c0_i32_0 : i32, i32
  }
  func.func @transform_6(%arg0: i32) -> (i32, i32) {
    %c0_i32 = arith.constant 0 : i32
    %c0_i32_0 = arith.constant 0 : i32
    %c0_i32_1 = arith.constant 0 : i32
    return %c0_i32, %c0_i32_0 : i32, i32
  }
  func.func @transform_7(%arg0: i32) -> (i32, i32) {
    %c0_i32 = arith.constant 0 : i32
    %c0_i32_0 = arith.constant 0 : i32
    %c0_i32_1 = arith.constant 0 : i32
    return %c0_i32, %c0_i32_0 : i32, i32
  }
  func.func @transform_8(%arg0: i32) -> (i32, i32) {
    %c0_i32 = arith.constant 0 : i32
    %c0_i32_0 = arith.constant 0 : i32
    %c0_i32_1 = arith.constant 0 : i32
    return %c0_i32, %c0_i32_0 : i32, i32
  }
  func.func @transform_9(%arg0: i32) -> (i32, i32) {
    %c0_i32 = arith.constant 0 : i32
    %c0_i32_0 = arith.constant 0 : i32
    return %arg0, %c0_i32 : i32, i32
  }
}

</mosaic_0001>

<llo_original>
// kernel: net_tgcn_forward.1
$region0: #{net_tgcn_forward.1}
  #allocation0 [shape = 'u32[]', space=smem, size = 0x4, offset = 0x4, fixed_abs, tag = 'smem constant byte address 0x4 - core index']
  #allocation1 [shape = 'u32[144,128]{1,0:T(1,128)}', space=vmem, size = 0x12000, scoped, tag = 'internal scratch']
  %s0 = inlined_call_operand.vmem [shape: bf16[8,256], index: 0, kind: input, shape index: {}]
  %s1 = inlined_call_operand.hbm [shape: bf16[256,512], index: 1, kind: input, shape index: {}]
  %s2 = inlined_call_operand.vmem [shape: f32[1,512], index: 2, kind: input, shape index: {}]
  %s3 = inlined_call_operand.hbm [shape: bf16[512,1024], index: 3, kind: input, shape index: {}]
  %s4 = inlined_call_operand.vmem [shape: f32[1,1024], index: 4, kind: input, shape index: {}]
  %s5 = inlined_call_operand.hbm [shape: bf16[1024,512], index: 5, kind: input, shape index: {}]
  %s6 = inlined_call_operand.vmem [shape: f32[1,512], index: 6, kind: input, shape index: {}]
  %s7 = inlined_call_operand.hbm [shape: bf16[512,128], index: 7, kind: input, shape index: {}]
  %s8 = inlined_call_operand.vmem [shape: f32[1,128], index: 8, kind: input, shape index: {}]
  %s9 = inlined_call_operand.vmem [shape: f32[8,128], index: 9, kind: output, shape index: {}]
  %s10 = sld [smem:[#allocation0]]
  $region62: #{net_tgcn_forward.1} parent=0
    _
  %s12 = ssub.s32 1, %s10
  %s13 = scalar_select 0, %s12, %s10
  $region1: #{net_tgcn_forward.1} parent=0
    #allocation2 [shape = 'u8[262144]{0}', space=vmem, size = 0x40000, scoped, tag = 'input window, operand 1, single buffered']
    #allocation3 [shape = 's32[1]{0}', space=sflag, size = 0x4, scoped, tag = 'scoped memory for net_tgcn_forward.1']
    #allocation4 [shape = 'u8[1048576]{0}', space=vmem, size = 0x100000, scoped, tag = 'input window, operand 3, single buffered']
    #allocation5 [shape = 's32[1]{0}', space=sflag, size = 0x4, scoped, tag = 'scoped memory for net_tgcn_forward.1']
    #allocation6 [shape = 'u8[1048576]{0}', space=vmem, size = 0x100000, scoped, tag = 'input window, operand 5, single buffered']
    #allocation7 [shape = 'u8[131072]{0}', space=vmem, size = 0x20000, scoped, tag = 'input window, operand 7, single buffered']
    #allocation8 [shape = 's32[1]{0}', space=sflag, size = 0x4, scoped, tag = 'scoped memory for net_tgcn_forward.1']
    %14 = vsyncpa [#allocation3], 0
    %15 = vsyncpa [#allocation5], 0
    %16 = vsyncpa [#allocation8], 0
    // Predicated region
    $region2: #{net_tgcn_forward.1} parent=1 // pred_check
      _
    $region3: #{net_tgcn_forward.1} parent=1 // pred_check_branch
      %18 = sbr.rel (0) target = $region5
    $region4: #{net_tgcn_forward.1} parent=1 // pred_region
      _
    $region5: #{net_tgcn_forward.1} parent=1 // pred_fallthru
      _
    // Predicated region
    $region6: #{net_tgcn_forward.1} parent=1 // pred_check
      _
    $region7: #{net_tgcn_forward.1} parent=1 // pred_check_branch
      %20 = sbr.rel (0) target = $region9
    $region8: #{net_tgcn_forward.1} parent=1 // pred_region
      %s22 = ssub.s32 8192, 8192
      %23 = vsyncadd [#allocation3], %s22
      %s24 = sshll.u32 [#allocation2], 4
      %s25 = int_to_ptr.vmem [resolvable:$true] %s24
      %30 = dma.hbm_to_vmem [thread:$0]  %s1, 8192, %s25, [#allocation3], 256, 256, 16
    $region9: #{net_tgcn_forward.1} parent=1 // pred_fallthru
      _
    // Predicated region
    $region10: #{net_tgcn_forward.1} parent=1 // pred_check
      _
    $region11: #{net_tgcn_forward.1} parent=1 // pred_check_branch
      %32 = sbr.rel (0) target = $region13
    $region12: #{net_tgcn_forward.1} parent=1 // pred_region
      _
    $region13: #{net_tgcn_forward.1} parent=1 // pred_fallthru
      _
    // Predicated region
    $region14: #{net_tgcn_forward.1} parent=1 // pred_check
      _
    $region15: #{net_tgcn_forward.1} parent=1 // pred_check_branch
      %34 = sbr.rel (0) target = $region17
    $region16: #{net_tgcn_forward.1} parent=1 // pred_region
      %s36 = ssub.s32 32768, 32768
      %37 = vsyncadd [#allocation5], %s36
      %s38 = sshll.u32 [#allocation4], 4
      %s39 = int_to_ptr.vmem [resolvable:$true] %s38
      %44 = dma.hbm_to_vmem [thread:$0]  %s3, 32768, %s39, [#allocation5], 512, 512, 32
    $region17: #{net_tgcn_forward.1} parent=1 // pred_fallthru
      _
    // Predicated region
    $region18: #{net_tgcn_forward.1} parent=1 // pred_check
      _
    $region19: #{net_tgcn_forward.1} parent=1 // pred_check_branch
      %46 = sbr.rel (0) target = $region21
    $region20: #{net_tgcn_forward.1} parent=1 // pred_region
      _
    $region21: #{net_tgcn_forward.1} parent=1 // pred_fallthru
      _
    // Predicated region
    $region22: #{net_tgcn_forward.1} parent=1 // pred_check
      _
    $region23: #{net_tgcn_forward.1} parent=1 // pred_check_branch
      %48 = sbr.rel (0) target = $region25
    $region24: #{net_tgcn_forward.1} parent=1 // pred_region
      %s50 = ssub.s32 32768, 32768
      %51 = vsyncadd [#allocation5], %s50
      %s52 = sshll.u32 [#allocation6], 4
      %s53 = int_to_ptr.vmem [resolvable:$true] %s52
      %58 = dma.hbm_to_vmem [thread:$0]  %s5, 32768, %s53, [#allocation5], 256, 256, 16
    $region25: #{net_tgcn_forward.1} parent=1 // pred_fallthru
      _
    // Predicated region
    $region26: #{net_tgcn_forward.1} parent=1 // pred_check
      _
    $region27: #{net_tgcn_forward.1} parent=1 // pred_check_branch
      %60 = sbr.rel (0) target = $region29
    $region28: #{net_tgcn_forward.1} parent=1 // pred_region
      _
    $region29: #{net_tgcn_forward.1} parent=1 // pred_fallthru
      _
    // Predicated region
    $region30: #{net_tgcn_forward.1} parent=1 // pred_check
      _
    $region31: #{net_tgcn_forward.1} parent=1 // pred_check_branch
      %62 = sbr.rel (0) target = $region33
    $region32: #{net_tgcn_forward.1} parent=1 // pred_region
      %s64 = ssub.s32 4096, 4096
      %65 = vsyncadd [#allocation8], %s64
      %s66 = sshll.u32 [#allocation7], 4
      %s67 = int_to_ptr.vmem [resolvable:$true] %s66
      %72 = dma.hbm_to_vmem [thread:$0]  %s7, 4096, %s67, [#allocation8], 64, 64, 4
    $region33: #{net_tgcn_forward.1} parent=1 // pred_fallthru
      _
    // Predicated region
    $region34: #{net_tgcn_forward.1} parent=1 // pred_check
      _
    $region35: #{net_tgcn_forward.1} parent=1 // pred_check_branch
      %74 = sbr.rel (0) target = $region37
    $region36: #{net_tgcn_forward.1} parent=1 // pred_region
      _
    $region37: #{net_tgcn_forward.1} parent=1 // pred_fallthru
      _
    // Predicated region
    $region38: #{net_tgcn_forward.1} parent=1 // pred_check
      _
    $region39: #{net_tgcn_forward.1} parent=1 // pred_check_branch
      %76 = sbr.rel (0) target = $region41
    $region40: #{net_tgcn_forward.1} parent=1 // pred_region
      %77 = dma.done [#allocation3], 8192
    $region41: #{net_tgcn_forward.1} parent=1 // pred_fallthru
      _
    // Predicated region
    $region42: #{net_tgcn_forward.1} parent=1 // pred_check
      _
    $region43: #{net_tgcn_forward.1} parent=1 // pred_check_branch
      %79 = sbr.rel (0) target = $region45
    $region44: #{net_tgcn_forward.1} parent=1 // pred_region
      %80 = dma.done [#allocation5], 32768
    $region45: #{net_tgcn_forward.1} parent=1 // pred_fallthru
      _
    // Predicated region
    $region46: #{net_tgcn_forward.1} parent=1 // pred_check
      _
    $region47: #{net_tgcn_forward.1} parent=1 // pred_check_branch
      %82 = sbr.rel (0) target = $region49
    $region48: #{net_tgcn_forward.1} parent=1 // pred_region
      %83 = dma.done [#allocation5], 32768
    $region49: #{net_tgcn_forward.1} parent=1 // pred_fallthru
      _
    // Predicated region
    $region50: #{net_tgcn_forward.1} parent=1 // pred_check
      _
    $region51: #{net_tgcn_forward.1} parent=1 // pred_check_branch
      %85 = sbr.rel (0) target = $region53
    $region52: #{net_tgcn_forward.1} parent=1 // pred_region
      %86 = dma.done [#allocation8], 4096
    $region53: #{net_tgcn_forward.1} parent=1 // pred_fallthru
      _
    %v88 = vld [vmem:[%s0] sm:$0xff]
    %v89 = vld [vmem:[#allocation2] sm:$0xff]
    %v90 = vld [vmem:[#allocation2 + $0x8] sm:$0xff]
    %v91 = vld [vmem:[#allocation2 + $0x10] sm:$0xff]
    %v92 = vld [vmem:[#allocation2 + $0x18] sm:$0xff]
    %v93 = vld [vmem:[#allocation2 + $0x20] sm:$0xff]
    %v94 = vld [vmem:[#allocation2 + $0x28] sm:$0xff]
    %v95 = vld [vmem:[#allocation2 + $0x30] sm:$0xff]
    %v96 = vld [vmem:[#allocation2 + $0x38] sm:$0xff]
    %v97 = vld [vmem:[#allocation2 + $0x40] sm:$0xff]
    %v98 = vld [vmem:[#allocation2 + $0x48] sm:$0xff]
    %v99 = vld [vmem:[#allocation2 + $0x50] sm:$0xff]
    %v100 = vld [vmem:[#allocation2 + $0x58] sm:$0xff]
    %v101 = vld [vmem:[#allocation2 + $0x60] sm:$0xff]
    %v102 = vld [vmem:[#allocation2 + $0x68] sm:$0xff]
    %v103 = vld [vmem:[#allocation2 + $0x70] sm:$0xff]
    %v104 = vld [vmem:[#allocation2 + $0x78] sm:$0xff]
    %v105 = vld [vmem:[#allocation2 + $0x80] sm:$0xff]
    %v106 = vld [vmem:[#allocation2 + $0x88] sm:$0xff]
    %v107 = vld [vmem:[#allocation2 + $0x90] sm:$0xff]
    %v108 = vld [vmem:[#allocation2 + $0x98] sm:$0xff]
    %v109 = vld [vmem:[#allocation2 + $0xa0] sm:$0xff]
    %v110 = vld [vmem:[#allocation2 + $0xa8] sm:$0xff]
    %v111 = vld [vmem:[#allocation2 + $0xb0] sm:$0xff]
    %v112 = vld [vmem:[#allocation2 + $0xb8] sm:$0xff]
    %v113 = vld [vmem:[#allocation2 + $0xc0] sm:$0xff]
    %v114 = vld [vmem:[#allocation2 + $0xc8] sm:$0xff]
    %v115 = vld [vmem:[#allocation2 + $0xd0] sm:$0xff]
    %v116 = vld [vmem:[#allocation2 + $0xd8] sm:$0xff]
    %v117 = vld [vmem:[#allocation2 + $0xe0] sm:$0xff]
    %v118 = vld [vmem:[#allocation2 + $0xe8] sm:$0xff]
    %v119 = vld [vmem:[#allocation2 + $0xf0] sm:$0xff]
    %v120 = vld [vmem:[#allocation2 + $0xf8] sm:$0xff]
    %v121 = vld [vmem:[#allocation2 + $0x100] sm:$0xff]
    %v122 = vld [vmem:[#allocation2 + $0x108] sm:$0xff]
    %v123 = vld [vmem:[#allocation2 + $0x110] sm:$0xff]
    %v124 = vld [vmem:[#allocation2 + $0x118] sm:$0xff]
    %v125 = vld [vmem:[#allocation2 + $0x120] sm:$0xff]
    %v126 = vld [vmem:[#allocation2 + $0x128] sm:$0xff]
    %v127 = vld [vmem:[#allocation2 + $0x130] sm:$0xff]
    %v128 = vld [vmem:[#allocation2 + $0x138] sm:$0xff]
    %v129 = vld [vmem:[#allocation2 + $0x140] sm:$0xff]
    %v130 = vld [vmem:[#allocation2 + $0x148] sm:$0xff]
    %v131 = vld [vmem:[#allocation2 + $0x150] sm:$0xff]
    %v132 = vld [vmem:[#allocation2 + $0x158] sm:$0xff]
    %v133 = vld [vmem:[#allocation2 + $0x160] sm:$0xff]
    %v134 = vld [vmem:[#allocation2 + $0x168] sm:$0xff]
    %v135 = vld [vmem:[#allocation2 + $0x170] sm:$0xff]
    %v136 = vld [vmem:[#allocation2 + $0x178] sm:$0xff]
    %v137 = vld [vmem:[#allocation2 + $0x180] sm:$0xff]
    %v138 = vld [vmem:[#allocation2 + $0x188] sm:$0xff]
    %v139 = vld [vmem:[#allocation2 + $0x190] sm:$0xff]
    %v140 = vld [vmem:[#allocation2 + $0x198] sm:$0xff]
    %v141 = vld [vmem:[#allocation2 + $0x1a0] sm:$0xff]
    %v142 = vld [vmem:[#allocation2 + $0x1a8] sm:$0xff]
    %v143 = vld [vmem:[#allocation2 + $0x1b0] sm:$0xff]
    %v144 = vld [vmem:[#allocation2 + $0x1b8] sm:$0xff]
    %v145 = vld [vmem:[#allocation2 + $0x1c0] sm:$0xff]
    %v146 = vld [vmem:[#allocation2 + $0x1c8] sm:$0xff]
    %v147 = vld [vmem:[#allocation2 + $0x1d0] sm:$0xff]
    %v148 = vld [vmem:[#allocation2 + $0x1d8] sm:$0xff]
    %v149 = vld [vmem:[#allocation2 + $0x1e0] sm:$0xff]
    %v150 = vld [vmem:[#allocation2 + $0x1e8] sm:$0xff]
    %v151 = vld [vmem:[#allocation2 + $0x1f0] sm:$0xff]
    %v152 = vld [vmem:[#allocation2 + $0x1f8] sm:$0xff]
    %v153 = vld [vmem:[%s2] sm:$0xf]
    %v155 = vlaneseq
    %v156 = vshrl.u32 %v155, 7
    %v157 = vsub.s32 0, %v156
    %v158 = vrot.slane %v153, %v157
    %v159 = vlaneseq
    %v160 = vshrl.u32 %v159, 7
    %v161 = vsub.s32 1, %v160
    %v162 = vrot.slane %v153, %v161
    %v163 = vlaneseq
    %v164 = vshrl.u32 %v163, 7
    %v165 = vsub.s32 2, %v164
    %v166 = vrot.slane %v153, %v165
    %v167 = vlaneseq
    %v168 = vshrl.u32 %v167, 7
    %v169 = vsub.s32 3, %v168
    %v170 = vrot.slane %v153, %v169
    %v176 = vunpack.c.l.b16 %v88
    %v177 = vunpack.c.h.b16 %v88
    %v178 = vpack.c.b16 %v176, %v176
    %v179 = vpack.c.b16 %v177, %v177
    %v246 = vunpack.c.l.b16 %v89
    %v247 = vunpack.c.h.b16 %v89
    %v248 = vunpack.c.l.b16 %v90
    %v249 = vunpack.c.h.b16 %v90
    %v250 = vunpack.c.l.b16 %v91
    %v251 = vunpack.c.h.b16 %v91
    %v252 = vunpack.c.l.b16 %v92
    %v253 = vunpack.c.h.b16 %v92
    %v254 = vunpack.c.l.b16 %v93
    %v255 = vunpack.c.h.b16 %v93
    %v256 = vunpack.c.l.b16 %v94
    %v257 = vunpack.c.h.b16 %v94
    %v258 = vunpack.c.l.b16 %v95
    %v259 = vunpack.c.h.b16 %v95
    %v260 = vunpack.c.l.b16 %v96
    %v261 = vunpack.c.h.b16 %v96
    %v262 = vunpack.c.l.b16 %v97
    %v263 = vunpack.c.h.b16 %v97
    %v264 = vunpack.c.l.b16 %v98
    %v265 = vunpack.c.h.b16 %v98
    %v266 = vunpack.c.l.b16 %v99
    %v267 = vunpack.c.h.b16 %v99
    %v268 = vunpack.c.l.b16 %v100
    %v269 = vunpack.c.h.b16 %v100
    %v270 = vunpack.c.l.b16 %v101
    %v271 = vunpack.c.h.b16 %v101
    %v272 = vunpack.c.l.b16 %v102
    %v273 = vunpack.c.h.b16 %v102
    %v274 = vunpack.c.l.b16 %v103
    %v275 = vunpack.c.h.b16 %v103
    %v276 = vunpack.c.l.b16 %v104
    %v277 = vunpack.c.h.b16 %v104
    %v278 = vunpack.c.l.b16 %v105
    %v279 = vunpack.c.h.b16 %v105
    %v280 = vunpack.c.l.b16 %v106
    %v281 = vunpack.c.h.b16 %v106
    %v282 = vunpack.c.l.b16 %v107
    %v283 = vunpack.c.h.b16 %v107
    %v284 = vunpack.c.l.b16 %v108
    %v285 = vunpack.c.h.b16 %v108
    %v286 = vunpack.c.l.b16 %v109
    %v287 = vunpack.c.h.b16 %v109
    %v288 = vunpack.c.l.b16 %v110
    %v289 = vunpack.c.h.b16 %v110
    %v290 = vunpack.c.l.b16 %v111
    %v291 = vunpack.c.h.b16 %v111
    %v292 = vunpack.c.l.b16 %v112
    %v293 = vunpack.c.h.b16 %v112
    %v294 = vunpack.c.l.b16 %v113
    %v295 = vunpack.c.h.b16 %v113
    %v296 = vunpack.c.l.b16 %v114
    %v297 = vunpack.c.h.b16 %v114
    %v298 = vunpack.c.l.b16 %v115
    %v299 = vunpack.c.h.b16 %v115
    %v300 = vunpack.c.l.b16 %v116
    %v301 = vunpack.c.h.b16 %v116
    %v302 = vunpack.c.l.b16 %v117
    %v303 = vunpack.c.h.b16 %v117
    %v304 = vunpack.c.l.b16 %v118
    %v305 = vunpack.c.h.b16 %v118
    %v306 = vunpack.c.l.b16 %v119
    %v307 = vunpack.c.h.b16 %v119
    %v308 = vunpack.c.l.b16 %v120
    %v309 = vunpack.c.h.b16 %v120
    %v310 = vunpack.c.l.b16 %v121
    %v311 = vunpack.c.h.b16 %v121
    %v312 = vunpack.c.l.b16 %v122
    %v313 = vunpack.c.h.b16 %v122
    %v314 = vunpack.c.l.b16 %v123
    %v315 = vunpack.c.h.b16 %v123
    %v316 = vunpack.c.l.b16 %v124
    %v317 = vunpack.c.h.b16 %v124
    %v318 = vunpack.c.l.b16 %v125
    %v319 = vunpack.c.h.b16 %v125
    %v320 = vunpack.c.l.b16 %v126
    %v321 = vunpack.c.h.b16 %v126
    %v322 = vunpack.c.l.b16 %v127
    %v323 = vunpack.c.h.b16 %v127
    %v324 = vunpack.c.l.b16 %v128
    %v325 = vunpack.c.h.b16 %v128
    %v326 = vunpack.c.l.b16 %v129
    %v327 = vunpack.c.h.b16 %v129
    %v328 = vunpack.c.l.b16 %v130
    %v329 = vunpack.c.h.b16 %v130
    %v330 = vunpack.c.l.b16 %v131
    %v331 = vunpack.c.h.b16 %v131
    %v332 = vunpack.c.l.b16 %v132
    %v333 = vunpack.c.h.b16 %v132
    %v334 = vunpack.c.l.b16 %v133
    %v335 = vunpack.c.h.b16 %v133
    %v336 = vunpack.c.l.b16 %v134
    %v337 = vunpack.c.h.b16 %v134
    %v338 = vunpack.c.l.b16 %v135
    %v339 = vunpack.c.h.b16 %v135
    %v340 = vunpack.c.l.b16 %v136
    %v341 = vunpack.c.h.b16 %v136
    %v342 = vunpack.c.l.b16 %v137
    %v343 = vunpack.c.h.b16 %v137
    %v344 = vunpack.c.l.b16 %v138
    %v345 = vunpack.c.h.b16 %v138
    %v346 = vunpack.c.l.b16 %v139
    %v347 = vunpack.c.h.b16 %v139
    %v348 = vunpack.c.l.b16 %v140
    %v349 = vunpack.c.h.b16 %v140
    %v350 = vunpack.c.l.b16 %v141
    %v351 = vunpack.c.h.b16 %v141
    %v352 = vunpack.c.l.b16 %v142
    %v353 = vunpack.c.h.b16 %v142
    %v354 = vunpack.c.l.b16 %v143
    %v355 = vunpack.c.h.b16 %v143
    %v356 = vunpack.c.l.b16 %v144
    %v357 = vunpack.c.h.b16 %v144
    %v358 = vunpack.c.l.b16 %v145
    %v359 = vunpack.c.h.b16 %v145
    %v360 = vunpack.c.l.b16 %v146
    %v361 = vunpack.c.h.b16 %v146
    %v362 = vunpack.c.l.b16 %v147
    %v363 = vunpack.c.h.b16 %v147
    %v364 = vunpack.c.l.b16 %v148
    %v365 = vunpack.c.h.b16 %v148
    %v366 = vunpack.c.l.b16 %v149
    %v367 = vunpack.c.h.b16 %v149
    %v368 = vunpack.c.l.b16 %v150
    %v369 = vunpack.c.h.b16 %v150
    %v370 = vunpack.c.l.b16 %v151
    %v371 = vunpack.c.h.b16 %v151
    %v372 = vunpack.c.l.b16 %v152
    %v373 = vunpack.c.h.b16 %v152
    %v374 = vpack.c.b16 %v250, %v246
    %v375 = vpack.c.b16 %v251, %v247
    %v376 = vpack.c.b16 %v252, %v248
    %v377 = vpack.c.b16 %v253, %v249
    %v378 = vpack.c.b16 %v258, %v254
    %v379 = vpack.c.b16 %v259, %v255
    %v380 = vpack.c.b16 %v260, %v256
    %v381 = vpack.c.b16 %v261, %v257
    %v382 = vpack.c.b16 %v266, %v262
    %v383 = vpack.c.b16 %v267, %v263
    %v384 = vpack.c.b16 %v268, %v264
    %v385 = vpack.c.b16 %v269, %v265
    %v386 = vpack.c.b16 %v274, %v270
    %v387 = vpack.c.b16 %v275, %v271
    %v388 = vpack.c.b16 %v276, %v272
    %v389 = vpack.c.b16 %v277, %v273
    %v390 = vpack.c.b16 %v282, %v278
    %v391 = vpack.c.b16 %v283, %v279
    %v392 = vpack.c.b16 %v284, %v280
    %v393 = vpack.c.b16 %v285, %v281
    %v394 = vpack.c.b16 %v290, %v286
    %v395 = vpack.c.b16 %v291, %v287
    %v396 = vpack.c.b16 %v292, %v288
    %v397 = vpack.c.b16 %v293, %v289
    %v398 = vpack.c.b16 %v298, %v294
    %v399 = vpack.c.b16 %v299, %v295
    %v400 = vpack.c.b16 %v300, %v296
    %v401 = vpack.c.b16 %v301, %v297
    %v402 = vpack.c.b16 %v306, %v302
    %v403 = vpack.c.b16 %v307, %v303
    %v404 = vpack.c.b16 %v308, %v304
    %v405 = vpack.c.b16 %v309, %v305
    %v406 = vpack.c.b16 %v314, %v310
    %v407 = vpack.c.b16 %v315, %v311
    %v408 = vpack.c.b16 %v316, %v312
    %v409 = vpack.c.b16 %v317, %v313
    %v410 = vpack.c.b16 %v322, %v318
    %v411 = vpack.c.b16 %v323, %v319
    %v412 = vpack.c.b16 %v324, %v320
    %v413 = vpack.c.b16 %v325, %v321
    %v414 = vpack.c.b16 %v330, %v326
    %v415 = vpack.c.b16 %v331, %v327
    %v416 = vpack.c.b16 %v332, %v328
    %v417 = vpack.c.b16 %v333, %v329
    %v418 = vpack.c.b16 %v338, %v334
    %v419 = vpack.c.b16 %v339, %v335
    %v420 = vpack.c.b16 %v340, %v336
    %v421 = vpack.c.b16 %v341, %v337
    %v422 = vpack.c.b16 %v346, %v342
    %v423 = vpack.c.b16 %v347, %v343
    %v424 = vpack.c.b16 %v348, %v344
    %v425 = vpack.c.b16 %v349, %v345
    %v426 = vpack.c.b16 %v354, %v350
    %v427 = vpack.c.b16 %v355, %v351
    %v428 = vpack.c.b16 %v356, %v352
    %v429 = vpack.c.b16 %v357, %v353
    %v430 = vpack.c.b16 %v362, %v358
    %v431 = vpack.c.b16 %v363, %v359
    %v432 = vpack.c.b16 %v364, %v360
    %v433 = vpack.c.b16 %v365, %v361
    %v434 = vpack.c.b16 %v370, %v366
    %v435 = vpack.c.b16 %v371, %v367
    %v436 = vpack.c.b16 %v372, %v368
    %v437 = vpack.c.b16 %v373, %v369
    %502 = vmatprep.subr.bf16.mxu0 %v375
    %503 = vmatpush1.bf16.msra.mxu0 %v374
    %504 = vmatprep.subr.bf16.mxu0 %v379
    %505 = vmatpush1.bf16.msra.mxu0 %v378
    %506 = vmatprep.subr.bf16.mxu0 %v383
    %507 = vmatpush1.bf16.msra.mxu0 %v382
    %508 = vmatprep.subr.bf16.mxu0 %v387
    %509 = vmatpush1.bf16.msra.mxu0 %v386
    %510 = vmatprep.subr.bf16.mxu0 %v391
    %511 = vmatpush1.bf16.msra.mxu0 %v390
    %512 = vmatprep.subr.bf16.mxu0 %v395
    %513 = vmatpush1.bf16.msra.mxu0 %v394
    %514 = vmatprep.subr.bf16.mxu0 %v399
    %515 = vmatpush1.bf16.msra.mxu0 %v398
    %516 = vmatprep.subr.bf16.mxu0 %v403
    %517 = vmatpush1.bf16.msra.mxu0 %v402
    %518 = vmatprep.subr.bf16.mxu0 %v407
    %519 = vmatpush1.bf16.msra.mxu0 %v406
    %520 = vmatprep.subr.bf16.mxu0 %v411
    %521 = vmatpush1.bf16.msra.mxu0 %v410
    %522 = vmatprep.subr.bf16.mxu0 %v415
    %523 = vmatpush1.bf16.msra.mxu0 %v414
    %524 = vmatprep.subr.bf16.mxu0 %v419
    %525 = vmatpush1.bf16.msra.mxu0 %v418
    %526 = vmatprep.subr.bf16.mxu0 %v423
    %527 = vmatpush1.bf16.msra.mxu0 %v422
    %528 = vmatprep.subr.bf16.mxu0 %v427
    %529 = vmatpush1.bf16.msra.mxu0 %v426
    %530 = vmatprep.subr.bf16.mxu0 %v431
    %531 = vmatpush1.bf16.msra.mxu0 %v430
    %532 = vmatprep.subr.bf16.mxu0 %v435
    %533 = vmatpush1.bf16.msra.mxu0 %v434
    %534 = vmatprep.mubr.bf16.mxu0 %v179
    %535 = vmatmul.mubr.bf16.gmra.mrb[0].mxu0 %v178
    %v536 = vpop.f32.mrb[0].mxu0
    %v537 = vadd.f32 %v158, %v536
    %v538 = vpop.f32.mrb[0].mxu0
    %v539 = vadd.f32 %v162, %v538
    %v540 = vpop.f32.mrb[0].mxu0
    %v541 = vpop.f32.mrb[0].mxu0
    %542 = vdwg.mxu0
    %543 = vmatprep.subr.bf16.mxu0 %v377
    %544 = vmatpush1.bf16.msra.mxu0 %v376
    %545 = vmatprep.subr.bf16.mxu0 %v381
    %546 = vmatpush1.bf16.msra.mxu0 %v380
    %547 = vmatprep.subr.bf16.mxu0 %v385
    %548 = vmatpush1.bf16.msra.mxu0 %v384
    %549 = vmatprep.subr.bf16.mxu0 %v389
    %550 = vmatpush1.bf16.msra.mxu0 %v388
    %551 = vmatprep.subr.bf16.mxu0 %v393
    %552 = vmatpush1.bf16.msra.mxu0 %v392
    %553 = vmatprep.subr.bf16.mxu0 %v397
    %554 = vmatpush1.bf16.msra.mxu0 %v396
    %555 = vmatprep.subr.bf16.mxu0 %v401
    %556 = vmatpush1.bf16.msra.mxu0 %v400
    %557 = vmatprep.subr.bf16.mxu0 %v405
    %558 = vmatpush1.bf16.msra.mxu0 %v404
    %559 = vmatprep.subr.bf16.mxu0 %v409
    %560 = vmatpush1.bf16.msra.mxu0 %v408
    %561 = vmatprep.subr.bf16.mxu0 %v413
    %562 = vmatpush1.bf16.msra.mxu0 %v412
    %563 = vmatprep.subr.bf16.mxu0 %v417
    %564 = vmatpush1.bf16.msra.mxu0 %v416
    %565 = vmatprep.subr.bf16.mxu0 %v421
    %566 = vmatpush1.bf16.msra.mxu0 %v420
    %567 = vmatprep.subr.bf16.mxu0 %v425
    %568 = vmatpush1.bf16.msra.mxu0 %v424
    %569 = vmatprep.subr.bf16.mxu0 %v429
    %570 = vmatpush1.bf16.msra.mxu0 %v428
    %571 = vmatprep.subr.bf16.mxu0 %v433
    %572 = vmatpush1.bf16.msra.mxu0 %v432
    %573 = vmatprep.subr.bf16.mxu0 %v437
    %574 = vmatpush1.bf16.msra.mxu0 %v436
    %575 = vmatprep.mubr.bf16.mxu0 %v179
    %576 = vmatmul.mubr.bf16.gmra.mrb[0].mxu0 %v178
    %v577 = vpop.f32.mrb[0].mxu0
    %v578 = vadd.f32 %v166, %v577
    %v579 = vpop.f32.mrb[0].mxu0
    %v580 = vadd.f32 %v170, %v579
    %v581 = vpop.f32.mrb[0].mxu0
    %v582 = vpop.f32.mrb[0].mxu0
    %583 = vdwg.mxu0
    %v584 = vmax.f32 %v537, 0.0
    %v585 = vmax.f32 %v539, 0.0
    %v586 = vmax.f32 %v578, 0.0
    %v587 = vmax.f32 %v580, 0.0
    %v588 = vpack.c.bf16 %v584, %v584
    %v589 = vpack.c.bf16 %v585, %v585
    %v590 = vpack.c.bf16 %v586, %v586
    %v591 = vpack.c.bf16 %v587, %v587
    %v592 = vld [vmem:[#allocation4] sm:$0xff]
    %v593 = vld [vmem:[#allocation4 + $0x8] sm:$0xff]
    %v594 = vld [vmem:[#allocation4 + $0x10] sm:$0xff]
    %v595 = vld [vmem:[#allocation4 + $0x18] sm:$0xff]
    %v596 = vld [vmem:[#allocation4 + $0x20] sm:$0xff]
    %v597 = vld [vmem:[#allocation4 + $0x28] sm:$0xff]
    %v598 = vld [vmem:[#allocation4 + $0x30] sm:$0xff]
    %v599 = vld [vmem:[#allocation4 + $0x38] sm:$0xff]
    %v600 = vld [vmem:[#allocation4 + $0x40] sm:$0xff]
    %v601 = vld [vmem:[#allocation4 + $0x48] sm:$0xff]
    %v602 = vld [vmem:[#allocation4 + $0x50] sm:$0xff]
    %v603 = vld [vmem:[#allocation4 + $0x58] sm:$0xff]
    %v604 = vld [vmem:[#allocation4 + $0x60] sm:$0xff]
    %v605 = vld [vmem:[#allocation4 + $0x68] sm:$0xff]
    %v606 = vld [vmem:[#allocation4 + $0x70] sm:$0xff]
    %v607 = vld [vmem:[#allocation4 + $0x78] sm:$0xff]
    %v608 = vld [vmem:[#allocation4 + $0x80] sm:$0xff]
    %v609 = vld [vmem:[#allocation4 + $0x88] sm:$0xff]
    %v610 = vld [vmem:[#allocation4 + $0x90] sm:$0xff]
    %v611 = vld [vmem:[#allocation4 + $0x98] sm:$0xff]
    %v612 = vld [vmem:[#allocation4 + $0xa0] sm:$0xff]
    %v613 = vld [vmem:[#allocation4 + $0xa8] sm:$0xff]
    %v614 = vld [vmem:[#allocation4 + $0xb0] sm:$0xff]
    %v615 = vld [vmem:[#allocation4 + $0xb8] sm:$0xff]
    %v616 = vld [vmem:[#allocation4 + $0xc0] sm:$0xff]
    %v617 = vld [vmem:[#allocation4 + $0xc8] sm:$0xff]
    %v618 = vld [vmem:[#allocation4 + $0xd0] sm:$0xff]
    %v619 = vld [vmem:[#allocation4 + $0xd8] sm:$0xff]
    %v620 = vld [vmem:[#allocation4 + $0xe0] sm:$0xff]
    %v621 = vld [vmem:[#allocation4 + $0xe8] sm:$0xff]
    %v622 = vld [vmem:[#allocation4 + $0xf0] sm:$0xff]
    %v623 = vld [vmem:[#allocation4 + $0xf8] sm:$0xff]
    %v624 = vld [vmem:[#allocation4 + $0x100] sm:$0xff]
    %v625 = vld [vmem:[#allocation4 + $0x108] sm:$0xff]
    %v626 = vld [vmem:[#allocation4 + $0x110] sm:$0xff]
    %v627 = vld [vmem:[#allocation4 + $0x118] sm:$0xff]
    %v628 = vld [vmem:[#allocation4 + $0x120] sm:$0xff]
    %v629 = vld [vmem:[#allocation4 + $0x128] sm:$0xff]
    %v630 = vld [vmem:[#allocation4 + $0x130] sm:$0xff]
    %v631 = vld [vmem:[#allocation4 + $0x138] sm:$0xff]
    %v632 = vld [vmem:[#allocation4 + $0x140] sm:$0xff]
    %v633 = vld [vmem:[#allocation4 + $0x148] sm:$0xff]
    %v634 = vld [vmem:[#allocation4 + $0x150] sm:$0xff]
    %v635 = vld [vmem:[#allocation4 + $0x158] sm:$0xff]
    %v636 = vld [vmem:[#allocation4 + $0x160] sm:$0xff]
    %v637 = vld [vmem:[#allocation4 + $0x168] sm:$0xff]
    %v638 = vld [vmem:[#allocation4 + $0x170] sm:$0xff]
    %v639 = vld [vmem:[#allocation4 + $0x178] sm:$0xff]
    %v640 = vld [vmem:[#allocation4 + $0x180] sm:$0xff]
    %v641 = vld [vmem:[#allocation4 + $0x188] sm:$0xff]
    %v642 = vld [vmem:[#allocation4 + $0x190] sm:$0xff]
    %v643 = vld [vmem:[#allocation4 + $0x198] sm:$0xff]
    %v644 = vld [vmem:[#allocation4 + $0x1a0] sm:$0xff]
    %v645 = vld [vmem:[#allocation4 + $0x1a8] sm:$0xff]
    %v646 = vld [vmem:[#allocation4 + $0x1b0] sm:$0xff]
    %v647 = vld [vmem:[#allocation4 + $0x1b8] sm:$0xff]
    %v648 = vld [vmem:[#allocation4 + $0x1c0] sm:$0xff]
    %v649 = vld [vmem:[#allocation4 + $0x1c8] sm:$0xff]
    %v650 = vld [vmem:[#allocation4 + $0x1d0] sm:$0xff]
    %v651 = vld [vmem:[#allocation4 + $0x1d8] sm:$0xff]
    %v652 = vld [vmem:[#allocation4 + $0x1e0] sm:$0xff]
    %v653 = vld [vmem:[#allocation4 + $0x1e8] sm:$0xff]
    %v654 = vld [vmem:[#allocation4 + $0x1f0] sm:$0xff]
    %v655 = vld [vmem:[#allocation4 + $0x1f8] sm:$0xff]
    %v656 = vld [vmem:[#allocation4 + $0x200] sm:$0xff]
    %v657 = vld [vmem:[#allocation4 + $0x208] sm:$0xff]
    %v658 = vld [vmem:[#allocation4 + $0x210] sm:$0xff]
    %v659 = vld [vmem:[#allocation4 + $0x218] sm:$0xff]
    %v660 = vld [vmem:[#allocation4 + $0x220] sm:$0xff]
    %v661 = vld [vmem:[#allocation4 + $0x228] sm:$0xff]
    %v662 = vld [vmem:[#allocation4 + $0x230] sm:$0xff]
    %v663 = vld [vmem:[#allocation4 + $0x238] sm:$0xff]
    %v664 = vld [vmem:[#allocation4 + $0x240] sm:$0xff]
    %v665 = vld [vmem:[#allocation4 + $0x248] sm:$0xff]
    %v666 = vld [vmem:[#allocation4 + $0x250] sm:$0xff]
    %v667 = vld [vmem:[#allocation4 + $0x258] sm:$0xff]
    %v668 = vld [vmem:[#allocation4 + $0x260] sm:$0xff]
    %v669 = vld [vmem:[#allocation4 + $0x268] sm:$0xff]
    %v670 = vld [vmem:[#allocation4 + $0x270] sm:$0xff]
    %v671 = vld [vmem:[#allocation4 + $0x278] sm:$0xff]
    %v672 = vld [vmem:[#allocation4 + $0x280] sm:$0xff]
    %v673 = vld [vmem:[#allocation4 + $0x288] sm:$0xff]
    %v674 = vld [vmem:[#allocation4 + $0x290] sm:$0xff]
    %v675 = vld [vmem:[#allocation4 + $0x298] sm:$0xff]
    %v676 = vld [vmem:[#allocation4 + $0x2a0] sm:$0xff]
    %v677 = vld [vmem:[#allocation4 + $0x2a8] sm:$0xff]
    %v678 = vld [vmem:[#allocation4 + $0x2b0] sm:$0xff]
    %v679 = vld [vmem:[#allocation4 + $0x2b8] sm:$0xff]
    %v680 = vld [vmem:[#allocation4 + $0x2c0] sm:$0xff]
    %v681 = vld [vmem:[#allocation4 + $0x2c8] sm:$0xff]
    %v682 = vld [vmem:[#allocation4 + $0x2d0] sm:$0xff]
    %v683 = vld [vmem:[#allocation4 + $0x2d8] sm:$0xff]
    %v684 = vld [vmem:[#allocation4 + $0x2e0] sm:$0xff]
    %v685 = vld [vmem:[#allocation4 + $0x2e8] sm:$0xff]
    %v686 = vld [vmem:[#allocation4 + $0x2f0] sm:$0xff]
    %v687 = vld [vmem:[#allocation4 + $0x2f8] sm:$0xff]
    %v688 = vld [vmem:[#allocation4 + $0x300] sm:$0xff]
    %v689 = vld [vmem:[#allocation4 + $0x308] sm:$0xff]
    %v690 = vld [vmem:[#allocation4 + $0x310] sm:$0xff]
    %v691 = vld [vmem:[#allocation4 + $0x318] sm:$0xff]
    %v692 = vld [vmem:[#allocation4 + $0x320] sm:$0xff]
    %v693 = vld [vmem:[#allocation4 + $0x328] sm:$0xff]
    %v694 = vld [vmem:[#allocation4 + $0x330] sm:$0xff]
    %v695 = vld [vmem:[#allocation4 + $0x338] sm:$0xff]
    %v696 = vld [vmem:[#allocation4 + $0x340] sm:$0xff]
    %v697 = vld [vmem:[#allocation4 + $0x348] sm:$0xff]
    %v698 = vld [vmem:[#allocation4 + $0x350] sm:$0xff]
    %v699 = vld [vmem:[#allocation4 + $0x358] sm:$0xff]
    %v700 = vld [vmem:[#allocation4 + $0x360] sm:$0xff]
    %v701 = vld [vmem:[#allocation4 + $0x368] sm:$0xff]
    %v702 = vld [vmem:[#allocation4 + $0x370] sm:$0xff]
    %v703 = vld [vmem:[#allocation4 + $0x378] sm:$0xff]
    %v704 = vld [vmem:[#allocation4 + $0x380] sm:$0xff]
    %v705 = vld [vmem:[#allocation4 + $0x388] sm:$0xff]
    %v706 = vld [vmem:[#allocation4 + $0x390] sm:$0xff]
    %v707 = vld [vmem:[#allocation4 + $0x398] sm:$0xff]
    %v708 = vld [vmem:[#allocation4 + $0x3a0] sm:$0xff]
    %v709 = vld [vmem:[#allocation4 + $0x3a8] sm:$0xff]
    %v710 = vld [vmem:[#allocation4 + $0x3b0] sm:$0xff]
    %v711 = vld [vmem:[#allocation4 + $0x3b8] sm:$0xff]
    %v712 = vld [vmem:[#allocation4 + $0x3c0] sm:$0xff]
    %v713 = vld [vmem:[#allocation4 + $0x3c8] sm:$0xff]
    %v714 = vld [vmem:[#allocation4 + $0x3d0] sm:$0xff]
    %v715 = vld [vmem:[#allocation4 + $0x3d8] sm:$0xff]
    %v716 = vld [vmem:[#allocation4 + $0x3e0] sm:$0xff]
    %v717 = vld [vmem:[#allocation4 + $0x3e8] sm:$0xff]
    %v718 = vld [vmem:[#allocation4 + $0x3f0] sm:$0xff]
    %v719 = vld [vmem:[#allocation4 + $0x3f8] sm:$0xff]
    %v720 = vld [vmem:[#allocation4 + $0x400] sm:$0xff]
    %v721 = vld [vmem:[#allocation4 + $0x408] sm:$0xff]
    %v722 = vld [vmem:[#allocation4 + $0x410] sm:$0xff]
    %v723 = vld [vmem:[#allocation4 + $0x418] sm:$0xff]
    %v724 = vld [vmem:[#allocation4 + $0x420] sm:$0xff]
    %v725 = vld [vmem:[#allocation4 + $0x428] sm:$0xff]
    %v726 = vld [vmem:[#allocation4 + $0x430] sm:$0xff]
    %v727 = vld [vmem:[#allocation4 + $0x438] sm:$0xff]
    %v728 = vld [vmem:[#allocation4 + $0x440] sm:$0xff]
    %v729 = vld [vmem:[#allocation4 + $0x448] sm:$0xff]
    %v730 = vld [vmem:[#allocation4 + $0x450] sm:$0xff]
    %v731 = vld [vmem:[#allocation4 + $0x458] sm:$0xff]
    %v732 = vld [vmem:[#allocation4 + $0x460] sm:$0xff]
    %v733 = vld [vmem:[#allocation4 + $0x468] sm:$0xff]
    %v734 = vld [vmem:[#allocation4 + $0x470] sm:$0xff]
    %v735 = vld [vmem:[#allocation4 + $0x478] sm:$0xff]
    %v736 = vld [vmem:[#allocation4 + $0x480] sm:$0xff]
    %v737 = vld [vmem:[#allocation4 + $0x488] sm:$0xff]
    %v738 = vld [vmem:[#allocation4 + $0x490] sm:$0xff]
    %v739 = vld [vmem:[#allocation4 + $0x498] sm:$0xff]
    %v740 = vld [vmem:[#allocation4 + $0x4a0] sm:$0xff]
    %v741 = vld [vmem:[#allocation4 + $0x4a8] sm:$0xff]
    %v742 = vld [vmem:[#allocation4 + $0x4b0] sm:$0xff]
    %v743 = vld [vmem:[#allocation4 + $0x4b8] sm:$0xff]
    %v744 = vld [vmem:[#allocation4 + $0x4c0] sm:$0xff]
    %v745 = vld [vmem:[#allocation4 + $0x4c8] sm:$0xff]
    %v746 = vld [vmem:[#allocation4 + $0x4d0] sm:$0xff]
    %v747 = vld [vmem:[#allocation4 + $0x4d8] sm:$0xff]
    %v748 = vld [vmem:[#allocation4 + $0x4e0] sm:$0xff]
    %v749 = vld [vmem:[#allocation4 + $0x4e8] sm:$0xff]
    %v750 = vld [vmem:[#allocation4 + $0x4f0] sm:$0xff]
    %v751 = vld [vmem:[#allocation4 + $0x4f8] sm:$0xff]
    %v752 = vld [vmem:[#allocation4 + $0x500] sm:$0xff]
    %v753 = vld [vmem:[#allocation4 + $0x508] sm:$0xff]
    %v754 = vld [vmem:[#allocation4 + $0x510] sm:$0xff]
    %v755 = vld [vmem:[#allocation4 + $0x518] sm:$0xff]
    %v756 = vld [vmem:[#allocation4 + $0x520] sm:$0xff]
    %v757 = vld [vmem:[#allocation4 + $0x528] sm:$0xff]
    %v758 = vld [vmem:[#allocation4 + $0x530] sm:$0xff]
    %v759 = vld [vmem:[#allocation4 + $0x538] sm:$0xff]
    %v760 = vld [vmem:[#allocation4 + $0x540] sm:$0xff]
    %v761 = vld [vmem:[#allocation4 + $0x548] sm:$0xff]
    %v762 = vld [vmem:[#allocation4 + $0x550] sm:$0xff]
    %v763 = vld [vmem:[#allocation4 + $0x558] sm:$0xff]
    %v764 = vld [vmem:[#allocation4 + $0x560] sm:$0xff]
    %v765 = vld [vmem:[#allocation4 + $0x568] sm:$0xff]
    %v766 = vld [vmem:[#allocation4 + $0x570] sm:$0xff]
    %v767 = vld [vmem:[#allocation4 + $0x578] sm:$0xff]
    %v768 = vld [vmem:[#allocation4 + $0x580] sm:$0xff]
    %v769 = vld [vmem:[#allocation4 + $0x588] sm:$0xff]
    %v770 = vld [vmem:[#allocation4 + $0x590] sm:$0xff]
    %v771 = vld [vmem:[#allocation4 + $0x598] sm:$0xff]
    %v772 = vld [vmem:[#allocation4 + $0x5a0] sm:$0xff]
    %v773 = vld [vmem:[#allocation4 + $0x5a8] sm:$0xff]
    %v774 = vld [vmem:[#allocation4 + $0x5b0] sm:$0xff]
    %v775 = vld [vmem:[#allocation4 + $0x5b8] sm:$0xff]
    %v776 = vld [vmem:[#allocation4 + $0x5c0] sm:$0xff]
    %v777 = vld [vmem:[#allocation4 + $0x5c8] sm:$0xff]
    %v778 = vld [vmem:[#allocation4 + $0x5d0] sm:$0xff]
    %v779 = vld [vmem:[#allocation4 + $0x5d8] sm:$0xff]
    %v780 = vld [vmem:[#allocation4 + $0x5e0] sm:$0xff]
    %v781 = vld [vmem:[#allocation4 + $0x5e8] sm:$0xff]
    %v782 = vld [vmem:[#allocation4 + $0x5f0] sm:$0xff]
    %v783 = vld [vmem:[#allocation4 + $0x5f8] sm:$0xff]
    %v784 = vld [vmem:[#allocation4 + $0x600] sm:$0xff]
    %v785 = vld [vmem:[#allocation4 + $0x608] sm:$0xff]
    %v786 = vld [vmem:[#allocation4 + $0x610] sm:$0xff]
    %v787 = vld [vmem:[#allocation4 + $0x618] sm:$0xff]
    %v788 = vld [vmem:[#allocation4 + $0x620] sm:$0xff]
    %v789 = vld [vmem:[#allocation4 + $0x628] sm:$0xff]
    %v790 = vld [vmem:[#allocation4 + $0x630] sm:$0xff]
    %v791 = vld [vmem:[#allocation4 + $0x638] sm:$0xff]
    %v792 = vld [vmem:[#allocation4 + $0x640] sm:$0xff]
    %v793 = vld [vmem:[#allocation4 + $0x648] sm:$0xff]
    %v794 = vld [vmem:[#allocation4 + $0x650] sm:$0xff]
    %v795 = vld [vmem:[#allocation4 + $0x658] sm:$0xff]
    %v796 = vld [vmem:[#allocation4 + $0x660] sm:$0xff]
    %v797 = vld [vmem:[#allocation4 + $0x668] sm:$0xff]
    %v798 = vld [vmem:[#allocation4 + $0x670] sm:$0xff]
    %v799 = vld [vmem:[#allocation4 + $0x678] sm:$0xff]
    %v800 = vld [vmem:[#allocation4 + $0x680] sm:$0xff]
    %v801 = vld [vmem:[#allocation4 + $0x688] sm:$0xff]
    %v802 = vld [vmem:[#allocation4 + $0x690] sm:$0xff]
    %v803 = vld [vmem:[#allocation4 + $0x698] sm:$0xff]
    %v804 = vld [vmem:[#allocation4 + $0x6a0] sm:$0xff]
    %v805 = vld [vmem:[#allocation4 + $0x6a8] sm:$0xff]
    %v806 = vld [vmem:[#allocation4 + $0x6b0] sm:$0xff]
    %v807 = vld [vmem:[#allocation4 + $0x6b8] sm:$0xff]
    %v808 = vld [vmem:[#allocation4 + $0x6c0] sm:$0xff]
    %v809 = vld [vmem:[#allocation4 + $0x6c8] sm:$0xff]
    %v810 = vld [vmem:[#allocation4 + $0x6d0] sm:$0xff]
    %v811 = vld [vmem:[#allocation4 + $0x6d8] sm:$0xff]
    %v812 = vld [vmem:[#allocation4 + $0x6e0] sm:$0xff]
    %v813 = vld [vmem:[#allocation4 + $0x6e8] sm:$0xff]
    %v814 = vld [vmem:[#allocation4 + $0x6f0] sm:$0xff]
    %v815 = vld [vmem:[#allocation4 + $0x6f8] sm:$0xff]
    %v816 = vld [vmem:[#allocation4 + $0x700] sm:$0xff]
    %v817 = vld [vmem:[#allocation4 + $0x708] sm:$0xff]
    %v818 = vld [vmem:[#allocation4 + $0x710] sm:$0xff]
    %v819 = vld [vmem:[#allocation4 + $0x718] sm:$0xff]
    %v820 = vld [vmem:[#allocation4 + $0x720] sm:$0xff]
    %v821 = vld [vmem:[#allocation4 + $0x728] sm:$0xff]
    %v822 = vld [vmem:[#allocation4 + $0x730] sm:$0xff]
    %v823 = vld [vmem:[#allocation4 + $0x738] sm:$0xff]
    %v824 = vld [vmem:[#allocation4 + $0x740] sm:$0xff]
    %v825 = vld [vmem:[#allocation4 + $0x748] sm:$0xff]
    %v826 = vld [vmem:[#allocation4 + $0x750] sm:$0xff]
    %v827 = vld [vmem:[#allocation4 + $0x758] sm:$0xff]
    %v828 = vld [vmem:[#allocation4 + $0x760] sm:$0xff]
    %v829 = vld [vmem:[#allocation4 + $0x768] sm:$0xff]
    %v830 = vld [vmem:[#allocation4 + $0x770] sm:$0xff]
    %v831 = vld [vmem:[#allocation4 + $0x778] sm:$0xff]
    %v832 = vld [vmem:[#allocation4 + $0x780] sm:$0xff]
    %v833 = vld [vmem:[#allocation4 + $0x788] sm:$0xff]
    %v834 = vld [vmem:[#allocation4 + $0x790] sm:$0xff]
    %v835 = vld [vmem:[#allocation4 + $0x798] sm:$0xff]
    %v836 = vld [vmem:[#allocation4 + $0x7a0] sm:$0xff]
    %v837 = vld [vmem:[#allocation4 + $0x7a8] sm:$0xff]
    %v838 = vld [vmem:[#allocation4 + $0x7b0] sm:$0xff]
    %v839 = vld [vmem:[#allocation4 + $0x7b8] sm:$0xff]
    %v840 = vld [vmem:[#allocation4 + $0x7c0] sm:$0xff]
    %v841 = vld [vmem:[#allocation4 + $0x7c8] sm:$0xff]
    %v842 = vld [vmem:[#allocation4 + $0x7d0] sm:$0xff]
    %v843 = vld [vmem:[#allocation4 + $0x7d8] sm:$0xff]
    %v844 = vld [vmem:[#allocation4 + $0x7e0] sm:$0xff]
    %v845 = vld [vmem:[#allocation4 + $0x7e8] sm:$0xff]
    %v846 = vld [vmem:[#allocation4 + $0x7f0] sm:$0xff]
    %v847 = vld [vmem:[#allocation4 + $0x7f8] sm:$0xff]
    %v848 = vld [vmem:[%s4] sm:$0xff]
    %v850 = vlaneseq
    %v851 = vshrl.u32 %v850, 7
    %v852 = vsub.s32 0, %v851
    %v853 = vrot.slane %v848, %v852
    %v854 = vlaneseq
    %v855 = vshrl.u32 %v854, 7
    %v856 = vsub.s32 1, %v855
    %v857 = vrot.slane %v848, %v856
    %v858 = vlaneseq
    %v859 = vshrl.u32 %v858, 7
    %v860 = vsub.s32 2, %v859
    %v861 = vrot.slane %v848, %v860
    %v862 = vlaneseq
    %v863 = vshrl.u32 %v862, 7
    %v864 = vsub.s32 3, %v863
    %v865 = vrot.slane %v848, %v864
    %v866 = vlaneseq
    %v867 = vshrl.u32 %v866, 7
    %v868 = vsub.s32 4, %v867
    %v869 = vrot.slane %v848, %v868
    %v870 = vlaneseq
    %v871 = vshrl.u32 %v870, 7
    %v872 = vsub.s32 5, %v871
    %v873 = vrot.slane %v848, %v872
    %v874 = vlaneseq
    %v875 = vshrl.u32 %v874, 7
    %v876 = vsub.s32 6, %v875
    %v877 = vrot.slane %v848, %v876
    %v878 = vlaneseq
    %v879 = vshrl.u32 %v878, 7
    %v880 = vsub.s32 7, %v879
    %v881 = vrot.slane %v848, %v880
    %v1146 = vunpack.c.l.b16 %v592
    %v1147 = vunpack.c.h.b16 %v592
    %v1148 = vunpack.c.l.b16 %v593
    %v1149 = vunpack.c.h.b16 %v593
    %v1150 = vunpack.c.l.b16 %v594
    %v1151 = vunpack.c.h.b16 %v594
    %v1152 = vunpack.c.l.b16 %v595
    %v1153 = vunpack.c.h.b16 %v595
    %v1154 = vunpack.c.l.b16 %v596
    %v1155 = vunpack.c.h.b16 %v596
    %v1156 = vunpack.c.l.b16 %v597
    %v1157 = vunpack.c.h.b16 %v597
    %v1158 = vunpack.c.l.b16 %v598
    %v1159 = vunpack.c.h.b16 %v598
    %v1160 = vunpack.c.l.b16 %v599
    %v1161 = vunpack.c.h.b16 %v599
    %v1162 = vunpack.c.l.b16 %v600
    %v1163 = vunpack.c.h.b16 %v600
    %v1164 = vunpack.c.l.b16 %v601
    %v1165 = vunpack.c.h.b16 %v601
    %v1166 = vunpack.c.l.b16 %v602
    %v1167 = vunpack.c.h.b16 %v602
    %v1168 = vunpack.c.l.b16 %v603
    %v1169 = vunpack.c.h.b16 %v603
    %v1170 = vunpack.c.l.b16 %v604
    %v1171 = vunpack.c.h.b16 %v604
    %v1172 = vunpack.c.l.b16 %v605
    %v1173 = vunpack.c.h.b16 %v605
    %v1174 = vunpack.c.l.b16 %v606
    %v1175 = vunpack.c.h.b16 %v606
    %v1176 = vunpack.c.l.b16 %v607
    %v1177 = vunpack.c.h.b16 %v607
    %v1178 = vunpack.c.l.b16 %v608
    %v1179 = vunpack.c.h.b16 %v608
    %v1180 = vunpack.c.l.b16 %v609
    %v1181 = vunpack.c.h.b16 %v609
    %v1182 = vunpack.c.l.b16 %v610
    %v1183 = vunpack.c.h.b16 %v610
    %v1184 = vunpack.c.l.b16 %v611
    %v1185 = vunpack.c.h.b16 %v611
    %v1186 = vunpack.c.l.b16 %v612
    %v1187 = vunpack.c.h.b16 %v612
    %v1188 = vunpack.c.l.b16 %v613
    %v1189 = vunpack.c.h.b16 %v613
    %v1190 = vunpack.c.l.b16 %v614
    %v1191 = vunpack.c.h.b16 %v614
    %v1192 = vunpack.c.l.b16 %v615
    %v1193 = vunpack.c.h.b16 %v615
    %v1194 = vunpack.c.l.b16 %v616
    %v1195 = vunpack.c.h.b16 %v616
    %v1196 = vunpack.c.l.b16 %v617
    %v1197 = vunpack.c.h.b16 %v617
    %v1198 = vunpack.c.l.b16 %v618
    %v1199 = vunpack.c.h.b16 %v618
    %v1200 = vunpack.c.l.b16 %v619
    %v1201 = vunpack.c.h.b16 %v619
    %v1202 = vunpack.c.l.b16 %v620
    %v1203 = vunpack.c.h.b16 %v620
    %v1204 = vunpack.c.l.b16 %v621
    %v1205 = vunpack.c.h.b16 %v621
    %v1206 = vunpack.c.l.b16 %v622
    %v1207 = vunpack.c.h.b16 %v622
    %v1208 = vunpack.c.l.b16 %v623
    %v1209 = vunpack.c.h.b16 %v623
    %v1210 = vunpack.c.l.b16 %v624
    %v1211 = vunpack.c.h.b16 %v624
    %v1212 = vunpack.c.l.b16 %v625
    %v1213 = vunpack.c.h.b16 %v625
    %v1214 = vunpack.c.l.b16 %v626
    %v1215 = vunpack.c.h.b16 %v626
    %v1216 = vunpack.c.l.b16 %v627
    %v1217 = vunpack.c.h.b16 %v627
    %v1218 = vunpack.c.l.b16 %v628
    %v1219 = vunpack.c.h.b16 %v628
    %v1220 = vunpack.c.l.b16 %v629
    %v1221 = vunpack.c.h.b16 %v629
    %v1222 = vunpack.c.l.b16 %v630
    %v1223 = vunpack.c.h.b16 %v630
    %v1224 = vunpack.c.l.b16 %v631
    %v1225 = vunpack.c.h.b16 %v631
    %v1226 = vunpack.c.l.b16 %v632
    %v1227 = vunpack.c.h.b16 %v632
    %v1228 = vunpack.c.l.b16 %v633
    %v1229 = vunpack.c.h.b16 %v633
    %v1230 = vunpack.c.l.b16 %v634
    %v1231 = vunpack.c.h.b16 %v634
    %v1232 = vunpack.c.l.b16 %v635
    %v1233 = vunpack.c.h.b16 %v635
    %v1234 = vunpack.c.l.b16 %v636
    %v1235 = vunpack.c.h.b16 %v636
    %v1236 = vunpack.c.l.b16 %v637
    %v1237 = vunpack.c.h.b16 %v637
    %v1238 = vunpack.c.l.b16 %v638
    %v1239 = vunpack.c.h.b16 %v638
    %v1240 = vunpack.c.l.b16 %v639
    %v1241 = vunpack.c.h.b16 %v639
    %v1242 = vunpack.c.l.b16 %v640
    %v1243 = vunpack.c.h.b16 %v640
    %v1244 = vunpack.c.l.b16 %v641
    %v1245 = vunpack.c.h.b16 %v641
    %v1246 = vunpack.c.l.b16 %v642
    %v1247 = vunpack.c.h.b16 %v642
    %v1248 = vunpack.c.l.b16 %v643
    %v1249 = vunpack.c.h.b16 %v643
    %v1250 = vunpack.c.l.b16 %v644
    %v1251 = vunpack.c.h.b16 %v644
    %v1252 = vunpack.c.l.b16 %v645
    %v1253 = vunpack.c.h.b16 %v645
    %v1254 = vunpack.c.l.b16 %v646
    %v1255 = vunpack.c.h.b16 %v646
    %v1256 = vunpack.c.l.b16 %v647
    %v1257 = vunpack.c.h.b16 %v647
    %v1258 = vunpack.c.l.b16 %v648
    %v1259 = vunpack.c.h.b16 %v648
    %v1260 = vunpack.c.l.b16 %v649
    %v1261 = vunpack.c.h.b16 %v649
    %v1262 = vunpack.c.l.b16 %v650
    %v1263 = vunpack.c.h.b16 %v650
    %v1264 = vunpack.c.l.b16 %v651
    %v1265 = vunpack.c.h.b16 %v651
    %v1266 = vunpack.c.l.b16 %v652
    %v1267 = vunpack.c.h.b16 %v652
    %v1268 = vunpack.c.l.b16 %v653
    %v1269 = vunpack.c.h.b16 %v653
    %v1270 = vunpack.c.l.b16 %v654
    %v1271 = vunpack.c.h.b16 %v654
    %v1272 = vunpack.c.l.b16 %v655
    %v1273 = vunpack.c.h.b16 %v655
    %v1274 = vunpack.c.l.b16 %v656
    %v1275 = vunpack.c.h.b16 %v656
    %v1276 = vunpack.c.l.b16 %v657
    %v1277 = vunpack.c.h.b16 %v657
    %v1278 = vunpack.c.l.b16 %v658
    %v1279 = vunpack.c.h.b16 %v658
    %v1280 = vunpack.c.l.b16 %v659
    %v1281 = vunpack.c.h.b16 %v659
    %v1282 = vunpack.c.l.b16 %v660
    %v1283 = vunpack.c.h.b16 %v660
    %v1284 = vunpack.c.l.b16 %v661
    %v1285 = vunpack.c.h.b16 %v661
    %v1286 = vunpack.c.l.b16 %v662
    %v1287 = vunpack.c.h.b16 %v662
    %v1288 = vunpack.c.l.b16 %v663
    %v1289 = vunpack.c.h.b16 %v663
    %v1290 = vunpack.c.l.b16 %v664
    %v1291 = vunpack.c.h.b16 %v664
    %v1292 = vunpack.c.l.b16 %v665
    %v1293 = vunpack.c.h.b16 %v665
    %v1294 = vunpack.c.l.b16 %v666
    %v1295 = vunpack.c.h.b16 %v666
    %v1296 = vunpack.c.l.b16 %v667
    %v1297 = vunpack.c.h.b16 %v667
    %v1298 = vunpack.c.l.b16 %v668
    %v1299 = vunpack.c.h.b16 %v668
    %v1300 = vunpack.c.l.b16 %v669
    %v1301 = vunpack.c.h.b16 %v669
    %v1302 = vunpack.c.l.b16 %v670
    %v1303 = vunpack.c.h.b16 %v670
    %v1304 = vunpack.c.l.b16 %v671
    %v1305 = vunpack.c.h.b16 %v671
    %v1306 = vunpack.c.l.b16 %v672
    %v1307 = vunpack.c.h.b16 %v672
    %v1308 = vunpack.c.l.b16 %v673
    %v1309 = vunpack.c.h.b16 %v673
    %v1310 = vunpack.c.l.b16 %v674
    %v1311 = vunpack.c.h.b16 %v674
    %v1312 = vunpack.c.l.b16 %v675
    %v1313 = vunpack.c.h.b16 %v675
    %v1314 = vunpack.c.l.b16 %v676
    %v1315 = vunpack.c.h.b16 %v676
    %v1316 = vunpack.c.l.b16 %v677
    %v1317 = vunpack.c.h.b16 %v677
    %v1318 = vunpack.c.l.b16 %v678
    %v1319 = vunpack.c.h.b16 %v678
    %v1320 = vunpack.c.l.b16 %v679
    %v1321 = vunpack.c.h.b16 %v679
    %v1322 = vunpack.c.l.b16 %v680
    %v1323 = vunpack.c.h.b16 %v680
    %v1324 = vunpack.c.l.b16 %v681
    %v1325 = vunpack.c.h.b16 %v681
    %v1326 = vunpack.c.l.b16 %v682
    %v1327 = vunpack.c.h.b16 %v682
    %v1328 = vunpack.c.l.b16 %v683
    %v1329 = vunpack.c.h.b16 %v683
    %v1330 = vunpack.c.l.b16 %v684
    %v1331 = vunpack.c.h.b16 %v684
    %v1332 = vunpack.c.l.b16 %v685
    %v1333 = vunpack.c.h.b16 %v685
    %v1334 = vunpack.c.l.b16 %v686
    %v1335 = vunpack.c.h.b16 %v686
    %v1336 = vunpack.c.l.b16 %v687
    %v1337 = vunpack.c.h.b16 %v687
    %v1338 = vunpack.c.l.b16 %v688
    %v1339 = vunpack.c.h.b16 %v688
    %v1340 = vunpack.c.l.b16 %v689
    %v1341 = vunpack.c.h.b16 %v689
    %v1342 = vunpack.c.l.b16 %v690
    %v1343 = vunpack.c.h.b16 %v690
    %v1344 = vunpack.c.l.b16 %v691
    %v1345 = vunpack.c.h.b16 %v691
    %v1346 = vunpack.c.l.b16 %v692
    %v1347 = vunpack.c.h.b16 %v692
    %v1348 = vunpack.c.l.b16 %v693
    %v1349 = vunpack.c.h.b16 %v693
    %v1350 = vunpack.c.l.b16 %v694
    %v1351 = vunpack.c.h.b16 %v694
    %v1352 = vunpack.c.l.b16 %v695
    %v1353 = vunpack.c.h.b16 %v695
    %v1354 = vunpack.c.l.b16 %v696
    %v1355 = vunpack.c.h.b16 %v696
    %v1356 = vunpack.c.l.b16 %v697
    %v1357 = vunpack.c.h.b16 %v697
    %v1358 = vunpack.c.l.b16 %v698
    %v1359 = vunpack.c.h.b16 %v698
    %v1360 = vunpack.c.l.b16 %v699
    %v1361 = vunpack.c.h.b16 %v699
    %v1362 = vunpack.c.l.b16 %v700
    %v1363 = vunpack.c.h.b16 %v700
    %v1364 = vunpack.c.l.b16 %v701
    %v1365 = vunpack.c.h.b16 %v701
    %v1366 = vunpack.c.l.b16 %v702
    %v1367 = vunpack.c.h.b16 %v702
    %v1368 = vunpack.c.l.b16 %v703
    %v1369 = vunpack.c.h.b16 %v703
    %v1370 = vunpack.c.l.b16 %v704
    %v1371 = vunpack.c.h.b16 %v704
    %v1372 = vunpack.c.l.b16 %v705
    %v1373 = vunpack.c.h.b16 %v705
    %v1374 = vunpack.c.l.b16 %v706
    %v1375 = vunpack.c.h.b16 %v706
    %v1376 = vunpack.c.l.b16 %v707
    %v1377 = vunpack.c.h.b16 %v707
    %v1378 = vunpack.c.l.b16 %v708
    %v1379 = vunpack.c.h.b16 %v708
    %v1380 = vunpack.c.l.b16 %v709
    %v1381 = vunpack.c.h.b16 %v709
    %v1382 = vunpack.c.l.b16 %v710
    %v1383 = vunpack.c.h.b16 %v710
    %v1384 = vunpack.c.l.b16 %v711
    %v1385 = vunpack.c.h.b16 %v711
    %v1386 = vunpack.c.l.b16 %v712
    %v1387 = vunpack.c.h.b16 %v712
    %v1388 = vunpack.c.l.b16 %v713
    %v1389 = vunpack.c.h.b16 %v713
    %v1390 = vunpack.c.l.b16 %v714
    %v1391 = vunpack.c.h.b16 %v714
    %v1392 = vunpack.c.l.b16 %v715
    %v1393 = vunpack.c.h.b16 %v715
    %v1394 = vunpack.c.l.b16 %v716
    %v1395 = vunpack.c.h.b16 %v716
    %v1396 = vunpack.c.l.b16 %v717
    %v1397 = vunpack.c.h.b16 %v717
    %v1398 = vunpack.c.l.b16 %v718
    %v1399 = vunpack.c.h.b16 %v718
    %v1400 = vunpack.c.l.b16 %v719
    %v1401 = vunpack.c.h.b16 %v719
    %v1402 = vunpack.c.l.b16 %v720
    %v1403 = vunpack.c.h.b16 %v720
    %v1404 = vunpack.c.l.b16 %v721
    %v1405 = vunpack.c.h.b16 %v721
    %v1406 = vunpack.c.l.b16 %v722
    %v1407 = vunpack.c.h.b16 %v722
    %v1408 = vunpack.c.l.b16 %v723
    %v1409 = vunpack.c.h.b16 %v723
    %v1410 = vunpack.c.l.b16 %v724
    %v1411 = vunpack.c.h.b16 %v724
    %v1412 = vunpack.c.l.b16 %v725
    %v1413 = vunpack.c.h.b16 %v725
    %v1414 = vunpack.c.l.b16 %v726
    %v1415 = vunpack.c.h.b16 %v726
    %v1416 = vunpack.c.l.b16 %v727
    %v1417 = vunpack.c.h.b16 %v727
    %v1418 = vunpack.c.l.b16 %v728
    %v1419 = vunpack.c.h.b16 %v728
    %v1420 = vunpack.c.l.b16 %v729
    %v1421 = vunpack.c.h.b16 %v729
    %v1422 = vunpack.c.l.b16 %v730
    %v1423 = vunpack.c.h.b16 %v730
    %v1424 = vunpack.c.l.b16 %v731
    %v1425 = vunpack.c.h.b16 %v731
    %v1426 = vunpack.c.l.b16 %v732
    %v1427 = vunpack.c.h.b16 %v732
    %v1428 = vunpack.c.l.b16 %v733
    %v1429 = vunpack.c.h.b16 %v733
    %v1430 = vunpack.c.l.b16 %v734
    %v1431 = vunpack.c.h.b16 %v734
    %v1432 = vunpack.c.l.b16 %v735
    %v1433 = vunpack.c.h.b16 %v735
    %v1434 = vunpack.c.l.b16 %v736
    %v1435 = vunpack.c.h.b16 %v736
    %v1436 = vunpack.c.l.b16 %v737
    %v1437 = vunpack.c.h.b16 %v737
    %v1438 = vunpack.c.l.b16 %v738
    %v1439 = vunpack.c.h.b16 %v738
    %v1440 = vunpack.c.l.b16 %v739
    %v1441 = vunpack.c.h.b16 %v739
    %v1442 = vunpack.c.l.b16 %v740
    %v1443 = vunpack.c.h.b16 %v740
    %v1444 = vunpack.c.l.b16 %v741
    %v1445 = vunpack.c.h.b16 %v741
    %v1446 = vunpack.c.l.b16 %v742
    %v1447 = vunpack.c.h.b16 %v742
    %v1448 = vunpack.c.l.b16 %v743
    %v1449 = vunpack.c.h.b16 %v743
    %v1450 = vunpack.c.l.b16 %v744
    %v1451 = vunpack.c.h.b16 %v744
    %v1452 = vunpack.c.l.b16 %v745
    %v1453 = vunpack.c.h.b16 %v745
    %v1454 = vunpack.c.l.b16 %v746
    %v1455 = vunpack.c.h.b16 %v746
    %v1456 = vunpack.c.l.b16 %v747
    %v1457 = vunpack.c.h.b16 %v747
    %v1458 = vunpack.c.l.b16 %v748
    %v1459 = vunpack.c.h.b16 %v748
    %v1460 = vunpack.c.l.b16 %v749
    %v1461 = vunpack.c.h.b16 %v749
    %v1462 = vunpack.c.l.b16 %v750
    %v1463 = vunpack.c.h.b16 %v750
    %v1464 = vunpack.c.l.b16 %v751
    %v1465 = vunpack.c.h.b16 %v751
    %v1466 = vunpack.c.l.b16 %v752
    %v1467 = vunpack.c.h.b16 %v752
    %v1468 = vunpack.c.l.b16 %v753
    %v1469 = vunpack.c.h.b16 %v753
    %v1470 = vunpack.c.l.b16 %v754
    %v1471 = vunpack.c.h.b16 %v754
    %v1472 = vunpack.c.l.b16 %v755
    %v1473 = vunpack.c.h.b16 %v755
    %v1474 = vunpack.c.l.b16 %v756
    %v1475 = vunpack.c.h.b16 %v756
    %v1476 = vunpack.c.l.b16 %v757
    %v1477 = vunpack.c.h.b16 %v757
    %v1478 = vunpack.c.l.b16 %v758
    %v1479 = vunpack.c.h.b16 %v758
    %v1480 = vunpack.c.l.b16 %v759
    %v1481 = vunpack.c.h.b16 %v759
    %v1482 = vunpack.c.l.b16 %v760
    %v1483 = vunpack.c.h.b16 %v760
    %v1484 = vunpack.c.l.b16 %v761
    %v1485 = vunpack.c.h.b16 %v761
    %v1486 = vunpack.c.l.b16 %v762
    %v1487 = vunpack.c.h.b16 %v762
    %v1488 = vunpack.c.l.b16 %v763
    %v1489 = vunpack.c.h.b16 %v763
    %v1490 = vunpack.c.l.b16 %v764
    %v1491 = vunpack.c.h.b16 %v764
    %v1492 = vunpack.c.l.b16 %v765
    %v1493 = vunpack.c.h.b16 %v765
    %v1494 = vunpack.c.l.b16 %v766
    %v1495 = vunpack.c.h.b16 %v766
    %v1496 = vunpack.c.l.b16 %v767
    %v1497 = vunpack.c.h.b16 %v767
    %v1498 = vunpack.c.l.b16 %v768
    %v1499 = vunpack.c.h.b16 %v768
    %v1500 = vunpack.c.l.b16 %v769
    %v1501 = vunpack.c.h.b16 %v769
    %v1502 = vunpack.c.l.b16 %v770
    %v1503 = vunpack.c.h.b16 %v770
    %v1504 = vunpack.c.l.b16 %v771
    %v1505 = vunpack.c.h.b16 %v771
    %v1506 = vunpack.c.l.b16 %v772
    %v1507 = vunpack.c.h.b16 %v772
    %v1508 = vunpack.c.l.b16 %v773
    %v1509 = vunpack.c.h.b16 %v773
    %v1510 = vunpack.c.l.b16 %v774
    %v1511 = vunpack.c.h.b16 %v774
    %v1512 = vunpack.c.l.b16 %v775
    %v1513 = vunpack.c.h.b16 %v775
    %v1514 = vunpack.c.l.b16 %v776
    %v1515 = vunpack.c.h.b16 %v776
    %v1516 = vunpack.c.l.b16 %v777
    %v1517 = vunpack.c.h.b16 %v777
    %v1518 = vunpack.c.l.b16 %v778
    %v1519 = vunpack.c.h.b16 %v778
    %v1520 = vunpack.c.l.b16 %v779
    %v1521 = vunpack.c.h.b16 %v779
    %v1522 = vunpack.c.l.b16 %v780
    %v1523 = vunpack.c.h.b16 %v780
    %v1524 = vunpack.c.l.b16 %v781
    %v1525 = vunpack.c.h.b16 %v781
    %v1526 = vunpack.c.l.b16 %v782
    %v1527 = vunpack.c.h.b16 %v782
    %v1528 = vunpack.c.l.b16 %v783
    %v1529 = vunpack.c.h.b16 %v783
    %v1530 = vunpack.c.l.b16 %v784
    %v1531 = vunpack.c.h.b16 %v784
    %v1532 = vunpack.c.l.b16 %v785
    %v1533 = vunpack.c.h.b16 %v785
    %v1534 = vunpack.c.l.b16 %v786
    %v1535 = vunpack.c.h.b16 %v786
    %v1536 = vunpack.c.l.b16 %v787
    %v1537 = vunpack.c.h.b16 %v787
    %v1538 = vunpack.c.l.b16 %v788
    %v1539 = vunpack.c.h.b16 %v788
    %v1540 = vunpack.c.l.b16 %v789
    %v1541 = vunpack.c.h.b16 %v789
    %v1542 = vunpack.c.l.b16 %v790
    %v1543 = vunpack.c.h.b16 %v790
    %v1544 = vunpack.c.l.b16 %v791
    %v1545 = vunpack.c.h.b16 %v791
    %v1546 = vunpack.c.l.b16 %v792
    %v1547 = vunpack.c.h.b16 %v792
    %v1548 = vunpack.c.l.b16 %v793
    %v1549 = vunpack.c.h.b16 %v793
    %v1550 = vunpack.c.l.b16 %v794
    %v1551 = vunpack.c.h.b16 %v794
    %v1552 = vunpack.c.l.b16 %v795
    %v1553 = vunpack.c.h.b16 %v795
    %v1554 = vunpack.c.l.b16 %v796
    %v1555 = vunpack.c.h.b16 %v796
    %v1556 = vunpack.c.l.b16 %v797
    %v1557 = vunpack.c.h.b16 %v797
    %v1558 = vunpack.c.l.b16 %v798
    %v1559 = vunpack.c.h.b16 %v798
    %v1560 = vunpack.c.l.b16 %v799
    %v1561 = vunpack.c.h.b16 %v799
    %v1562 = vunpack.c.l.b16 %v800
    %v1563 = vunpack.c.h.b16 %v800
    %v1564 = vunpack.c.l.b16 %v801
    %v1565 = vunpack.c.h.b16 %v801
    %v1566 = vunpack.c.l.b16 %v802
    %v1567 = vunpack.c.h.b16 %v802
    %v1568 = vunpack.c.l.b16 %v803
    %v1569 = vunpack.c.h.b16 %v803
    %v1570 = vunpack.c.l.b16 %v804
    %v1571 = vunpack.c.h.b16 %v804
    %v1572 = vunpack.c.l.b16 %v805
    %v1573 = vunpack.c.h.b16 %v805
    %v1574 = vunpack.c.l.b16 %v806
    %v1575 = vunpack.c.h.b16 %v806
    %v1576 = vunpack.c.l.b16 %v807
    %v1577 = vunpack.c.h.b16 %v807
    %v1578 = vunpack.c.l.b16 %v808
    %v1579 = vunpack.c.h.b16 %v808
    %v1580 = vunpack.c.l.b16 %v809
    %v1581 = vunpack.c.h.b16 %v809
    %v1582 = vunpack.c.l.b16 %v810
    %v1583 = vunpack.c.h.b16 %v810
    %v1584 = vunpack.c.l.b16 %v811
    %v1585 = vunpack.c.h.b16 %v811
    %v1586 = vunpack.c.l.b16 %v812
    %v1587 = vunpack.c.h.b16 %v812
    %v1588 = vunpack.c.l.b16 %v813
    %v1589 = vunpack.c.h.b16 %v813
    %v1590 = vunpack.c.l.b16 %v814
    %v1591 = vunpack.c.h.b16 %v814
    %v1592 = vunpack.c.l.b16 %v815
    %v1593 = vunpack.c.h.b16 %v815
    %v1594 = vunpack.c.l.b16 %v816
    %v1595 = vunpack.c.h.b16 %v816
    %v1596 = vunpack.c.l.b16 %v817
    %v1597 = vunpack.c.h.b16 %v817
    %v1598 = vunpack.c.l.b16 %v818
    %v1599 = vunpack.c.h.b16 %v818
    %v1600 = vunpack.c.l.b16 %v819
    %v1601 = vunpack.c.h.b16 %v819
    %v1602 = vunpack.c.l.b16 %v820
    %v1603 = vunpack.c.h.b16 %v820
    %v1604 = vunpack.c.l.b16 %v821
    %v1605 = vunpack.c.h.b16 %v821
    %v1606 = vunpack.c.l.b16 %v822
    %v1607 = vunpack.c.h.b16 %v822
    %v1608 = vunpack.c.l.b16 %v823
    %v1609 = vunpack.c.h.b16 %v823
    %v1610 = vunpack.c.l.b16 %v824
    %v1611 = vunpack.c.h.b16 %v824
    %v1612 = vunpack.c.l.b16 %v825
    %v1613 = vunpack.c.h.b16 %v825
    %v1614 = vunpack.c.l.b16 %v826
    %v1615 = vunpack.c.h.b16 %v826
    %v1616 = vunpack.c.l.b16 %v827
    %v1617 = vunpack.c.h.b16 %v827
    %v1618 = vunpack.c.l.b16 %v828
    %v1619 = vunpack.c.h.b16 %v828
    %v1620 = vunpack.c.l.b16 %v829
    %v1621 = vunpack.c.h.b16 %v829
    %v1622 = vunpack.c.l.b16 %v830
    %v1623 = vunpack.c.h.b16 %v830
    %v1624 = vunpack.c.l.b16 %v831
    %v1625 = vunpack.c.h.b16 %v831
    %v1626 = vunpack.c.l.b16 %v832
    %v1627 = vunpack.c.h.b16 %v832
    %v1628 = vunpack.c.l.b16 %v833
    %v1629 = vunpack.c.h.b16 %v833
    %v1630 = vunpack.c.l.b16 %v834
    %v1631 = vunpack.c.h.b16 %v834
    %v1632 = vunpack.c.l.b16 %v835
    %v1633 = vunpack.c.h.b16 %v835
    %v1634 = vunpack.c.l.b16 %v836
    %v1635 = vunpack.c.h.b16 %v836
    %v1636 = vunpack.c.l.b16 %v837
    %v1637 = vunpack.c.h.b16 %v837
    %v1638 = vunpack.c.l.b16 %v838
    %v1639 = vunpack.c.h.b16 %v838
    %v1640 = vunpack.c.l.b16 %v839
    %v1641 = vunpack.c.h.b16 %v839
    %v1642 = vunpack.c.l.b16 %v840
    %v1643 = vunpack.c.h.b16 %v840
    %v1644 = vunpack.c.l.b16 %v841
    %v1645 = vunpack.c.h.b16 %v841
    %v1646 = vunpack.c.l.b16 %v842
    %v1647 = vunpack.c.h.b16 %v842
    %v1648 = vunpack.c.l.b16 %v843
    %v1649 = vunpack.c.h.b16 %v843
    %v1650 = vunpack.c.l.b16 %v844
    %v1651 = vunpack.c.h.b16 %v844
    %v1652 = vunpack.c.l.b16 %v845
    %v1653 = vunpack.c.h.b16 %v845
    %v1654 = vunpack.c.l.b16 %v846
    %v1655 = vunpack.c.h.b16 %v846
    %v1656 = vunpack.c.l.b16 %v847
    %v1657 = vunpack.c.h.b16 %v847
    %v1658 = vpack.c.b16 %v1154, %v1146
    %v1659 = vpack.c.b16 %v1155, %v1147
    %v1660 = vpack.c.b16 %v1156, %v1148
    %v1661 = vpack.c.b16 %v1157, %v1149
    %v1662 = vpack.c.b16 %v1158, %v1150
    %v1663 = vpack.c.b16 %v1159, %v1151
    %v1664 = vpack.c.b16 %v1160, %v1152
    %v1665 = vpack.c.b16 %v1161, %v1153
    %v1666 = vpack.c.b16 %v1170, %v1162
    %v1667 = vpack.c.b16 %v1171, %v1163
    %v1668 = vpack.c.b16 %v1172, %v1164
    %v1669 = vpack.c.b16 %v1173, %v1165
    %v1670 = vpack.c.b16 %v1174, %v1166
    %v1671 = vpack.c.b16 %v1175, %v1167
    %v1672 = vpack.c.b16 %v1176, %v1168
    %v1673 = vpack.c.b16 %v1177, %v1169
    %v1674 = vpack.c.b16 %v1186, %v1178
    %v1675 = vpack.c.b16 %v1187, %v1179
    %v1676 = vpack.c.b16 %v1188, %v1180
    %v1677 = vpack.c.b16 %v1189, %v1181
    %v1678 = vpack.c.b16 %v1190, %v1182
    %v1679 = vpack.c.b16 %v1191, %v1183
    %v1680 = vpack.c.b16 %v1192, %v1184
    %v1681 = vpack.c.b16 %v1193, %v1185
    %v1682 = vpack.c.b16 %v1202, %v1194
    %v1683 = vpack.c.b16 %v1203, %v1195
    %v1684 = vpack.c.b16 %v1204, %v1196
    %v1685 = vpack.c.b16 %v1205, %v1197
    %v1686 = vpack.c.b16 %v1206, %v1198
    %v1687 = vpack.c.b16 %v1207, %v1199
    %v1688 = vpack.c.b16 %v1208, %v1200
    %v1689 = vpack.c.b16 %v1209, %v1201
    %v1690 = vpack.c.b16 %v1218, %v1210
    %v1691 = vpack.c.b16 %v1219, %v1211
    %v1692 = vpack.c.b16 %v1220, %v1212
    %v1693 = vpack.c.b16 %v1221, %v1213
    %v1694 = vpack.c.b16 %v1222, %v1214
    %v1695 = vpack.c.b16 %v1223, %v1215
    %v1696 = vpack.c.b16 %v1224, %v1216
    %v1697 = vpack.c.b16 %v1225, %v1217
    %v1698 = vpack.c.b16 %v1234, %v1226
    %v1699 = vpack.c.b16 %v1235, %v1227
    %v1700 = vpack.c.b16 %v1236, %v1228
    %v1701 = vpack.c.b16 %v1237, %v1229
    %v1702 = vpack.c.b16 %v1238, %v1230
    %v1703 = vpack.c.b16 %v1239, %v1231
    %v1704 = vpack.c.b16 %v1240, %v1232
    %v1705 = vpack.c.b16 %v1241, %v1233
    %v1706 = vpack.c.b16 %v1250, %v1242
    %v1707 = vpack.c.b16 %v1251, %v1243
    %v1708 = vpack.c.b16 %v1252, %v1244
    %v1709 = vpack.c.b16 %v1253, %v1245
    %v1710 = vpack.c.b16 %v1254, %v1246
    %v1711 = vpack.c.b16 %v1255, %v1247
    %v1712 = vpack.c.b16 %v1256, %v1248
    %v1713 = vpack.c.b16 %v1257, %v1249
    %v1714 = vpack.c.b16 %v1266, %v1258
    %v1715 = vpack.c.b16 %v1267, %v1259
    %v1716 = vpack.c.b16 %v1268, %v1260
    %v1717 = vpack.c.b16 %v1269, %v1261
    %v1718 = vpack.c.b16 %v1270, %v1262
    %v1719 = vpack.c.b16 %v1271, %v1263
    %v1720 = vpack.c.b16 %v1272, %v1264
    %v1721 = vpack.c.b16 %v1273, %v1265
    %v1722 = vpack.c.b16 %v1282, %v1274
    %v1723 = vpack.c.b16 %v1283, %v1275
    %v1724 = vpack.c.b16 %v1284, %v1276
    %v1725 = vpack.c.b16 %v1285, %v1277
    %v1726 = vpack.c.b16 %v1286, %v1278
    %v1727 = vpack.c.b16 %v1287, %v1279
    %v1728 = vpack.c.b16 %v1288, %v1280
    %v1729 = vpack.c.b16 %v1289, %v1281
    %v1730 = vpack.c.b16 %v1298, %v1290
    %v1731 = vpack.c.b16 %v1299, %v1291
    %v1732 = vpack.c.b16 %v1300, %v1292
    %v1733 = vpack.c.b16 %v1301, %v1293
    %v1734 = vpack.c.b16 %v1302, %v1294
    %v1735 = vpack.c.b16 %v1303, %v1295
    %v1736 = vpack.c.b16 %v1304, %v1296
    %v1737 = vpack.c.b16 %v1305, %v1297
    %v1738 = vpack.c.b16 %v1314, %v1306
    %v1739 = vpack.c.b16 %v1315, %v1307
    %v1740 = vpack.c.b16 %v1316, %v1308
    %v1741 = vpack.c.b16 %v1317, %v1309
    %v1742 = vpack.c.b16 %v1318, %v1310
    %v1743 = vpack.c.b16 %v1319, %v1311
    %v1744 = vpack.c.b16 %v1320, %v1312
    %v1745 = vpack.c.b16 %v1321, %v1313
    %v1746 = vpack.c.b16 %v1330, %v1322
    %v1747 = vpack.c.b16 %v1331, %v1323
    %v1748 = vpack.c.b16 %v1332, %v1324
    %v1749 = vpack.c.b16 %v1333, %v1325
    %v1750 = vpack.c.b16 %v1334, %v1326
    %v1751 = vpack.c.b16 %v1335, %v1327
    %v1752 = vpack.c.b16 %v1336, %v1328
    %v1753 = vpack.c.b16 %v1337, %v1329
    %v1754 = vpack.c.b16 %v1346, %v1338
    %v1755 = vpack.c.b16 %v1347, %v1339
    %v1756 = vpack.c.b16 %v1348, %v1340
    %v1757 = vpack.c.b16 %v1349, %v1341
    %v1758 = vpack.c.b16 %v1350, %v1342
    %v1759 = vpack.c.b16 %v1351, %v1343
    %v1760 = vpack.c.b16 %v1352, %v1344
    %v1761 = vpack.c.b16 %v1353, %v1345
    %v1762 = vpack.c.b16 %v1362, %v1354
    %v1763 = vpack.c.b16 %v1363, %v1355
    %v1764 = vpack.c.b16 %v1364, %v1356
    %v1765 = vpack.c.b16 %v1365, %v1357
    %v1766 = vpack.c.b16 %v1366, %v1358
    %v1767 = vpack.c.b16 %v1367, %v1359
    %v1768 = vpack.c.b16 %v1368, %v1360
    %v1769 = vpack.c.b16 %v1369, %v1361
    %v1770 = vpack.c.b16 %v1378, %v1370
    %v1771 = vpack.c.b16 %v1379, %v1371
    %v1772 = vpack.c.b16 %v1380, %v1372
    %v1773 = vpack.c.b16 %v1381, %v1373
    %v1774 = vpack.c.b16 %v1382, %v1374
    %v1775 = vpack.c.b16 %v1383, %v1375
    %v1776 = vpack.c.b16 %v1384, %v1376
    %v1777 = vpack.c.b16 %v1385, %v1377
    %v1778 = vpack.c.b16 %v1394, %v1386
    %v1779 = vpack.c.b16 %v1395, %v1387
    %v1780 = vpack.c.b16 %v1396, %v1388
    %v1781 = vpack.c.b16 %v1397, %v1389
    %v1782 = vpack.c.b16 %v1398, %v1390
    %v1783 = vpack.c.b16 %v1399, %v1391
    %v1784 = vpack.c.b16 %v1400, %v1392
    %v1785 = vpack.c.b16 %v1401, %v1393
    %v1786 = vpack.c.b16 %v1410, %v1402
    %v1787 = vpack.c.b16 %v1411, %v1403
    %v1788 = vpack.c.b16 %v1412, %v1404
    %v1789 = vpack.c.b16 %v1413, %v1405
    %v1790 = vpack.c.b16 %v1414, %v1406
    %v1791 = vpack.c.b16 %v1415, %v1407
    %v1792 = vpack.c.b16 %v1416, %v1408
    %v1793 = vpack.c.b16 %v1417, %v1409
    %v1794 = vpack.c.b16 %v1426, %v1418
    %v1795 = vpack.c.b16 %v1427, %v1419
    %v1796 = vpack.c.b16 %v1428, %v1420
    %v1797 = vpack.c.b16 %v1429, %v1421
    %v1798 = vpack.c.b16 %v1430, %v1422
    %v1799 = vpack.c.b16 %v1431, %v1423
    %v1800 = vpack.c.b16 %v1432, %v1424
    %v1801 = vpack.c.b16 %v1433, %v1425
    %v1802 = vpack.c.b16 %v1442, %v1434
    %v1803 = vpack.c.b16 %v1443, %v1435
    %v1804 = vpack.c.b16 %v1444, %v1436
    %v1805 = vpack.c.b16 %v1445, %v1437
    %v1806 = vpack.c.b16 %v1446, %v1438
    %v1807 = vpack.c.b16 %v1447, %v1439
    %v1808 = vpack.c.b16 %v1448, %v1440
    %v1809 = vpack.c.b16 %v1449, %v1441
    %v1810 = vpack.c.b16 %v1458, %v1450
    %v1811 = vpack.c.b16 %v1459, %v1451
    %v1812 = vpack.c.b16 %v1460, %v1452
    %v1813 = vpack.c.b16 %v1461, %v1453
    %v1814 = vpack.c.b16 %v1462, %v1454
    %v1815 = vpack.c.b16 %v1463, %v1455
    %v1816 = vpack.c.b16 %v1464, %v1456
    %v1817 = vpack.c.b16 %v1465, %v1457
    %v1818 = vpack.c.b16 %v1474, %v1466
    %v1819 = vpack.c.b16 %v1475, %v1467
    %v1820 = vpack.c.b16 %v1476, %v1468
    %v1821 = vpack.c.b16 %v1477, %v1469
    %v1822 = vpack.c.b16 %v1478, %v1470
    %v1823 = vpack.c.b16 %v1479, %v1471
    %v1824 = vpack.c.b16 %v1480, %v1472
    %v1825 = vpack.c.b16 %v1481, %v1473
    %v1826 = vpack.c.b16 %v1490, %v1482
    %v1827 = vpack.c.b16 %v1491, %v1483
    %v1828 = vpack.c.b16 %v1492, %v1484
    %v1829 = vpack.c.b16 %v1493, %v1485
    %v1830 = vpack.c.b16 %v1494, %v1486
    %v1831 = vpack.c.b16 %v1495, %v1487
    %v1832 = vpack.c.b16 %v1496, %v1488
    %v1833 = vpack.c.b16 %v1497, %v1489
    %v1834 = vpack.c.b16 %v1506, %v1498
    %v1835 = vpack.c.b16 %v1507, %v1499
    %v1836 = vpack.c.b16 %v1508, %v1500
    %v1837 = vpack.c.b16 %v1509, %v1501
    %v1838 = vpack.c.b16 %v1510, %v1502
    %v1839 = vpack.c.b16 %v1511, %v1503
    %v1840 = vpack.c.b16 %v1512, %v1504
    %v1841 = vpack.c.b16 %v1513, %v1505
    %v1842 = vpack.c.b16 %v1522, %v1514
    %v1843 = vpack.c.b16 %v1523, %v1515
    %v1844 = vpack.c.b16 %v1524, %v1516
    %v1845 = vpack.c.b16 %v1525, %v1517
    %v1846 = vpack.c.b16 %v1526, %v1518
    %v1847 = vpack.c.b16 %v1527, %v1519
    %v1848 = vpack.c.b16 %v1528, %v1520
    %v1849 = vpack.c.b16 %v1529, %v1521
    %v1850 = vpack.c.b16 %v1538, %v1530
    %v1851 = vpack.c.b16 %v1539, %v1531
    %v1852 = vpack.c.b16 %v1540, %v1532
    %v1853 = vpack.c.b16 %v1541, %v1533
    %v1854 = vpack.c.b16 %v1542, %v1534
    %v1855 = vpack.c.b16 %v1543, %v1535
    %v1856 = vpack.c.b16 %v1544, %v1536
    %v1857 = vpack.c.b16 %v1545, %v1537
    %v1858 = vpack.c.b16 %v1554, %v1546
    %v1859 = vpack.c.b16 %v1555, %v1547
    %v1860 = vpack.c.b16 %v1556, %v1548
    %v1861 = vpack.c.b16 %v1557, %v1549
    %v1862 = vpack.c.b16 %v1558, %v1550
    %v1863 = vpack.c.b16 %v1559, %v1551
    %v1864 = vpack.c.b16 %v1560, %v1552
    %v1865 = vpack.c.b16 %v1561, %v1553
    %v1866 = vpack.c.b16 %v1570, %v1562
    %v1867 = vpack.c.b16 %v1571, %v1563
    %v1868 = vpack.c.b16 %v1572, %v1564
    %v1869 = vpack.c.b16 %v1573, %v1565
    %v1870 = vpack.c.b16 %v1574, %v1566
    %v1871 = vpack.c.b16 %v1575, %v1567
    %v1872 = vpack.c.b16 %v1576, %v1568
    %v1873 = vpack.c.b16 %v1577, %v1569
    %v1874 = vpack.c.b16 %v1586, %v1578
    %v1875 = vpack.c.b16 %v1587, %v1579
    %v1876 = vpack.c.b16 %v1588, %v1580
    %v1877 = vpack.c.b16 %v1589, %v1581
    %v1878 = vpack.c.b16 %v1590, %v1582
    %v1879 = vpack.c.b16 %v1591, %v1583
    %v1880 = vpack.c.b16 %v1592, %v1584
    %v1881 = vpack.c.b16 %v1593, %v1585
    %v1882 = vpack.c.b16 %v1602, %v1594
    %v1883 = vpack.c.b16 %v1603, %v1595
    %v1884 = vpack.c.b16 %v1604, %v1596
    %v1885 = vpack.c.b16 %v1605, %v1597
    %v1886 = vpack.c.b16 %v1606, %v1598
    %v1887 = vpack.c.b16 %v1607, %v1599
    %v1888 = vpack.c.b16 %v1608, %v1600
    %v1889 = vpack.c.b16 %v1609, %v1601
    %v1890 = vpack.c.b16 %v1618, %v1610
    %v1891 = vpack.c.b16 %v1619, %v1611
    %v1892 = vpack.c.b16 %v1620, %v1612
    %v1893 = vpack.c.b16 %v1621, %v1613
    %v1894 = vpack.c.b16 %v1622, %v1614
    %v1895 = vpack.c.b16 %v1623, %v1615
    %v1896 = vpack.c.b16 %v1624, %v1616
    %v1897 = vpack.c.b16 %v1625, %v1617
    %v1898 = vpack.c.b16 %v1634, %v1626
    %v1899 = vpack.c.b16 %v1635, %v1627
    %v1900 = vpack.c.b16 %v1636, %v1628
    %v1901 = vpack.c.b16 %v1637, %v1629
    %v1902 = vpack.c.b16 %v1638, %v1630
    %v1903 = vpack.c.b16 %v1639, %v1631
    %v1904 = vpack.c.b16 %v1640, %v1632
    %v1905 = vpack.c.b16 %v1641, %v1633
    %v1906 = vpack.c.b16 %v1650, %v1642
    %v1907 = vpack.c.b16 %v1651, %v1643
    %v1908 = vpack.c.b16 %v1652, %v1644
    %v1909 = vpack.c.b16 %v1653, %v1645
    %v1910 = vpack.c.b16 %v1654, %v1646
    %v1911 = vpack.c.b16 %v1655, %v1647
    %v1912 = vpack.c.b16 %v1656, %v1648
    %v1913 = vpack.c.b16 %v1657, %v1649
    %2170 = vmatprep.subr.bf16.mxu0 %v1659
    %2171 = vmatpush1.bf16.msra.mxu0 %v1658
    %2172 = vmatprep.subr.bf16.mxu0 %v1667
    %2173 = vmatpush1.bf16.msra.mxu0 %v1666
    %2174 = vmatprep.subr.bf16.mxu0 %v1675
    %2175 = vmatpush1.bf16.msra.mxu0 %v1674
    %2176 = vmatprep.subr.bf16.mxu0 %v1683
    %2177 = vmatpush1.bf16.msra.mxu0 %v1682
    %2178 = vmatprep.subr.bf16.mxu0 %v1691
    %2179 = vmatpush1.bf16.msra.mxu0 %v1690
    %2180 = vmatprep.subr.bf16.mxu0 %v1699
    %2181 = vmatpush1.bf16.msra.mxu0 %v1698
    %2182 = vmatprep.subr.bf16.mxu0 %v1707
    %2183 = vmatpush1.bf16.msra.mxu0 %v1706
    %2184 = vmatprep.subr.bf16.mxu0 %v1715
    %2185 = vmatpush1.bf16.msra.mxu0 %v1714
    %2186 = vmatprep.subr.bf16.mxu0 %v1723
    %2187 = vmatpush1.bf16.msra.mxu0 %v1722
    %2188 = vmatprep.subr.bf16.mxu0 %v1731
    %2189 = vmatpush1.bf16.msra.mxu0 %v1730
    %2190 = vmatprep.subr.bf16.mxu0 %v1739
    %2191 = vmatpush1.bf16.msra.mxu0 %v1738
    %2192 = vmatprep.subr.bf16.mxu0 %v1747
    %2193 = vmatpush1.bf16.msra.mxu0 %v1746
    %2194 = vmatprep.subr.bf16.mxu0 %v1755
    %2195 = vmatpush1.bf16.msra.mxu0 %v1754
    %2196 = vmatprep.subr.bf16.mxu0 %v1763
    %2197 = vmatpush1.bf16.msra.mxu0 %v1762
    %2198 = vmatprep.subr.bf16.mxu0 %v1771
    %2199 = vmatpush1.bf16.msra.mxu0 %v1770
    %2200 = vmatprep.subr.bf16.mxu0 %v1779
    %2201 = vmatpush1.bf16.msra.mxu0 %v1778
    %2202 = vmatprep.mubr.bf16.mxu0 %v589
    %2203 = vmatmul.mubr.bf16.gmra.mrb[0].mxu0 %v588
    %v2204 = vpop.f32.mrb[0].mxu0
    %v2205 = vadd.f32 %v853, %v2204
    %v2206 = vpop.f32.mrb[0].mxu0
    %v2207 = vadd.f32 %v857, %v2206
    %v2208 = vpop.f32.mrb[0].mxu0
    %v2209 = vpop.f32.mrb[0].mxu0
    %2210 = vdwg.mxu0
    %2211 = vmatprep.subr.bf16.mxu0 %v1787
    %2212 = vmatpush1.bf16.msra.mxu0 %v1786
    %2213 = vmatprep.subr.bf16.mxu0 %v1795
    %2214 = vmatpush1.bf16.msra.mxu0 %v1794
    %2215 = vmatprep.subr.bf16.mxu0 %v1803
    %2216 = vmatpush1.bf16.msra.mxu0 %v1802
    %2217 = vmatprep.subr.bf16.mxu0 %v1811
    %2218 = vmatpush1.bf16.msra.mxu0 %v1810
    %2219 = vmatprep.subr.bf16.mxu0 %v1819
    %2220 = vmatpush1.bf16.msra.mxu0 %v1818
    %2221 = vmatprep.subr.bf16.mxu0 %v1827
    %2222 = vmatpush1.bf16.msra.mxu0 %v1826
    %2223 = vmatprep.subr.bf16.mxu0 %v1835
    %2224 = vmatpush1.bf16.msra.mxu0 %v1834
    %2225 = vmatprep.subr.bf16.mxu0 %v1843
    %2226 = vmatpush1.bf16.msra.mxu0 %v1842
    %2227 = vmatprep.subr.bf16.mxu0 %v1851
    %2228 = vmatpush1.bf16.msra.mxu0 %v1850
    %2229 = vmatprep.subr.bf16.mxu0 %v1859
    %2230 = vmatpush1.bf16.msra.mxu0 %v1858
    %2231 = vmatprep.subr.bf16.mxu0 %v1867
    %2232 = vmatpush1.bf16.msra.mxu0 %v1866
    %2233 = vmatprep.subr.bf16.mxu0 %v1875
    %2234 = vmatpush1.bf16.msra.mxu0 %v1874
    %2235 = vmatprep.subr.bf16.mxu0 %v1883
    %2236 = vmatpush1.bf16.msra.mxu0 %v1882
    %2237 = vmatprep.subr.bf16.mxu0 %v1891
    %2238 = vmatpush1.bf16.msra.mxu0 %v1890
    %2239 = vmatprep.subr.bf16.mxu0 %v1899
    %2240 = vmatpush1.bf16.msra.mxu0 %v1898
    %2241 = vmatprep.subr.bf16.mxu0 %v1907
    %2242 = vmatpush1.bf16.msra.mxu0 %v1906
    %2243 = vmatprep.mubr.bf16.mxu0 %v591
    %2244 = vmatmul.mubr.bf16.gmra.mrb[0].mxu0 %v590
    %v2245 = vpop.f32.mrb[0].mxu0
    %v2246 = vadd.f32 %v2205, %v2245
    %v2247 = vpop.f32.mrb[0].mxu0
    %v2248 = vadd.f32 %v2207, %v2247
    %v2249 = vpop.f32.mrb[0].mxu0
    %v2250 = vpop.f32.mrb[0].mxu0
    %2251 = vdwg.mxu0
    %2252 = vmatprep.subr.bf16.mxu0 %v1661
    %2253 = vmatpush1.bf16.msra.mxu0 %v1660
    %2254 = vmatprep.subr.bf16.mxu0 %v1669
    %2255 = vmatpush1.bf16.msra.mxu0 %v1668
    %2256 = vmatprep.subr.bf16.mxu0 %v1677
    %2257 = vmatpush1.bf16.msra.mxu0 %v1676
    %2258 = vmatprep.subr.bf16.mxu0 %v1685
    %2259 = vmatpush1.bf16.msra.mxu0 %v1684
    %2260 = vmatprep.subr.bf16.mxu0 %v1693
    %2261 = vmatpush1.bf16.msra.mxu0 %v1692
    %2262 = vmatprep.subr.bf16.mxu0 %v1701
    %2263 = vmatpush1.bf16.msra.mxu0 %v1700
    %2264 = vmatprep.subr.bf16.mxu0 %v1709
    %2265 = vmatpush1.bf16.msra.mxu0 %v1708
    %2266 = vmatprep.subr.bf16.mxu0 %v1717
    %2267 = vmatpush1.bf16.msra.mxu0 %v1716
    %2268 = vmatprep.subr.bf16.mxu0 %v1725
    %2269 = vmatpush1.bf16.msra.mxu0 %v1724
    %2270 = vmatprep.subr.bf16.mxu0 %v1733
    %2271 = vmatpush1.bf16.msra.mxu0 %v1732
    %2272 = vmatprep.subr.bf16.mxu0 %v1741
    %2273 = vmatpush1.bf16.msra.mxu0 %v1740
    %2274 = vmatprep.subr.bf16.mxu0 %v1749
    %2275 = vmatpush1.bf16.msra.mxu0 %v1748
    %2276 = vmatprep.subr.bf16.mxu0 %v1757
    %2277 = vmatpush1.bf16.msra.mxu0 %v1756
    %2278 = vmatprep.subr.bf16.mxu0 %v1765
    %2279 = vmatpush1.bf16.msra.mxu0 %v1764
    %2280 = vmatprep.subr.bf16.mxu0 %v1773
    %2281 = vmatpush1.bf16.msra.mxu0 %v1772
    %2282 = vmatprep.subr.bf16.mxu0 %v1781
    %2283 = vmatpush1.bf16.msra.mxu0 %v1780
    %2284 = vmatprep.mubr.bf16.mxu0 %v589
    %2285 = vmatmul.mubr.bf16.gmra.mrb[0].mxu0 %v588
    %v2286 = vpop.f32.mrb[0].mxu0
    %v2287 = vadd.f32 %v861, %v2286
    %v2288 = vpop.f32.mrb[0].mxu0
    %v2289 = vadd.f32 %v865, %v2288
    %v2290 = vpop.f32.mrb[0].mxu0
    %v2291 = vpop.f32.mrb[0].mxu0
    %2292 = vdwg.mxu0
    %2293 = vmatprep.subr.bf16.mxu0 %v1789
    %2294 = vmatpush1.bf16.msra.mxu0 %v1788
    %2295 = vmatprep.subr.bf16.mxu0 %v1797
    %2296 = vmatpush1.bf16.msra.mxu0 %v1796
    %2297 = vmatprep.subr.bf16.mxu0 %v1805
    %2298 = vmatpush1.bf16.msra.mxu0 %v1804
    %2299 = vmatprep.subr.bf16.mxu0 %v1813
    %2300 = vmatpush1.bf16.msra.mxu0 %v1812
    %2301 = vmatprep.subr.bf16.mxu0 %v1821
    %2302 = vmatpush1.bf16.msra.mxu0 %v1820
    %2303 = vmatprep.subr.bf16.mxu0 %v1829
    %2304 = vmatpush1.bf16.msra.mxu0 %v1828
    %2305 = vmatprep.subr.bf16.mxu0 %v1837
    %2306 = vmatpush1.bf16.msra.mxu0 %v1836
    %2307 = vmatprep.subr.bf16.mxu0 %v1845
    %2308 = vmatpush1.bf16.msra.mxu0 %v1844
    %2309 = vmatprep.subr.bf16.mxu0 %v1853
    %2310 = vmatpush1.bf16.msra.mxu0 %v1852
    %2311 = vmatprep.subr.bf16.mxu0 %v1861
    %2312 = vmatpush1.bf16.msra.mxu0 %v1860
    %2313 = vmatprep.subr.bf16.mxu0 %v1869
    %2314 = vmatpush1.bf16.msra.mxu0 %v1868
    %2315 = vmatprep.subr.bf16.mxu0 %v1877
    %2316 = vmatpush1.bf16.msra.mxu0 %v1876
    %2317 = vmatprep.subr.bf16.mxu0 %v1885
    %2318 = vmatpush1.bf16.msra.mxu0 %v1884
    %2319 = vmatprep.subr.bf16.mxu0 %v1893
    %2320 = vmatpush1.bf16.msra.mxu0 %v1892
    %2321 = vmatprep.subr.bf16.mxu0 %v1901
    %2322 = vmatpush1.bf16.msra.mxu0 %v1900
    %2323 = vmatprep.subr.bf16.mxu0 %v1909
    %2324 = vmatpush1.bf16.msra.mxu0 %v1908
    %2325 = vmatprep.mubr.bf16.mxu0 %v591
    %2326 = vmatmul.mubr.bf16.gmra.mrb[0].mxu0 %v590
    %v2327 = vpop.f32.mrb[0].mxu0
    %v2328 = vadd.f32 %v2287, %v2327
    %v2329 = vpop.f32.mrb[0].mxu0
    %v2330 = vadd.f32 %v2289, %v2329
    %v2331 = vpop.f32.mrb[0].mxu0
    %v2332 = vpop.f32.mrb[0].mxu0
    %2333 = vdwg.mxu0
    %2334 = vmatprep.subr.bf16.mxu0 %v1663
    %2335 = vmatpush1.bf16.msra.mxu0 %v1662
    %2336 = vmatprep.subr.bf16.mxu0 %v1671
    %2337 = vmatpush1.bf16.msra.mxu0 %v1670
    %2338 = vmatprep.subr.bf16.mxu0 %v1679
    %2339 = vmatpush1.bf16.msra.mxu0 %v1678
    %2340 = vmatprep.subr.bf16.mxu0 %v1687
    %2341 = vmatpush1.bf16.msra.mxu0 %v1686
    %2342 = vmatprep.subr.bf16.mxu0 %v1695
    %2343 = vmatpush1.bf16.msra.mxu0 %v1694
    %2344 = vmatprep.subr.bf16.mxu0 %v1703
    %2345 = vmatpush1.bf16.msra.mxu0 %v1702
    %2346 = vmatprep.subr.bf16.mxu0 %v1711
    %2347 = vmatpush1.bf16.msra.mxu0 %v1710
    %2348 = vmatprep.subr.bf16.mxu0 %v1719
    %2349 = vmatpush1.bf16.msra.mxu0 %v1718
    %2350 = vmatprep.subr.bf16.mxu0 %v1727
    %2351 = vmatpush1.bf16.msra.mxu0 %v1726
    %2352 = vmatprep.subr.bf16.mxu0 %v1735
    %2353 = vmatpush1.bf16.msra.mxu0 %v1734
    %2354 = vmatprep.subr.bf16.mxu0 %v1743
    %2355 = vmatpush1.bf16.msra.mxu0 %v1742
    %2356 = vmatprep.subr.bf16.mxu0 %v1751
    %2357 = vmatpush1.bf16.msra.mxu0 %v1750
    %2358 = vmatprep.subr.bf16.mxu0 %v1759
    %2359 = vmatpush1.bf16.msra.mxu0 %v1758
    %2360 = vmatprep.subr.bf16.mxu0 %v1767
    %2361 = vmatpush1.bf16.msra.mxu0 %v1766
    %2362 = vmatprep.subr.bf16.mxu0 %v1775
    %2363 = vmatpush1.bf16.msra.mxu0 %v1774
    %2364 = vmatprep.subr.bf16.mxu0 %v1783
    %2365 = vmatpush1.bf16.msra.mxu0 %v1782
    %2366 = vmatprep.mubr.bf16.mxu0 %v589
    %2367 = vmatmul.mubr.bf16.gmra.mrb[0].mxu0 %v588
    %v2368 = vpop.f32.mrb[0].mxu0
    %v2369 = vadd.f32 %v869, %v2368
    %v2370 = vpop.f32.mrb[0].mxu0
    %v2371 = vadd.f32 %v873, %v2370
    %v2372 = vpop.f32.mrb[0].mxu0
    %v2373 = vpop.f32.mrb[0].mxu0
    %2374 = vdwg.mxu0
    %2375 = vmatprep.subr.bf16.mxu0 %v1791
    %2376 = vmatpush1.bf16.msra.mxu0 %v1790
    %2377 = vmatprep.subr.bf16.mxu0 %v1799
    %2378 = vmatpush1.bf16.msra.mxu0 %v1798
    %2379 = vmatprep.subr.bf16.mxu0 %v1807
    %2380 = vmatpush1.bf16.msra.mxu0 %v1806
    %2381 = vmatprep.subr.bf16.mxu0 %v1815
    %2382 = vmatpush1.bf16.msra.mxu0 %v1814
    %2383 = vmatprep.subr.bf16.mxu0 %v1823
    %2384 = vmatpush1.bf16.msra.mxu0 %v1822
    %2385 = vmatprep.subr.bf16.mxu0 %v1831
    %2386 = vmatpush1.bf16.msra.mxu0 %v1830
    %2387 = vmatprep.subr.bf16.mxu0 %v1839
    %2388 = vmatpush1.bf16.msra.mxu0 %v1838
    %2389 = vmatprep.subr.bf16.mxu0 %v1847
    %2390 = vmatpush1.bf16.msra.mxu0 %v1846
    %2391 = vmatprep.subr.bf16.mxu0 %v1855
    %2392 = vmatpush1.bf16.msra.mxu0 %v1854
    %2393 = vmatprep.subr.bf16.mxu0 %v1863
    %2394 = vmatpush1.bf16.msra.mxu0 %v1862
    %2395 = vmatprep.subr.bf16.mxu0 %v1871
    %2396 = vmatpush1.bf16.msra.mxu0 %v1870
    %2397 = vmatprep.subr.bf16.mxu0 %v1879
    %2398 = vmatpush1.bf16.msra.mxu0 %v1878
    %2399 = vmatprep.subr.bf16.mxu0 %v1887
    %2400 = vmatpush1.bf16.msra.mxu0 %v1886
    %2401 = vmatprep.subr.bf16.mxu0 %v1895
    %2402 = vmatpush1.bf16.msra.mxu0 %v1894
    %2403 = vmatprep.subr.bf16.mxu0 %v1903
    %2404 = vmatpush1.bf16.msra.mxu0 %v1902
    %2405 = vmatprep.subr.bf16.mxu0 %v1911
    %2406 = vmatpush1.bf16.msra.mxu0 %v1910
    %2407 = vmatprep.mubr.bf16.mxu0 %v591
    %2408 = vmatmul.mubr.bf16.gmra.mrb[0].mxu0 %v590
    %v2409 = vpop.f32.mrb[0].mxu0
    %v2410 = vadd.f32 %v2369, %v2409
    %v2411 = vpop.f32.mrb[0].mxu0
    %v2412 = vadd.f32 %v2371, %v2411
    %v2413 = vpop.f32.mrb[0].mxu0
    %v2414 = vpop.f32.mrb[0].mxu0
    %2415 = vdwg.mxu0
    %2416 = vmatprep.subr.bf16.mxu0 %v1665
    %2417 = vmatpush1.bf16.msra.mxu0 %v1664
    %2418 = vmatprep.subr.bf16.mxu0 %v1673
    %2419 = vmatpush1.bf16.msra.mxu0 %v1672
    %2420 = vmatprep.subr.bf16.mxu0 %v1681
    %2421 = vmatpush1.bf16.msra.mxu0 %v1680
    %2422 = vmatprep.subr.bf16.mxu0 %v1689
    %2423 = vmatpush1.bf16.msra.mxu0 %v1688
    %2424 = vmatprep.subr.bf16.mxu0 %v1697
    %2425 = vmatpush1.bf16.msra.mxu0 %v1696
    %2426 = vmatprep.subr.bf16.mxu0 %v1705
    %2427 = vmatpush1.bf16.msra.mxu0 %v1704
    %2428 = vmatprep.subr.bf16.mxu0 %v1713
    %2429 = vmatpush1.bf16.msra.mxu0 %v1712
    %2430 = vmatprep.subr.bf16.mxu0 %v1721
    %2431 = vmatpush1.bf16.msra.mxu0 %v1720
    %2432 = vmatprep.subr.bf16.mxu0 %v1729
    %2433 = vmatpush1.bf16.msra.mxu0 %v1728
    %2434 = vmatprep.subr.bf16.mxu0 %v1737
    %2435 = vmatpush1.bf16.msra.mxu0 %v1736
    %2436 = vmatprep.subr.bf16.mxu0 %v1745
    %2437 = vmatpush1.bf16.msra.mxu0 %v1744
    %2438 = vmatprep.subr.bf16.mxu0 %v1753
    %2439 = vmatpush1.bf16.msra.mxu0 %v1752
    %2440 = vmatprep.subr.bf16.mxu0 %v1761
    %2441 = vmatpush1.bf16.msra.mxu0 %v1760
    %2442 = vmatprep.subr.bf16.mxu0 %v1769
    %2443 = vmatpush1.bf16.msra.mxu0 %v1768
    %2444 = vmatprep.subr.bf16.mxu0 %v1777
    %2445 = vmatpush1.bf16.msra.mxu0 %v1776
    %2446 = vmatprep.subr.bf16.mxu0 %v1785
    %2447 = vmatpush1.bf16.msra.mxu0 %v1784
    %2448 = vmatprep.mubr.bf16.mxu0 %v589
    %2449 = vmatmul.mubr.bf16.gmra.mrb[0].mxu0 %v588
    %v2450 = vpop.f32.mrb[0].mxu0
    %v2451 = vadd.f32 %v877, %v2450
    %v2452 = vpop.f32.mrb[0].mxu0
    %v2453 = vadd.f32 %v881, %v2452
    %v2454 = vpop.f32.mrb[0].mxu0
    %v2455 = vpop.f32.mrb[0].mxu0
    %2456 = vdwg.mxu0
    %2457 = vmatprep.subr.bf16.mxu0 %v1793
    %2458 = vmatpush1.bf16.msra.mxu0 %v1792
    %2459 = vmatprep.subr.bf16.mxu0 %v1801
    %2460 = vmatpush1.bf16.msra.mxu0 %v1800
    %2461 = vmatprep.subr.bf16.mxu0 %v1809
    %2462 = vmatpush1.bf16.msra.mxu0 %v1808
    %2463 = vmatprep.subr.bf16.mxu0 %v1817
    %2464 = vmatpush1.bf16.msra.mxu0 %v1816
    %2465 = vmatprep.subr.bf16.mxu0 %v1825
    %2466 = vmatpush1.bf16.msra.mxu0 %v1824
    %2467 = vmatprep.subr.bf16.mxu0 %v1833
    %2468 = vmatpush1.bf16.msra.mxu0 %v1832
    %2469 = vmatprep.subr.bf16.mxu0 %v1841
    %2470 = vmatpush1.bf16.msra.mxu0 %v1840
    %2471 = vmatprep.subr.bf16.mxu0 %v1849
    %2472 = vmatpush1.bf16.msra.mxu0 %v1848
    %2473 = vmatprep.subr.bf16.mxu0 %v1857
    %2474 = vmatpush1.bf16.msra.mxu0 %v1856
    %2475 = vmatprep.subr.bf16.mxu0 %v1865
    %2476 = vmatpush1.bf16.msra.mxu0 %v1864
    %2477 = vmatprep.subr.bf16.mxu0 %v1873
    %2478 = vmatpush1.bf16.msra.mxu0 %v1872
    %2479 = vmatprep.subr.bf16.mxu0 %v1881
    %2480 = vmatpush1.bf16.msra.mxu0 %v1880
    %2481 = vmatprep.subr.bf16.mxu0 %v1889
    %2482 = vmatpush1.bf16.msra.mxu0 %v1888
    %2483 = vmatprep.subr.bf16.mxu0 %v1897
    %2484 = vmatpush1.bf16.msra.mxu0 %v1896
    %2485 = vmatprep.subr.bf16.mxu0 %v1905
    %2486 = vmatpush1.bf16.msra.mxu0 %v1904
    %2487 = vmatprep.subr.bf16.mxu0 %v1913
    %2488 = vmatpush1.bf16.msra.mxu0 %v1912
    %2489 = vmatprep.mubr.bf16.mxu0 %v591
    %2490 = vmatmul.mubr.bf16.gmra.mrb[0].mxu0 %v590
    %v2491 = vpop.f32.mrb[0].mxu0
    %v2492 = vadd.f32 %v2451, %v2491
    %v2493 = vpop.f32.mrb[0].mxu0
    %v2494 = vadd.f32 %v2453, %v2493
    %v2495 = vpop.f32.mrb[0].mxu0
    %v2496 = vpop.f32.mrb[0].mxu0
    %2497 = vdwg.mxu0
    %v2498 = vmax.f32 %v2246, 0.0
    %v2499 = vmax.f32 %v2248, 0.0
    %v2500 = vmax.f32 %v2328, 0.0
    %v2501 = vmax.f32 %v2330, 0.0
    %v2502 = vmax.f32 %v2410, 0.0
    %v2503 = vmax.f32 %v2412, 0.0
    %v2504 = vmax.f32 %v2492, 0.0
    %v2505 = vmax.f32 %v2494, 0.0
    %v2506 = vpack.c.bf16 %v2498, %v2498
    %v2507 = vpack.c.bf16 %v2499, %v2499
    %v2508 = vpack.c.bf16 %v2500, %v2500
    %v2509 = vpack.c.bf16 %v2501, %v2501
    %v2510 = vpack.c.bf16 %v2502, %v2502
    %v2511 = vpack.c.bf16 %v2503, %v2503
    %v2512 = vpack.c.bf16 %v2504, %v2504
    %v2513 = vpack.c.bf16 %v2505, %v2505
    %v2514 = vld [vmem:[#allocation6] sm:$0xff]
    %v2515 = vld [vmem:[#allocation6 + $0x8] sm:$0xff]
    %v2516 = vld [vmem:[#allocation6 + $0x10] sm:$0xff]
    %v2517 = vld [vmem:[#allocation6 + $0x18] sm:$0xff]
    %v2518 = vld [vmem:[#allocation6 + $0x20] sm:$0xff]
    %v2519 = vld [vmem:[#allocation6 + $0x28] sm:$0xff]
    %v2520 = vld [vmem:[#allocation6 + $0x30] sm:$0xff]
    %v2521 = vld [vmem:[#allocation6 + $0x38] sm:$0xff]
    %v2522 = vld [vmem:[#allocation6 + $0x40] sm:$0xff]
    %v2523 = vld [vmem:[#allocation6 + $0x48] sm:$0xff]
    %v2524 = vld [vmem:[#allocation6 + $0x50] sm:$0xff]
    %v2525 = vld [vmem:[#allocation6 + $0x58] sm:$0xff]
    %v2526 = vld [vmem:[#allocation6 + $0x60] sm:$0xff]
    %v2527 = vld [vmem:[#allocation6 + $0x68] sm:$0xff]
    %v2528 = vld [vmem:[#allocation6 + $0x70] sm:$0xff]
    %v2529 = vld [vmem:[#allocation6 + $0x78] sm:$0xff]
    %v2530 = vld [vmem:[#allocation6 + $0x80] sm:$0xff]
    %v2531 = vld [vmem:[#allocation6 + $0x88] sm:$0xff]
    %v2532 = vld [vmem:[#allocation6 + $0x90] sm:$0xff]
    %v2533 = vld [vmem:[#allocation6 + $0x98] sm:$0xff]
    %v2534 = vld [vmem:[#allocation6 + $0xa0] sm:$0xff]
    %v2535 = vld [vmem:[#allocation6 + $0xa8] sm:$0xff]
    %v2536 = vld [vmem:[#allocation6 + $0xb0] sm:$0xff]
    %v2537 = vld [vmem:[#allocation6 + $0xb8] sm:$0xff]
    %v2538 = vld [vmem:[#allocation6 + $0xc0] sm:$0xff]
    %v2539 = vld [vmem:[#allocation6 + $0xc8] sm:$0xff]
    %v2540 = vld [vmem:[#allocation6 + $0xd0] sm:$0xff]
    %v2541 = vld [vmem:[#allocation6 + $0xd8] sm:$0xff]
    %v2542 = vld [vmem:[#allocation6 + $0xe0] sm:$0xff]
    %v2543 = vld [vmem:[#allocation6 + $0xe8] sm:$0xff]
    %v2544 = vld [vmem:[#allocation6 + $0xf0] sm:$0xff]
    %v2545 = vld [vmem:[#allocation6 + $0xf8] sm:$0xff]
    %v2546 = vld [vmem:[#allocation6 + $0x100] sm:$0xff]
    %v2547 = vld [vmem:[#allocation6 + $0x108] sm:$0xff]
    %v2548 = vld [vmem:[#allocation6 + $0x110] sm:$0xff]
    %v2549 = vld [vmem:[#allocation6 + $0x118] sm:$0xff]
    %v2550 = vld [vmem:[#allocation6 + $0x120] sm:$0xff]
    %v2551 = vld [vmem:[#allocation6 + $0x128] sm:$0xff]
    %v2552 = vld [vmem:[#allocation6 + $0x130] sm:$0xff]
    %v2553 = vld [vmem:[#allocation6 + $0x138] sm:$0xff]
    %v2554 = vld [vmem:[#allocation6 + $0x140] sm:$0xff]
    %v2555 = vld [vmem:[#allocation6 + $0x148] sm:$0xff]
    %v2556 = vld [vmem:[#allocation6 + $0x150] sm:$0xff]
    %v2557 = vld [vmem:[#allocation6 + $0x158] sm:$0xff]
    %v2558 = vld [vmem:[#allocation6 + $0x160] sm:$0xff]
    %v2559 = vld [vmem:[#allocation6 + $0x168] sm:$0xff]
    %v2560 = vld [vmem:[#allocation6 + $0x170] sm:$0xff]
    %v2561 = vld [vmem:[#allocation6 + $0x178] sm:$0xff]
    %v2562 = vld [vmem:[#allocation6 + $0x180] sm:$0xff]
    %v2563 = vld [vmem:[#allocation6 + $0x188] sm:$0xff]
    %v2564 = vld [vmem:[#allocation6 + $0x190] sm:$0xff]
    %v2565 = vld [vmem:[#allocation6 + $0x198] sm:$0xff]
    %v2566 = vld [vmem:[#allocation6 + $0x1a0] sm:$0xff]
    %v2567 = vld [vmem:[#allocation6 + $0x1a8] sm:$0xff]
    %v2568 = vld [vmem:[#allocation6 + $0x1b0] sm:$0xff]
    %v2569 = vld [vmem:[#allocation6 + $0x1b8] sm:$0xff]
    %v2570 = vld [vmem:[#allocation6 + $0x1c0] sm:$0xff]
    %v2571 = vld [vmem:[#allocation6 + $0x1c8] sm:$0xff]
    %v2572 = vld [vmem:[#allocation6 + $0x1d0] sm:$0xff]
    %v2573 = vld [vmem:[#allocation6 + $0x1d8] sm:$0xff]
    %v2574 = vld [vmem:[#allocation6 + $0x1e0] sm:$0xff]
    %v2575 = vld [vmem:[#allocation6 + $0x1e8] sm:$0xff]
    %v2576 = vld [vmem:[#allocation6 + $0x1f0] sm:$0xff]
    %v2577 = vld [vmem:[#allocation6 + $0x1f8] sm:$0xff]
    %v2578 = vld [vmem:[#allocation6 + $0x200] sm:$0xff]
    %v2579 = vld [vmem:[#allocation6 + $0x208] sm:$0xff]
    %v2580 = vld [vmem:[#allocation6 + $0x210] sm:$0xff]
    %v2581 = vld [vmem:[#allocation6 + $0x218] sm:$0xff]
    %v2582 = vld [vmem:[#allocation6 + $0x220] sm:$0xff]
    %v2583 = vld [vmem:[#allocation6 + $0x228] sm:$0xff]
    %v2584 = vld [vmem:[#allocation6 + $0x230] sm:$0xff]
    %v2585 = vld [vmem:[#allocation6 + $0x238] sm:$0xff]
    %v2586 = vld [vmem:[#allocation6 + $0x240] sm:$0xff]
    %v2587 = vld [vmem:[#allocation6 + $0x248] sm:$0xff]
    %v2588 = vld [vmem:[#allocation6 + $0x250] sm:$0xff]
    %v2589 = vld [vmem:[#allocation6 + $0x258] sm:$0xff]
    %v2590 = vld [vmem:[#allocation6 + $0x260] sm:$0xff]
    %v2591 = vld [vmem:[#allocation6 + $0x268] sm:$0xff]
    %v2592 = vld [vmem:[#allocation6 + $0x270] sm:$0xff]
    %v2593 = vld [vmem:[#allocation6 + $0x278] sm:$0xff]
    %v2594 = vld [vmem:[#allocation6 + $0x280] sm:$0xff]
    %v2595 = vld [vmem:[#allocation6 + $0x288] sm:$0xff]
    %v2596 = vld [vmem:[#allocation6 + $0x290] sm:$0xff]
    %v2597 = vld [vmem:[#allocation6 + $0x298] sm:$0xff]
    %v2598 = vld [vmem:[#allocation6 + $0x2a0] sm:$0xff]
    %v2599 = vld [vmem:[#allocation6 + $0x2a8] sm:$0xff]
    %v2600 = vld [vmem:[#allocation6 + $0x2b0] sm:$0xff]
    %v2601 = vld [vmem:[#allocation6 + $0x2b8] sm:$0xff]
    %v2602 = vld [vmem:[#allocation6 + $0x2c0] sm:$0xff]
    %v2603 = vld [vmem:[#allocation6 + $0x2c8] sm:$0xff]
    %v2604 = vld [vmem:[#allocation6 + $0x2d0] sm:$0xff]
    %v2605 = vld [vmem:[#allocation6 + $0x2d8] sm:$0xff]
    %v2606 = vld [vmem:[#allocation6 + $0x2e0] sm:$0xff]
    %v2607 = vld [vmem:[#allocation6 + $0x2e8] sm:$0xff]
    %v2608 = vld [vmem:[#allocation6 + $0x2f0] sm:$0xff]
    %v2609 = vld [vmem:[#allocation6 + $0x2f8] sm:$0xff]
    %v2610 = vld [vmem:[#allocation6 + $0x300] sm:$0xff]
    %v2611 = vld [vmem:[#allocation6 + $0x308] sm:$0xff]
    %v2612 = vld [vmem:[#allocation6 + $0x310] sm:$0xff]
    %v2613 = vld [vmem:[#allocation6 + $0x318] sm:$0xff]
    %v2614 = vld [vmem:[#allocation6 + $0x320] sm:$0xff]
    %v2615 = vld [vmem:[#allocation6 + $0x328] sm:$0xff]
    %v2616 = vld [vmem:[#allocation6 + $0x330] sm:$0xff]
    %v2617 = vld [vmem:[#allocation6 + $0x338] sm:$0xff]
    %v2618 = vld [vmem:[#allocation6 + $0x340] sm:$0xff]
    %v2619 = vld [vmem:[#allocation6 + $0x348] sm:$0xff]
    %v2620 = vld [vmem:[#allocation6 + $0x350] sm:$0xff]
    %v2621 = vld [vmem:[#allocation6 + $0x358] sm:$0xff]
    %v2622 = vld [vmem:[#allocation6 + $0x360] sm:$0xff]
    %v2623 = vld [vmem:[#allocation6 + $0x368] sm:$0xff]
    %v2624 = vld [vmem:[#allocation6 + $0x370] sm:$0xff]
    %v2625 = vld [vmem:[#allocation6 + $0x378] sm:$0xff]
    %v2626 = vld [vmem:[#allocation6 + $0x380] sm:$0xff]
    %v2627 = vld [vmem:[#allocation6 + $0x388] sm:$0xff]
    %v2628 = vld [vmem:[#allocation6 + $0x390] sm:$0xff]
    %v2629 = vld [vmem:[#allocation6 + $0x398] sm:$0xff]
    %v2630 = vld [vmem:[#allocation6 + $0x3a0] sm:$0xff]
    %v2631 = vld [vmem:[#allocation6 + $0x3a8] sm:$0xff]
    %v2632 = vld [vmem:[#allocation6 + $0x3b0] sm:$0xff]
    %v2633 = vld [vmem:[#allocation6 + $0x3b8] sm:$0xff]
    %v2634 = vld [vmem:[#allocation6 + $0x3c0] sm:$0xff]
    %v2635 = vld [vmem:[#allocation6 + $0x3c8] sm:$0xff]
    %v2636 = vld [vmem:[#allocation6 + $0x3d0] sm:$0xff]
    %v2637 = vld [vmem:[#allocation6 + $0x3d8] sm:$0xff]
    %v2638 = vld [vmem:[#allocation6 + $0x3e0] sm:$0xff]
    %v2639 = vld [vmem:[#allocation6 + $0x3e8] sm:$0xff]
    %v2640 = vld [vmem:[#allocation6 + $0x3f0] sm:$0xff]
    %v2641 = vld [vmem:[#allocation6 + $0x3f8] sm:$0xff]
    %v2642 = vld [vmem:[#allocation6 + $0x400] sm:$0xff]
    %v2643 = vld [vmem:[#allocation6 + $0x408] sm:$0xff]
    %v2644 = vld [vmem:[#allocation6 + $0x410] sm:$0xff]
    %v2645 = vld [vmem:[#allocation6 + $0x418] sm:$0xff]
    %v2646 = vld [vmem:[#allocation6 + $0x420] sm:$0xff]
    %v2647 = vld [vmem:[#allocation6 + $0x428] sm:$0xff]
    %v2648 = vld [vmem:[#allocation6 + $0x430] sm:$0xff]
    %v2649 = vld [vmem:[#allocation6 + $0x438] sm:$0xff]
    %v2650 = vld [vmem:[#allocation6 + $0x440] sm:$0xff]
    %v2651 = vld [vmem:[#allocation6 + $0x448] sm:$0xff]
    %v2652 = vld [vmem:[#allocation6 + $0x450] sm:$0xff]
    %v2653 = vld [vmem:[#allocation6 + $0x458] sm:$0xff]
    %v2654 = vld [vmem:[#allocation6 + $0x460] sm:$0xff]
    %v2655 = vld [vmem:[#allocation6 + $0x468] sm:$0xff]
    %v2656 = vld [vmem:[#allocation6 + $0x470] sm:$0xff]
    %v2657 = vld [vmem:[#allocation6 + $0x478] sm:$0xff]
    %v2658 = vld [vmem:[#allocation6 + $0x480] sm:$0xff]
    %v2659 = vld [vmem:[#allocation6 + $0x488] sm:$0xff]
    %v2660 = vld [vmem:[#allocation6 + $0x490] sm:$0xff]
    %v2661 = vld [vmem:[#allocation6 + $0x498] sm:$0xff]
    %v2662 = vld [vmem:[#allocation6 + $0x4a0] sm:$0xff]
    %v2663 = vld [vmem:[#allocation6 + $0x4a8] sm:$0xff]
    %v2664 = vld [vmem:[#allocation6 + $0x4b0] sm:$0xff]
    %v2665 = vld [vmem:[#allocation6 + $0x4b8] sm:$0xff]
    %v2666 = vld [vmem:[#allocation6 + $0x4c0] sm:$0xff]
    %v2667 = vld [vmem:[#allocation6 + $0x4c8] sm:$0xff]
    %v2668 = vld [vmem:[#allocation6 + $0x4d0] sm:$0xff]
    %v2669 = vld [vmem:[#allocation6 + $0x4d8] sm:$0xff]
    %v2670 = vld [vmem:[#allocation6 + $0x4e0] sm:$0xff]
    %v2671 = vld [vmem:[#allocation6 + $0x4e8] sm:$0xff]
    %v2672 = vld [vmem:[#allocation6 + $0x4f0] sm:$0xff]
    %v2673 = vld [vmem:[#allocation6 + $0x4f8] sm:$0xff]
    %v2674 = vld [vmem:[#allocation6 + $0x500] sm:$0xff]
    %v2675 = vld [vmem:[#allocation6 + $0x508] sm:$0xff]
    %v2676 = vld [vmem:[#allocation6 + $0x510] sm:$0xff]
    %v2677 = vld [vmem:[#allocation6 + $0x518] sm:$0xff]
    %v2678 = vld [vmem:[#allocation6 + $0x520] sm:$0xff]
    %v2679 = vld [vmem:[#allocation6 + $0x528] sm:$0xff]
    %v2680 = vld [vmem:[#allocation6 + $0x530] sm:$0xff]
    %v2681 = vld [vmem:[#allocation6 + $0x538] sm:$0xff]
    %v2682 = vld [vmem:[#allocation6 + $0x540] sm:$0xff]
    %v2683 = vld [vmem:[#allocation6 + $0x548] sm:$0xff]
    %v2684 = vld [vmem:[#allocation6 + $0x550] sm:$0xff]
    %v2685 = vld [vmem:[#allocation6 + $0x558] sm:$0xff]
    %v2686 = vld [vmem:[#allocation6 + $0x560] sm:$0xff]
    %v2687 = vld [vmem:[#allocation6 + $0x568] sm:$0xff]
    %v2688 = vld [vmem:[#allocation6 + $0x570] sm:$0xff]
    %v2689 = vld [vmem:[#allocation6 + $0x578] sm:$0xff]
    %v2690 = vld [vmem:[#allocation6 + $0x580] sm:$0xff]
    %v2691 = vld [vmem:[#allocation6 + $0x588] sm:$0xff]
    %v2692 = vld [vmem:[#allocation6 + $0x590] sm:$0xff]
    %v2693 = vld [vmem:[#allocation6 + $0x598] sm:$0xff]
    %v2694 = vld [vmem:[#allocation6 + $0x5a0] sm:$0xff]
    %v2695 = vld [vmem:[#allocation6 + $0x5a8] sm:$0xff]
    %v2696 = vld [vmem:[#allocation6 + $0x5b0] sm:$0xff]
    %v2697 = vld [vmem:[#allocation6 + $0x5b8] sm:$0xff]
    %v2698 = vld [vmem:[#allocation6 + $0x5c0] sm:$0xff]
    %v2699 = vld [vmem:[#allocation6 + $0x5c8] sm:$0xff]
    %v2700 = vld [vmem:[#allocation6 + $0x5d0] sm:$0xff]
    %v2701 = vld [vmem:[#allocation6 + $0x5d8] sm:$0xff]
    %v2702 = vld [vmem:[#allocation6 + $0x5e0] sm:$0xff]
    %v2703 = vld [vmem:[#allocation6 + $0x5e8] sm:$0xff]
    %v2704 = vld [vmem:[#allocation6 + $0x5f0] sm:$0xff]
    %v2705 = vld [vmem:[#allocation6 + $0x5f8] sm:$0xff]
    %v2706 = vld [vmem:[#allocation6 + $0x600] sm:$0xff]
    %v2707 = vld [vmem:[#allocation6 + $0x608] sm:$0xff]
    %v2708 = vld [vmem:[#allocation6 + $0x610] sm:$0xff]
    %v2709 = vld [vmem:[#allocation6 + $0x618] sm:$0xff]
    %v2710 = vld [vmem:[#allocation6 + $0x620] sm:$0xff]
    %v2711 = vld [vmem:[#allocation6 + $0x628] sm:$0xff]
    %v2712 = vld [vmem:[#allocation6 + $0x630] sm:$0xff]
    %v2713 = vld [vmem:[#allocation6 + $0x638] sm:$0xff]
    %v2714 = vld [vmem:[#allocation6 + $0x640] sm:$0xff]
    %v2715 = vld [vmem:[#allocation6 + $0x648] sm:$0xff]
    %v2716 = vld [vmem:[#allocation6 + $0x650] sm:$0xff]
    %v2717 = vld [vmem:[#allocation6 + $0x658] sm:$0xff]
    %v2718 = vld [vmem:[#allocation6 + $0x660] sm:$0xff]
    %v2719 = vld [vmem:[#allocation6 + $0x668] sm:$0xff]
    %v2720 = vld [vmem:[#allocation6 + $0x670] sm:$0xff]
    %v2721 = vld [vmem:[#allocation6 + $0x678] sm:$0xff]
    %v2722 = vld [vmem:[#allocation6 + $0x680] sm:$0xff]
    %v2723 = vld [vmem:[#allocation6 + $0x688] sm:$0xff]
    %v2724 = vld [vmem:[#allocation6 + $0x690] sm:$0xff]
    %v2725 = vld [vmem:[#allocation6 + $0x698] sm:$0xff]
    %v2726 = vld [vmem:[#allocation6 + $0x6a0] sm:$0xff]
    %v2727 = vld [vmem:[#allocation6 + $0x6a8] sm:$0xff]
    %v2728 = vld [vmem:[#allocation6 + $0x6b0] sm:$0xff]
    %v2729 = vld [vmem:[#allocation6 + $0x6b8] sm:$0xff]
    %v2730 = vld [vmem:[#allocation6 + $0x6c0] sm:$0xff]
    %v2731 = vld [vmem:[#allocation6 + $0x6c8] sm:$0xff]
    %v2732 = vld [vmem:[#allocation6 + $0x6d0] sm:$0xff]
    %v2733 = vld [vmem:[#allocation6 + $0x6d8] sm:$0xff]
    %v2734 = vld [vmem:[#allocation6 + $0x6e0] sm:$0xff]
    %v2735 = vld [vmem:[#allocation6 + $0x6e8] sm:$0xff]
    %v2736 = vld [vmem:[#allocation6 + $0x6f0] sm:$0xff]
    %v2737 = vld [vmem:[#allocation6 + $0x6f8] sm:$0xff]
    %v2738 = vld [vmem:[#allocation6 + $0x700] sm:$0xff]
    %v2739 = vld [vmem:[#allocation6 + $0x708] sm:$0xff]
    %v2740 = vld [vmem:[#allocation6 + $0x710] sm:$0xff]
    %v2741 = vld [vmem:[#allocation6 + $0x718] sm:$0xff]
    %v2742 = vld [vmem:[#allocation6 + $0x720] sm:$0xff]
    %v2743 = vld [vmem:[#allocation6 + $0x728] sm:$0xff]
    %v2744 = vld [vmem:[#allocation6 + $0x730] sm:$0xff]
    %v2745 = vld [vmem:[#allocation6 + $0x738] sm:$0xff]
    %v2746 = vld [vmem:[#allocation6 + $0x740] sm:$0xff]
    %v2747 = vld [vmem:[#allocation6 + $0x748] sm:$0xff]
    %v2748 = vld [vmem:[#allocation6 + $0x750] sm:$0xff]
    %v2749 = vld [vmem:[#allocation6 + $0x758] sm:$0xff]
    %v2750 = vld [vmem:[#allocation6 + $0x760] sm:$0xff]
    %v2751 = vld [vmem:[#allocation6 + $0x768] sm:$0xff]
    %v2752 = vld [vmem:[#allocation6 + $0x770] sm:$0xff]
    %v2753 = vld [vmem:[#allocation6 + $0x778] sm:$0xff]
    %v2754 = vld [vmem:[#allocation6 + $0x780] sm:$0xff]
    %v2755 = vld [vmem:[#allocation6 + $0x788] sm:$0xff]
    %v2756 = vld [vmem:[#allocation6 + $0x790] sm:$0xff]
    %v2757 = vld [vmem:[#allocation6 + $0x798] sm:$0xff]
    %v2758 = vld [vmem:[#allocation6 + $0x7a0] sm:$0xff]
    %v2759 = vld [vmem:[#allocation6 + $0x7a8] sm:$0xff]
    %v2760 = vld [vmem:[#allocation6 + $0x7b0] sm:$0xff]
    %v2761 = vld [vmem:[#allocation6 + $0x7b8] sm:$0xff]
    %v2762 = vld [vmem:[#allocation6 + $0x7c0] sm:$0xff]
    %v2763 = vld [vmem:[#allocation6 + $0x7c8] sm:$0xff]
    %v2764 = vld [vmem:[#allocation6 + $0x7d0] sm:$0xff]
    %v2765 = vld [vmem:[#allocation6 + $0x7d8] sm:$0xff]
    %v2766 = vld [vmem:[#allocation6 + $0x7e0] sm:$0xff]
    %v2767 = vld [vmem:[#allocation6 + $0x7e8] sm:$0xff]
    %v2768 = vld [vmem:[#allocation6 + $0x7f0] sm:$0xff]
    %v2769 = vld [vmem:[#allocation6 + $0x7f8] sm:$0xff]
    %v2770 = vld [vmem:[%s6] sm:$0xf]
    %v2772 = vlaneseq
    %v2773 = vshrl.u32 %v2772, 7
    %v2774 = vsub.s32 0, %v2773
    %v2775 = vrot.slane %v2770, %v2774
    %v2776 = vlaneseq
    %v2777 = vshrl.u32 %v2776, 7
    %v2778 = vsub.s32 1, %v2777
    %v2779 = vrot.slane %v2770, %v2778
    %v2780 = vlaneseq
    %v2781 = vshrl.u32 %v2780, 7
    %v2782 = vsub.s32 2, %v2781
    %v2783 = vrot.slane %v2770, %v2782
    %v2784 = vlaneseq
    %v2785 = vshrl.u32 %v2784, 7
    %v2786 = vsub.s32 3, %v2785
    %v2787 = vrot.slane %v2770, %v2786
    %v3048 = vunpack.c.l.b16 %v2514
    %v3049 = vunpack.c.h.b16 %v2514
    %v3050 = vunpack.c.l.b16 %v2515
    %v3051 = vunpack.c.h.b16 %v2515
    %v3052 = vunpack.c.l.b16 %v2516
    %v3053 = vunpack.c.h.b16 %v2516
    %v3054 = vunpack.c.l.b16 %v2517
    %v3055 = vunpack.c.h.b16 %v2517
    %v3056 = vunpack.c.l.b16 %v2518
    %v3057 = vunpack.c.h.b16 %v2518
    %v3058 = vunpack.c.l.b16 %v2519
    %v3059 = vunpack.c.h.b16 %v2519
    %v3060 = vunpack.c.l.b16 %v2520
    %v3061 = vunpack.c.h.b16 %v2520
    %v3062 = vunpack.c.l.b16 %v2521
    %v3063 = vunpack.c.h.b16 %v2521
    %v3064 = vunpack.c.l.b16 %v2522
    %v3065 = vunpack.c.h.b16 %v2522
    %v3066 = vunpack.c.l.b16 %v2523
    %v3067 = vunpack.c.h.b16 %v2523
    %v3068 = vunpack.c.l.b16 %v2524
    %v3069 = vunpack.c.h.b16 %v2524
    %v3070 = vunpack.c.l.b16 %v2525
    %v3071 = vunpack.c.h.b16 %v2525
    %v3072 = vunpack.c.l.b16 %v2526
    %v3073 = vunpack.c.h.b16 %v2526
    %v3074 = vunpack.c.l.b16 %v2527
    %v3075 = vunpack.c.h.b16 %v2527
    %v3076 = vunpack.c.l.b16 %v2528
    %v3077 = vunpack.c.h.b16 %v2528
    %v3078 = vunpack.c.l.b16 %v2529
    %v3079 = vunpack.c.h.b16 %v2529
    %v3080 = vunpack.c.l.b16 %v2530
    %v3081 = vunpack.c.h.b16 %v2530
    %v3082 = vunpack.c.l.b16 %v2531
    %v3083 = vunpack.c.h.b16 %v2531
    %v3084 = vunpack.c.l.b16 %v2532
    %v3085 = vunpack.c.h.b16 %v2532
    %v3086 = vunpack.c.l.b16 %v2533
    %v3087 = vunpack.c.h.b16 %v2533
    %v3088 = vunpack.c.l.b16 %v2534
    %v3089 = vunpack.c.h.b16 %v2534
    %v3090 = vunpack.c.l.b16 %v2535
    %v3091 = vunpack.c.h.b16 %v2535
    %v3092 = vunpack.c.l.b16 %v2536
    %v3093 = vunpack.c.h.b16 %v2536
    %v3094 = vunpack.c.l.b16 %v2537
    %v3095 = vunpack.c.h.b16 %v2537
    %v3096 = vunpack.c.l.b16 %v2538
    %v3097 = vunpack.c.h.b16 %v2538
    %v3098 = vunpack.c.l.b16 %v2539
    %v3099 = vunpack.c.h.b16 %v2539
    %v3100 = vunpack.c.l.b16 %v2540
    %v3101 = vunpack.c.h.b16 %v2540
    %v3102 = vunpack.c.l.b16 %v2541
    %v3103 = vunpack.c.h.b16 %v2541
    %v3104 = vunpack.c.l.b16 %v2542
    %v3105 = vunpack.c.h.b16 %v2542
    %v3106 = vunpack.c.l.b16 %v2543
    %v3107 = vunpack.c.h.b16 %v2543
    %v3108 = vunpack.c.l.b16 %v2544
    %v3109 = vunpack.c.h.b16 %v2544
    %v3110 = vunpack.c.l.b16 %v2545
    %v3111 = vunpack.c.h.b16 %v2545
    %v3112 = vunpack.c.l.b16 %v2546
    %v3113 = vunpack.c.h.b16 %v2546
    %v3114 = vunpack.c.l.b16 %v2547
    %v3115 = vunpack.c.h.b16 %v2547
    %v3116 = vunpack.c.l.b16 %v2548
    %v3117 = vunpack.c.h.b16 %v2548
    %v3118 = vunpack.c.l.b16 %v2549
    %v3119 = vunpack.c.h.b16 %v2549
    %v3120 = vunpack.c.l.b16 %v2550
    %v3121 = vunpack.c.h.b16 %v2550
    %v3122 = vunpack.c.l.b16 %v2551
    %v3123 = vunpack.c.h.b16 %v2551
    %v3124 = vunpack.c.l.b16 %v2552
    %v3125 = vunpack.c.h.b16 %v2552
    %v3126 = vunpack.c.l.b16 %v2553
    %v3127 = vunpack.c.h.b16 %v2553
    %v3128 = vunpack.c.l.b16 %v2554
    %v3129 = vunpack.c.h.b16 %v2554
    %v3130 = vunpack.c.l.b16 %v2555
    %v3131 = vunpack.c.h.b16 %v2555
    %v3132 = vunpack.c.l.b16 %v2556
    %v3133 = vunpack.c.h.b16 %v2556
    %v3134 = vunpack.c.l.b16 %v2557
    %v3135 = vunpack.c.h.b16 %v2557
    %v3136 = vunpack.c.l.b16 %v2558
    %v3137 = vunpack.c.h.b16 %v2558
    %v3138 = vunpack.c.l.b16 %v2559
    %v3139 = vunpack.c.h.b16 %v2559
    %v3140 = vunpack.c.l.b16 %v2560
    %v3141 = vunpack.c.h.b16 %v2560
    %v3142 = vunpack.c.l.b16 %v2561
    %v3143 = vunpack.c.h.b16 %v2561
    %v3144 = vunpack.c.l.b16 %v2562
    %v3145 = vunpack.c.h.b16 %v2562
    %v3146 = vunpack.c.l.b16 %v2563
    %v3147 = vunpack.c.h.b16 %v2563
    %v3148 = vunpack.c.l.b16 %v2564
    %v3149 = vunpack.c.h.b16 %v2564
    %v3150 = vunpack.c.l.b16 %v2565
    %v3151 = vunpack.c.h.b16 %v2565
    %v3152 = vunpack.c.l.b16 %v2566
    %v3153 = vunpack.c.h.b16 %v2566
    %v3154 = vunpack.c.l.b16 %v2567
    %v3155 = vunpack.c.h.b16 %v2567
    %v3156 = vunpack.c.l.b16 %v2568
    %v3157 = vunpack.c.h.b16 %v2568
    %v3158 = vunpack.c.l.b16 %v2569
    %v3159 = vunpack.c.h.b16 %v2569
    %v3160 = vunpack.c.l.b16 %v2570
    %v3161 = vunpack.c.h.b16 %v2570
    %v3162 = vunpack.c.l.b16 %v2571
    %v3163 = vunpack.c.h.b16 %v2571
    %v3164 = vunpack.c.l.b16 %v2572
    %v3165 = vunpack.c.h.b16 %v2572
    %v3166 = vunpack.c.l.b16 %v2573
    %v3167 = vunpack.c.h.b16 %v2573
    %v3168 = vunpack.c.l.b16 %v2574
    %v3169 = vunpack.c.h.b16 %v2574
    %v3170 = vunpack.c.l.b16 %v2575
    %v3171 = vunpack.c.h.b16 %v2575
    %v3172 = vunpack.c.l.b16 %v2576
    %v3173 = vunpack.c.h.b16 %v2576
    %v3174 = vunpack.c.l.b16 %v2577
    %v3175 = vunpack.c.h.b16 %v2577
    %v3176 = vunpack.c.l.b16 %v2578
    %v3177 = vunpack.c.h.b16 %v2578
    %v3178 = vunpack.c.l.b16 %v2579
    %v3179 = vunpack.c.h.b16 %v2579
    %v3180 = vunpack.c.l.b16 %v2580
    %v3181 = vunpack.c.h.b16 %v2580
    %v3182 = vunpack.c.l.b16 %v2581
    %v3183 = vunpack.c.h.b16 %v2581
    %v3184 = vunpack.c.l.b16 %v2582
    %v3185 = vunpack.c.h.b16 %v2582
    %v3186 = vunpack.c.l.b16 %v2583
    %v3187 = vunpack.c.h.b16 %v2583
    %v3188 = vunpack.c.l.b16 %v2584
    %v3189 = vunpack.c.h.b16 %v2584
    %v3190 = vunpack.c.l.b16 %v2585
    %v3191 = vunpack.c.h.b16 %v2585
    %v3192 = vunpack.c.l.b16 %v2586
    %v3193 = vunpack.c.h.b16 %v2586
    %v3194 = vunpack.c.l.b16 %v2587
    %v3195 = vunpack.c.h.b16 %v2587
    %v3196 = vunpack.c.l.b16 %v2588
    %v3197 = vunpack.c.h.b16 %v2588
    %v3198 = vunpack.c.l.b16 %v2589
    %v3199 = vunpack.c.h.b16 %v2589
    %v3200 = vunpack.c.l.b16 %v2590
    %v3201 = vunpack.c.h.b16 %v2590
    %v3202 = vunpack.c.l.b16 %v2591
    %v3203 = vunpack.c.h.b16 %v2591
    %v3204 = vunpack.c.l.b16 %v2592
    %v3205 = vunpack.c.h.b16 %v2592
    %v3206 = vunpack.c.l.b16 %v2593
    %v3207 = vunpack.c.h.b16 %v2593
    %v3208 = vunpack.c.l.b16 %v2594
    %v3209 = vunpack.c.h.b16 %v2594
    %v3210 = vunpack.c.l.b16 %v2595
    %v3211 = vunpack.c.h.b16 %v2595
    %v3212 = vunpack.c.l.b16 %v2596
    %v3213 = vunpack.c.h.b16 %v2596
    %v3214 = vunpack.c.l.b16 %v2597
    %v3215 = vunpack.c.h.b16 %v2597
    %v3216 = vunpack.c.l.b16 %v2598
    %v3217 = vunpack.c.h.b16 %v2598
    %v3218 = vunpack.c.l.b16 %v2599
    %v3219 = vunpack.c.h.b16 %v2599
    %v3220 = vunpack.c.l.b16 %v2600
    %v3221 = vunpack.c.h.b16 %v2600
    %v3222 = vunpack.c.l.b16 %v2601
    %v3223 = vunpack.c.h.b16 %v2601
    %v3224 = vunpack.c.l.b16 %v2602
    %v3225 = vunpack.c.h.b16 %v2602
    %v3226 = vunpack.c.l.b16 %v2603
    %v3227 = vunpack.c.h.b16 %v2603
    %v3228 = vunpack.c.l.b16 %v2604
    %v3229 = vunpack.c.h.b16 %v2604
    %v3230 = vunpack.c.l.b16 %v2605
    %v3231 = vunpack.c.h.b16 %v2605
    %v3232 = vunpack.c.l.b16 %v2606
    %v3233 = vunpack.c.h.b16 %v2606
    %v3234 = vunpack.c.l.b16 %v2607
    %v3235 = vunpack.c.h.b16 %v2607
    %v3236 = vunpack.c.l.b16 %v2608
    %v3237 = vunpack.c.h.b16 %v2608
    %v3238 = vunpack.c.l.b16 %v2609
    %v3239 = vunpack.c.h.b16 %v2609
    %v3240 = vunpack.c.l.b16 %v2610
    %v3241 = vunpack.c.h.b16 %v2610
    %v3242 = vunpack.c.l.b16 %v2611
    %v3243 = vunpack.c.h.b16 %v2611
    %v3244 = vunpack.c.l.b16 %v2612
    %v3245 = vunpack.c.h.b16 %v2612
    %v3246 = vunpack.c.l.b16 %v2613
    %v3247 = vunpack.c.h.b16 %v2613
    %v3248 = vunpack.c.l.b16 %v2614
    %v3249 = vunpack.c.h.b16 %v2614
    %v3250 = vunpack.c.l.b16 %v2615
    %v3251 = vunpack.c.h.b16 %v2615
    %v3252 = vunpack.c.l.b16 %v2616
    %v3253 = vunpack.c.h.b16 %v2616
    %v3254 = vunpack.c.l.b16 %v2617
    %v3255 = vunpack.c.h.b16 %v2617
    %v3256 = vunpack.c.l.b16 %v2618
    %v3257 = vunpack.c.h.b16 %v2618
    %v3258 = vunpack.c.l.b16 %v2619
    %v3259 = vunpack.c.h.b16 %v2619
    %v3260 = vunpack.c.l.b16 %v2620
    %v3261 = vunpack.c.h.b16 %v2620
    %v3262 = vunpack.c.l.b16 %v2621
    %v3263 = vunpack.c.h.b16 %v2621
    %v3264 = vunpack.c.l.b16 %v2622
    %v3265 = vunpack.c.h.b16 %v2622
    %v3266 = vunpack.c.l.b16 %v2623
    %v3267 = vunpack.c.h.b16 %v2623
    %v3268 = vunpack.c.l.b16 %v2624
    %v3269 = vunpack.c.h.b16 %v2624
    %v3270 = vunpack.c.l.b16 %v2625
    %v3271 = vunpack.c.h.b16 %v2625
    %v3272 = vunpack.c.l.b16 %v2626
    %v3273 = vunpack.c.h.b16 %v2626
    %v3274 = vunpack.c.l.b16 %v2627
    %v3275 = vunpack.c.h.b16 %v2627
    %v3276 = vunpack.c.l.b16 %v2628
    %v3277 = vunpack.c.h.b16 %v2628
    %v3278 = vunpack.c.l.b16 %v2629
    %v3279 = vunpack.c.h.b16 %v2629
    %v3280 = vunpack.c.l.b16 %v2630
    %v3281 = vunpack.c.h.b16 %v2630
    %v3282 = vunpack.c.l.b16 %v2631
    %v3283 = vunpack.c.h.b16 %v2631
    %v3284 = vunpack.c.l.b16 %v2632
    %v3285 = vunpack.c.h.b16 %v2632
    %v3286 = vunpack.c.l.b16 %v2633
    %v3287 = vunpack.c.h.b16 %v2633
    %v3288 = vunpack.c.l.b16 %v2634
    %v3289 = vunpack.c.h.b16 %v2634
    %v3290 = vunpack.c.l.b16 %v2635
    %v3291 = vunpack.c.h.b16 %v2635
    %v3292 = vunpack.c.l.b16 %v2636
    %v3293 = vunpack.c.h.b16 %v2636
    %v3294 = vunpack.c.l.b16 %v2637
    %v3295 = vunpack.c.h.b16 %v2637
    %v3296 = vunpack.c.l.b16 %v2638
    %v3297 = vunpack.c.h.b16 %v2638
    %v3298 = vunpack.c.l.b16 %v2639
    %v3299 = vunpack.c.h.b16 %v2639
    %v3300 = vunpack.c.l.b16 %v2640
    %v3301 = vunpack.c.h.b16 %v2640
    %v3302 = vunpack.c.l.b16 %v2641
    %v3303 = vunpack.c.h.b16 %v2641
    %v3304 = vunpack.c.l.b16 %v2642
    %v3305 = vunpack.c.h.b16 %v2642
    %v3306 = vunpack.c.l.b16 %v2643
    %v3307 = vunpack.c.h.b16 %v2643
    %v3308 = vunpack.c.l.b16 %v2644
    %v3309 = vunpack.c.h.b16 %v2644
    %v3310 = vunpack.c.l.b16 %v2645
    %v3311 = vunpack.c.h.b16 %v2645
    %v3312 = vunpack.c.l.b16 %v2646
    %v3313 = vunpack.c.h.b16 %v2646
    %v3314 = vunpack.c.l.b16 %v2647
    %v3315 = vunpack.c.h.b16 %v2647
    %v3316 = vunpack.c.l.b16 %v2648
    %v3317 = vunpack.c.h.b16 %v2648
    %v3318 = vunpack.c.l.b16 %v2649
    %v3319 = vunpack.c.h.b16 %v2649
    %v3320 = vunpack.c.l.b16 %v2650
    %v3321 = vunpack.c.h.b16 %v2650
    %v3322 = vunpack.c.l.b16 %v2651
    %v3323 = vunpack.c.h.b16 %v2651
    %v3324 = vunpack.c.l.b16 %v2652
    %v3325 = vunpack.c.h.b16 %v2652
    %v3326 = vunpack.c.l.b16 %v2653
    %v3327 = vunpack.c.h.b16 %v2653
    %v3328 = vunpack.c.l.b16 %v2654
    %v3329 = vunpack.c.h.b16 %v2654
    %v3330 = vunpack.c.l.b16 %v2655
    %v3331 = vunpack.c.h.b16 %v2655
    %v3332 = vunpack.c.l.b16 %v2656
    %v3333 = vunpack.c.h.b16 %v2656
    %v3334 = vunpack.c.l.b16 %v2657
    %v3335 = vunpack.c.h.b16 %v2657
    %v3336 = vunpack.c.l.b16 %v2658
    %v3337 = vunpack.c.h.b16 %v2658
    %v3338 = vunpack.c.l.b16 %v2659
    %v3339 = vunpack.c.h.b16 %v2659
    %v3340 = vunpack.c.l.b16 %v2660
    %v3341 = vunpack.c.h.b16 %v2660
    %v3342 = vunpack.c.l.b16 %v2661
    %v3343 = vunpack.c.h.b16 %v2661
    %v3344 = vunpack.c.l.b16 %v2662
    %v3345 = vunpack.c.h.b16 %v2662
    %v3346 = vunpack.c.l.b16 %v2663
    %v3347 = vunpack.c.h.b16 %v2663
    %v3348 = vunpack.c.l.b16 %v2664
    %v3349 = vunpack.c.h.b16 %v2664
    %v3350 = vunpack.c.l.b16 %v2665
    %v3351 = vunpack.c.h.b16 %v2665
    %v3352 = vunpack.c.l.b16 %v2666
    %v3353 = vunpack.c.h.b16 %v2666
    %v3354 = vunpack.c.l.b16 %v2667
    %v3355 = vunpack.c.h.b16 %v2667
    %v3356 = vunpack.c.l.b16 %v2668
    %v3357 = vunpack.c.h.b16 %v2668
    %v3358 = vunpack.c.l.b16 %v2669
    %v3359 = vunpack.c.h.b16 %v2669
    %v3360 = vunpack.c.l.b16 %v2670
    %v3361 = vunpack.c.h.b16 %v2670
    %v3362 = vunpack.c.l.b16 %v2671
    %v3363 = vunpack.c.h.b16 %v2671
    %v3364 = vunpack.c.l.b16 %v2672
    %v3365 = vunpack.c.h.b16 %v2672
    %v3366 = vunpack.c.l.b16 %v2673
    %v3367 = vunpack.c.h.b16 %v2673
    %v3368 = vunpack.c.l.b16 %v2674
    %v3369 = vunpack.c.h.b16 %v2674
    %v3370 = vunpack.c.l.b16 %v2675
    %v3371 = vunpack.c.h.b16 %v2675
    %v3372 = vunpack.c.l.b16 %v2676
    %v3373 = vunpack.c.h.b16 %v2676
    %v3374 = vunpack.c.l.b16 %v2677
    %v3375 = vunpack.c.h.b16 %v2677
    %v3376 = vunpack.c.l.b16 %v2678
    %v3377 = vunpack.c.h.b16 %v2678
    %v3378 = vunpack.c.l.b16 %v2679
    %v3379 = vunpack.c.h.b16 %v2679
    %v3380 = vunpack.c.l.b16 %v2680
    %v3381 = vunpack.c.h.b16 %v2680
    %v3382 = vunpack.c.l.b16 %v2681
    %v3383 = vunpack.c.h.b16 %v2681
    %v3384 = vunpack.c.l.b16 %v2682
    %v3385 = vunpack.c.h.b16 %v2682
    %v3386 = vunpack.c.l.b16 %v2683
    %v3387 = vunpack.c.h.b16 %v2683
    %v3388 = vunpack.c.l.b16 %v2684
    %v3389 = vunpack.c.h.b16 %v2684
    %v3390 = vunpack.c.l.b16 %v2685
    %v3391 = vunpack.c.h.b16 %v2685
    %v3392 = vunpack.c.l.b16 %v2686
    %v3393 = vunpack.c.h.b16 %v2686
    %v3394 = vunpack.c.l.b16 %v2687
    %v3395 = vunpack.c.h.b16 %v2687
    %v3396 = vunpack.c.l.b16 %v2688
    %v3397 = vunpack.c.h.b16 %v2688
    %v3398 = vunpack.c.l.b16 %v2689
    %v3399 = vunpack.c.h.b16 %v2689
    %v3400 = vunpack.c.l.b16 %v2690
    %v3401 = vunpack.c.h.b16 %v2690
    %v3402 = vunpack.c.l.b16 %v2691
    %v3403 = vunpack.c.h.b16 %v2691
    %v3404 = vunpack.c.l.b16 %v2692
    %v3405 = vunpack.c.h.b16 %v2692
    %v3406 = vunpack.c.l.b16 %v2693
    %v3407 = vunpack.c.h.b16 %v2693
    %v3408 = vunpack.c.l.b16 %v2694
    %v3409 = vunpack.c.h.b16 %v2694
    %v3410 = vunpack.c.l.b16 %v2695
    %v3411 = vunpack.c.h.b16 %v2695
    %v3412 = vunpack.c.l.b16 %v2696
    %v3413 = vunpack.c.h.b16 %v2696
    %v3414 = vunpack.c.l.b16 %v2697
    %v3415 = vunpack.c.h.b16 %v2697
    %v3416 = vunpack.c.l.b16 %v2698
    %v3417 = vunpack.c.h.b16 %v2698
    %v3418 = vunpack.c.l.b16 %v2699
    %v3419 = vunpack.c.h.b16 %v2699
    %v3420 = vunpack.c.l.b16 %v2700
    %v3421 = vunpack.c.h.b16 %v2700
    %v3422 = vunpack.c.l.b16 %v2701
    %v3423 = vunpack.c.h.b16 %v2701
    %v3424 = vunpack.c.l.b16 %v2702
    %v3425 = vunpack.c.h.b16 %v2702
    %v3426 = vunpack.c.l.b16 %v2703
    %v3427 = vunpack.c.h.b16 %v2703
    %v3428 = vunpack.c.l.b16 %v2704
    %v3429 = vunpack.c.h.b16 %v2704
    %v3430 = vunpack.c.l.b16 %v2705
    %v3431 = vunpack.c.h.b16 %v2705
    %v3432 = vunpack.c.l.b16 %v2706
    %v3433 = vunpack.c.h.b16 %v2706
    %v3434 = vunpack.c.l.b16 %v2707
    %v3435 = vunpack.c.h.b16 %v2707
    %v3436 = vunpack.c.l.b16 %v2708
    %v3437 = vunpack.c.h.b16 %v2708
    %v3438 = vunpack.c.l.b16 %v2709
    %v3439 = vunpack.c.h.b16 %v2709
    %v3440 = vunpack.c.l.b16 %v2710
    %v3441 = vunpack.c.h.b16 %v2710
    %v3442 = vunpack.c.l.b16 %v2711
    %v3443 = vunpack.c.h.b16 %v2711
    %v3444 = vunpack.c.l.b16 %v2712
    %v3445 = vunpack.c.h.b16 %v2712
    %v3446 = vunpack.c.l.b16 %v2713
    %v3447 = vunpack.c.h.b16 %v2713
    %v3448 = vunpack.c.l.b16 %v2714
    %v3449 = vunpack.c.h.b16 %v2714
    %v3450 = vunpack.c.l.b16 %v2715
    %v3451 = vunpack.c.h.b16 %v2715
    %v3452 = vunpack.c.l.b16 %v2716
    %v3453 = vunpack.c.h.b16 %v2716
    %v3454 = vunpack.c.l.b16 %v2717
    %v3455 = vunpack.c.h.b16 %v2717
    %v3456 = vunpack.c.l.b16 %v2718
    %v3457 = vunpack.c.h.b16 %v2718
    %v3458 = vunpack.c.l.b16 %v2719
    %v3459 = vunpack.c.h.b16 %v2719
    %v3460 = vunpack.c.l.b16 %v2720
    %v3461 = vunpack.c.h.b16 %v2720
    %v3462 = vunpack.c.l.b16 %v2721
    %v3463 = vunpack.c.h.b16 %v2721
    %v3464 = vunpack.c.l.b16 %v2722
    %v3465 = vunpack.c.h.b16 %v2722
    %v3466 = vunpack.c.l.b16 %v2723
    %v3467 = vunpack.c.h.b16 %v2723
    %v3468 = vunpack.c.l.b16 %v2724
    %v3469 = vunpack.c.h.b16 %v2724
    %v3470 = vunpack.c.l.b16 %v2725
    %v3471 = vunpack.c.h.b16 %v2725
    %v3472 = vunpack.c.l.b16 %v2726
    %v3473 = vunpack.c.h.b16 %v2726
    %v3474 = vunpack.c.l.b16 %v2727
    %v3475 = vunpack.c.h.b16 %v2727
    %v3476 = vunpack.c.l.b16 %v2728
    %v3477 = vunpack.c.h.b16 %v2728
    %v3478 = vunpack.c.l.b16 %v2729
    %v3479 = vunpack.c.h.b16 %v2729
    %v3480 = vunpack.c.l.b16 %v2730
    %v3481 = vunpack.c.h.b16 %v2730
    %v3482 = vunpack.c.l.b16 %v2731
    %v3483 = vunpack.c.h.b16 %v2731
    %v3484 = vunpack.c.l.b16 %v2732
    %v3485 = vunpack.c.h.b16 %v2732
    %v3486 = vunpack.c.l.b16 %v2733
    %v3487 = vunpack.c.h.b16 %v2733
    %v3488 = vunpack.c.l.b16 %v2734
    %v3489 = vunpack.c.h.b16 %v2734
    %v3490 = vunpack.c.l.b16 %v2735
    %v3491 = vunpack.c.h.b16 %v2735
    %v3492 = vunpack.c.l.b16 %v2736
    %v3493 = vunpack.c.h.b16 %v2736
    %v3494 = vunpack.c.l.b16 %v2737
    %v3495 = vunpack.c.h.b16 %v2737
    %v3496 = vunpack.c.l.b16 %v2738
    %v3497 = vunpack.c.h.b16 %v2738
    %v3498 = vunpack.c.l.b16 %v2739
    %v3499 = vunpack.c.h.b16 %v2739
    %v3500 = vunpack.c.l.b16 %v2740
    %v3501 = vunpack.c.h.b16 %v2740
    %v3502 = vunpack.c.l.b16 %v2741
    %v3503 = vunpack.c.h.b16 %v2741
    %v3504 = vunpack.c.l.b16 %v2742
    %v3505 = vunpack.c.h.b16 %v2742
    %v3506 = vunpack.c.l.b16 %v2743
    %v3507 = vunpack.c.h.b16 %v2743
    %v3508 = vunpack.c.l.b16 %v2744
    %v3509 = vunpack.c.h.b16 %v2744
    %v3510 = vunpack.c.l.b16 %v2745
    %v3511 = vunpack.c.h.b16 %v2745
    %v3512 = vunpack.c.l.b16 %v2746
    %v3513 = vunpack.c.h.b16 %v2746
    %v3514 = vunpack.c.l.b16 %v2747
    %v3515 = vunpack.c.h.b16 %v2747
    %v3516 = vunpack.c.l.b16 %v2748
    %v3517 = vunpack.c.h.b16 %v2748
    %v3518 = vunpack.c.l.b16 %v2749
    %v3519 = vunpack.c.h.b16 %v2749
    %v3520 = vunpack.c.l.b16 %v2750
    %v3521 = vunpack.c.h.b16 %v2750
    %v3522 = vunpack.c.l.b16 %v2751
    %v3523 = vunpack.c.h.b16 %v2751
    %v3524 = vunpack.c.l.b16 %v2752
    %v3525 = vunpack.c.h.b16 %v2752
    %v3526 = vunpack.c.l.b16 %v2753
    %v3527 = vunpack.c.h.b16 %v2753
    %v3528 = vunpack.c.l.b16 %v2754
    %v3529 = vunpack.c.h.b16 %v2754
    %v3530 = vunpack.c.l.b16 %v2755
    %v3531 = vunpack.c.h.b16 %v2755
    %v3532 = vunpack.c.l.b16 %v2756
    %v3533 = vunpack.c.h.b16 %v2756
    %v3534 = vunpack.c.l.b16 %v2757
    %v3535 = vunpack.c.h.b16 %v2757
    %v3536 = vunpack.c.l.b16 %v2758
    %v3537 = vunpack.c.h.b16 %v2758
    %v3538 = vunpack.c.l.b16 %v2759
    %v3539 = vunpack.c.h.b16 %v2759
    %v3540 = vunpack.c.l.b16 %v2760
    %v3541 = vunpack.c.h.b16 %v2760
    %v3542 = vunpack.c.l.b16 %v2761
    %v3543 = vunpack.c.h.b16 %v2761
    %v3544 = vunpack.c.l.b16 %v2762
    %v3545 = vunpack.c.h.b16 %v2762
    %v3546 = vunpack.c.l.b16 %v2763
    %v3547 = vunpack.c.h.b16 %v2763
    %v3548 = vunpack.c.l.b16 %v2764
    %v3549 = vunpack.c.h.b16 %v2764
    %v3550 = vunpack.c.l.b16 %v2765
    %v3551 = vunpack.c.h.b16 %v2765
    %v3552 = vunpack.c.l.b16 %v2766
    %v3553 = vunpack.c.h.b16 %v2766
    %v3554 = vunpack.c.l.b16 %v2767
    %v3555 = vunpack.c.h.b16 %v2767
    %v3556 = vunpack.c.l.b16 %v2768
    %v3557 = vunpack.c.h.b16 %v2768
    %v3558 = vunpack.c.l.b16 %v2769
    %v3559 = vunpack.c.h.b16 %v2769
    %v3560 = vpack.c.b16 %v3052, %v3048
    %v3561 = vpack.c.b16 %v3053, %v3049
    %v3562 = vpack.c.b16 %v3054, %v3050
    %v3563 = vpack.c.b16 %v3055, %v3051
    %v3564 = vpack.c.b16 %v3060, %v3056
    %v3565 = vpack.c.b16 %v3061, %v3057
    %v3566 = vpack.c.b16 %v3062, %v3058
    %v3567 = vpack.c.b16 %v3063, %v3059
    %v3568 = vpack.c.b16 %v3068, %v3064
    %v3569 = vpack.c.b16 %v3069, %v3065
    %v3570 = vpack.c.b16 %v3070, %v3066
    %v3571 = vpack.c.b16 %v3071, %v3067
    %v3572 = vpack.c.b16 %v3076, %v3072
    %v3573 = vpack.c.b16 %v3077, %v3073
    %v3574 = vpack.c.b16 %v3078, %v3074
    %v3575 = vpack.c.b16 %v3079, %v3075
    %v3576 = vpack.c.b16 %v3084, %v3080
    %v3577 = vpack.c.b16 %v3085, %v3081
    %v3578 = vpack.c.b16 %v3086, %v3082
    %v3579 = vpack.c.b16 %v3087, %v3083
    %v3580 = vpack.c.b16 %v3092, %v3088
    %v3581 = vpack.c.b16 %v3093, %v3089
    %v3582 = vpack.c.b16 %v3094, %v3090
    %v3583 = vpack.c.b16 %v3095, %v3091
    %v3584 = vpack.c.b16 %v3100, %v3096
    %v3585 = vpack.c.b16 %v3101, %v3097
    %v3586 = vpack.c.b16 %v3102, %v3098
    %v3587 = vpack.c.b16 %v3103, %v3099
    %v3588 = vpack.c.b16 %v3108, %v3104
    %v3589 = vpack.c.b16 %v3109, %v3105
    %v3590 = vpack.c.b16 %v3110, %v3106
    %v3591 = vpack.c.b16 %v3111, %v3107
    %v3592 = vpack.c.b16 %v3116, %v3112
    %v3593 = vpack.c.b16 %v3117, %v3113
    %v3594 = vpack.c.b16 %v3118, %v3114
    %v3595 = vpack.c.b16 %v3119, %v3115
    %v3596 = vpack.c.b16 %v3124, %v3120
    %v3597 = vpack.c.b16 %v3125, %v3121
    %v3598 = vpack.c.b16 %v3126, %v3122
    %v3599 = vpack.c.b16 %v3127, %v3123
    %v3600 = vpack.c.b16 %v3132, %v3128
    %v3601 = vpack.c.b16 %v3133, %v3129
    %v3602 = vpack.c.b16 %v3134, %v3130
    %v3603 = vpack.c.b16 %v3135, %v3131
    %v3604 = vpack.c.b16 %v3140, %v3136
    %v3605 = vpack.c.b16 %v3141, %v3137
    %v3606 = vpack.c.b16 %v3142, %v3138
    %v3607 = vpack.c.b16 %v3143, %v3139
    %v3608 = vpack.c.b16 %v3148, %v3144
    %v3609 = vpack.c.b16 %v3149, %v3145
    %v3610 = vpack.c.b16 %v3150, %v3146
    %v3611 = vpack.c.b16 %v3151, %v3147
    %v3612 = vpack.c.b16 %v3156, %v3152
    %v3613 = vpack.c.b16 %v3157, %v3153
    %v3614 = vpack.c.b16 %v3158, %v3154
    %v3615 = vpack.c.b16 %v3159, %v3155
    %v3616 = vpack.c.b16 %v3164, %v3160
    %v3617 = vpack.c.b16 %v3165, %v3161
    %v3618 = vpack.c.b16 %v3166, %v3162
    %v3619 = vpack.c.b16 %v3167, %v3163
    %v3620 = vpack.c.b16 %v3172, %v3168
    %v3621 = vpack.c.b16 %v3173, %v3169
    %v3622 = vpack.c.b16 %v3174, %v3170
    %v3623 = vpack.c.b16 %v3175, %v3171
    %v3624 = vpack.c.b16 %v3180, %v3176
    %v3625 = vpack.c.b16 %v3181, %v3177
    %v3626 = vpack.c.b16 %v3182, %v3178
    %v3627 = vpack.c.b16 %v3183, %v3179
    %v3628 = vpack.c.b16 %v3188, %v3184
    %v3629 = vpack.c.b16 %v3189, %v3185
    %v3630 = vpack.c.b16 %v3190, %v3186
    %v3631 = vpack.c.b16 %v3191, %v3187
    %v3632 = vpack.c.b16 %v3196, %v3192
    %v3633 = vpack.c.b16 %v3197, %v3193
    %v3634 = vpack.c.b16 %v3198, %v3194
    %v3635 = vpack.c.b16 %v3199, %v3195
    %v3636 = vpack.c.b16 %v3204, %v3200
    %v3637 = vpack.c.b16 %v3205, %v3201
    %v3638 = vpack.c.b16 %v3206, %v3202
    %v3639 = vpack.c.b16 %v3207, %v3203
    %v3640 = vpack.c.b16 %v3212, %v3208
    %v3641 = vpack.c.b16 %v3213, %v3209
    %v3642 = vpack.c.b16 %v3214, %v3210
    %v3643 = vpack.c.b16 %v3215, %v3211
    %v3644 = vpack.c.b16 %v3220, %v3216
    %v3645 = vpack.c.b16 %v3221, %v3217
    %v3646 = vpack.c.b16 %v3222, %v3218
    %v3647 = vpack.c.b16 %v3223, %v3219
    %v3648 = vpack.c.b16 %v3228, %v3224
    %v3649 = vpack.c.b16 %v3229, %v3225
    %v3650 = vpack.c.b16 %v3230, %v3226
    %v3651 = vpack.c.b16 %v3231, %v3227
    %v3652 = vpack.c.b16 %v3236, %v3232
    %v3653 = vpack.c.b16 %v3237, %v3233
    %v3654 = vpack.c.b16 %v3238, %v3234
    %v3655 = vpack.c.b16 %v3239, %v3235
    %v3656 = vpack.c.b16 %v3244, %v3240
    %v3657 = vpack.c.b16 %v3245, %v3241
    %v3658 = vpack.c.b16 %v3246, %v3242
    %v3659 = vpack.c.b16 %v3247, %v3243
    %v3660 = vpack.c.b16 %v3252, %v3248
    %v3661 = vpack.c.b16 %v3253, %v3249
    %v3662 = vpack.c.b16 %v3254, %v3250
    %v3663 = vpack.c.b16 %v3255, %v3251
    %v3664 = vpack.c.b16 %v3260, %v3256
    %v3665 = vpack.c.b16 %v3261, %v3257
    %v3666 = vpack.c.b16 %v3262, %v3258
    %v3667 = vpack.c.b16 %v3263, %v3259
    %v3668 = vpack.c.b16 %v3268, %v3264
    %v3669 = vpack.c.b16 %v3269, %v3265
    %v3670 = vpack.c.b16 %v3270, %v3266
    %v3671 = vpack.c.b16 %v3271, %v3267
    %v3672 = vpack.c.b16 %v3276, %v3272
    %v3673 = vpack.c.b16 %v3277, %v3273
    %v3674 = vpack.c.b16 %v3278, %v3274
    %v3675 = vpack.c.b16 %v3279, %v3275
    %v3676 = vpack.c.b16 %v3284, %v3280
    %v3677 = vpack.c.b16 %v3285, %v3281
    %v3678 = vpack.c.b16 %v3286, %v3282
    %v3679 = vpack.c.b16 %v3287, %v3283
    %v3680 = vpack.c.b16 %v3292, %v3288
    %v3681 = vpack.c.b16 %v3293, %v3289
    %v3682 = vpack.c.b16 %v3294, %v3290
    %v3683 = vpack.c.b16 %v3295, %v3291
    %v3684 = vpack.c.b16 %v3300, %v3296
    %v3685 = vpack.c.b16 %v3301, %v3297
    %v3686 = vpack.c.b16 %v3302, %v3298
    %v3687 = vpack.c.b16 %v3303, %v3299
    %v3688 = vpack.c.b16 %v3308, %v3304
    %v3689 = vpack.c.b16 %v3309, %v3305
    %v3690 = vpack.c.b16 %v3310, %v3306
    %v3691 = vpack.c.b16 %v3311, %v3307
    %v3692 = vpack.c.b16 %v3316, %v3312
    %v3693 = vpack.c.b16 %v3317, %v3313
    %v3694 = vpack.c.b16 %v3318, %v3314
    %v3695 = vpack.c.b16 %v3319, %v3315
    %v3696 = vpack.c.b16 %v3324, %v3320
    %v3697 = vpack.c.b16 %v3325, %v3321
    %v3698 = vpack.c.b16 %v3326, %v3322
    %v3699 = vpack.c.b16 %v3327, %v3323
    %v3700 = vpack.c.b16 %v3332, %v3328
    %v3701 = vpack.c.b16 %v3333, %v3329
    %v3702 = vpack.c.b16 %v3334, %v3330
    %v3703 = vpack.c.b16 %v3335, %v3331
    %v3704 = vpack.c.b16 %v3340, %v3336
    %v3705 = vpack.c.b16 %v3341, %v3337
    %v3706 = vpack.c.b16 %v3342, %v3338
    %v3707 = vpack.c.b16 %v3343, %v3339
    %v3708 = vpack.c.b16 %v3348, %v3344
    %v3709 = vpack.c.b16 %v3349, %v3345
    %v3710 = vpack.c.b16 %v3350, %v3346
    %v3711 = vpack.c.b16 %v3351, %v3347
    %v3712 = vpack.c.b16 %v3356, %v3352
    %v3713 = vpack.c.b16 %v3357, %v3353
    %v3714 = vpack.c.b16 %v3358, %v3354
    %v3715 = vpack.c.b16 %v3359, %v3355
    %v3716 = vpack.c.b16 %v3364, %v3360
    %v3717 = vpack.c.b16 %v3365, %v3361
    %v3718 = vpack.c.b16 %v3366, %v3362
    %v3719 = vpack.c.b16 %v3367, %v3363
    %v3720 = vpack.c.b16 %v3372, %v3368
    %v3721 = vpack.c.b16 %v3373, %v3369
    %v3722 = vpack.c.b16 %v3374, %v3370
    %v3723 = vpack.c.b16 %v3375, %v3371
    %v3724 = vpack.c.b16 %v3380, %v3376
    %v3725 = vpack.c.b16 %v3381, %v3377
    %v3726 = vpack.c.b16 %v3382, %v3378
    %v3727 = vpack.c.b16 %v3383, %v3379
    %v3728 = vpack.c.b16 %v3388, %v3384
    %v3729 = vpack.c.b16 %v3389, %v3385
    %v3730 = vpack.c.b16 %v3390, %v3386
    %v3731 = vpack.c.b16 %v3391, %v3387
    %v3732 = vpack.c.b16 %v3396, %v3392
    %v3733 = vpack.c.b16 %v3397, %v3393
    %v3734 = vpack.c.b16 %v3398, %v3394
    %v3735 = vpack.c.b16 %v3399, %v3395
    %v3736 = vpack.c.b16 %v3404, %v3400
    %v3737 = vpack.c.b16 %v3405, %v3401
    %v3738 = vpack.c.b16 %v3406, %v3402
    %v3739 = vpack.c.b16 %v3407, %v3403
    %v3740 = vpack.c.b16 %v3412, %v3408
    %v3741 = vpack.c.b16 %v3413, %v3409
    %v3742 = vpack.c.b16 %v3414, %v3410
    %v3743 = vpack.c.b16 %v3415, %v3411
    %v3744 = vpack.c.b16 %v3420, %v3416
    %v3745 = vpack.c.b16 %v3421, %v3417
    %v3746 = vpack.c.b16 %v3422, %v3418
    %v3747 = vpack.c.b16 %v3423, %v3419
    %v3748 = vpack.c.b16 %v3428, %v3424
    %v3749 = vpack.c.b16 %v3429, %v3425
    %v3750 = vpack.c.b16 %v3430, %v3426
    %v3751 = vpack.c.b16 %v3431, %v3427
    %v3752 = vpack.c.b16 %v3436, %v3432
    %v3753 = vpack.c.b16 %v3437, %v3433
    %v3754 = vpack.c.b16 %v3438, %v3434
    %v3755 = vpack.c.b16 %v3439, %v3435
    %v3756 = vpack.c.b16 %v3444, %v3440
    %v3757 = vpack.c.b16 %v3445, %v3441
    %v3758 = vpack.c.b16 %v3446, %v3442
    %v3759 = vpack.c.b16 %v3447, %v3443
    %v3760 = vpack.c.b16 %v3452, %v3448
    %v3761 = vpack.c.b16 %v3453, %v3449
    %v3762 = vpack.c.b16 %v3454, %v3450
    %v3763 = vpack.c.b16 %v3455, %v3451
    %v3764 = vpack.c.b16 %v3460, %v3456
    %v3765 = vpack.c.b16 %v3461, %v3457
    %v3766 = vpack.c.b16 %v3462, %v3458
    %v3767 = vpack.c.b16 %v3463, %v3459
    %v3768 = vpack.c.b16 %v3468, %v3464
    %v3769 = vpack.c.b16 %v3469, %v3465
    %v3770 = vpack.c.b16 %v3470, %v3466
    %v3771 = vpack.c.b16 %v3471, %v3467
    %v3772 = vpack.c.b16 %v3476, %v3472
    %v3773 = vpack.c.b16 %v3477, %v3473
    %v3774 = vpack.c.b16 %v3478, %v3474
    %v3775 = vpack.c.b16 %v3479, %v3475
    %v3776 = vpack.c.b16 %v3484, %v3480
    %v3777 = vpack.c.b16 %v3485, %v3481
    %v3778 = vpack.c.b16 %v3486, %v3482
    %v3779 = vpack.c.b16 %v3487, %v3483
    %v3780 = vpack.c.b16 %v3492, %v3488
    %v3781 = vpack.c.b16 %v3493, %v3489
    %v3782 = vpack.c.b16 %v3494, %v3490
    %v3783 = vpack.c.b16 %v3495, %v3491
    %v3784 = vpack.c.b16 %v3500, %v3496
    %v3785 = vpack.c.b16 %v3501, %v3497
    %v3786 = vpack.c.b16 %v3502, %v3498
    %v3787 = vpack.c.b16 %v3503, %v3499
    %v3788 = vpack.c.b16 %v3508, %v3504
    %v3789 = vpack.c.b16 %v3509, %v3505
    %v3790 = vpack.c.b16 %v3510, %v3506
    %v3791 = vpack.c.b16 %v3511, %v3507
    %v3792 = vpack.c.b16 %v3516, %v3512
    %v3793 = vpack.c.b16 %v3517, %v3513
    %v3794 = vpack.c.b16 %v3518, %v3514
    %v3795 = vpack.c.b16 %v3519, %v3515
    %v3796 = vpack.c.b16 %v3524, %v3520
    %v3797 = vpack.c.b16 %v3525, %v3521
    %v3798 = vpack.c.b16 %v3526, %v3522
    %v3799 = vpack.c.b16 %v3527, %v3523
    %v3800 = vpack.c.b16 %v3532, %v3528
    %v3801 = vpack.c.b16 %v3533, %v3529
    %v3802 = vpack.c.b16 %v3534, %v3530
    %v3803 = vpack.c.b16 %v3535, %v3531
    %v3804 = vpack.c.b16 %v3540, %v3536
    %v3805 = vpack.c.b16 %v3541, %v3537
    %v3806 = vpack.c.b16 %v3542, %v3538
    %v3807 = vpack.c.b16 %v3543, %v3539
    %v3808 = vpack.c.b16 %v3548, %v3544
    %v3809 = vpack.c.b16 %v3549, %v3545
    %v3810 = vpack.c.b16 %v3550, %v3546
    %v3811 = vpack.c.b16 %v3551, %v3547
    %v3812 = vpack.c.b16 %v3556, %v3552
    %v3813 = vpack.c.b16 %v3557, %v3553
    %v3814 = vpack.c.b16 %v3558, %v3554
    %v3815 = vpack.c.b16 %v3559, %v3555
    %4072 = vmatprep.subr.bf16.mxu0 %v3561
    %4073 = vmatpush1.bf16.msra.mxu0 %v3560
    %4074 = vmatprep.subr.bf16.mxu0 %v3565
    %4075 = vmatpush1.bf16.msra.mxu0 %v3564
    %4076 = vmatprep.subr.bf16.mxu0 %v3569
    %4077 = vmatpush1.bf16.msra.mxu0 %v3568
    %4078 = vmatprep.subr.bf16.mxu0 %v3573
    %4079 = vmatpush1.bf16.msra.mxu0 %v3572
    %4080 = vmatprep.subr.bf16.mxu0 %v3577
    %4081 = vmatpush1.bf16.msra.mxu0 %v3576
    %4082 = vmatprep.subr.bf16.mxu0 %v3581
    %4083 = vmatpush1.bf16.msra.mxu0 %v3580
    %4084 = vmatprep.subr.bf16.mxu0 %v3585
    %4085 = vmatpush1.bf16.msra.mxu0 %v3584
    %4086 = vmatprep.subr.bf16.mxu0 %v3589
    %4087 = vmatpush1.bf16.msra.mxu0 %v3588
    %4088 = vmatprep.subr.bf16.mxu0 %v3593
    %4089 = vmatpush1.bf16.msra.mxu0 %v3592
    %4090 = vmatprep.subr.bf16.mxu0 %v3597
    %4091 = vmatpush1.bf16.msra.mxu0 %v3596
    %4092 = vmatprep.subr.bf16.mxu0 %v3601
    %4093 = vmatpush1.bf16.msra.mxu0 %v3600
    %4094 = vmatprep.subr.bf16.mxu0 %v3605
    %4095 = vmatpush1.bf16.msra.mxu0 %v3604
    %4096 = vmatprep.subr.bf16.mxu0 %v3609
    %4097 = vmatpush1.bf16.msra.mxu0 %v3608
    %4098 = vmatprep.subr.bf16.mxu0 %v3613
    %4099 = vmatpush1.bf16.msra.mxu0 %v3612
    %4100 = vmatprep.subr.bf16.mxu0 %v3617
    %4101 = vmatpush1.bf16.msra.mxu0 %v3616
    %4102 = vmatprep.subr.bf16.mxu0 %v3621
    %4103 = vmatpush1.bf16.msra.mxu0 %v3620
    %4104 = vmatprep.mubr.bf16.mxu0 %v2507
    %4105 = vmatmul.mubr.bf16.gmra.mrb[0].mxu0 %v2506
    %v4106 = vpop.f32.mrb[0].mxu0
    %v4107 = vadd.f32 %v2775, %v4106
    %v4108 = vpop.f32.mrb[0].mxu0
    %v4109 = vadd.f32 %v2779, %v4108
    %v4110 = vpop.f32.mrb[0].mxu0
    %v4111 = vpop.f32.mrb[0].mxu0
    %4112 = vdwg.mxu0
    %4113 = vmatprep.subr.bf16.mxu0 %v3625
    %4114 = vmatpush1.bf16.msra.mxu0 %v3624
    %4115 = vmatprep.subr.bf16.mxu0 %v3629
    %4116 = vmatpush1.bf16.msra.mxu0 %v3628
    %4117 = vmatprep.subr.bf16.mxu0 %v3633
    %4118 = vmatpush1.bf16.msra.mxu0 %v3632
    %4119 = vmatprep.subr.bf16.mxu0 %v3637
    %4120 = vmatpush1.bf16.msra.mxu0 %v3636
    %4121 = vmatprep.subr.bf16.mxu0 %v3641
    %4122 = vmatpush1.bf16.msra.mxu0 %v3640
    %4123 = vmatprep.subr.bf16.mxu0 %v3645
    %4124 = vmatpush1.bf16.msra.mxu0 %v3644
    %4125 = vmatprep.subr.bf16.mxu0 %v3649
    %4126 = vmatpush1.bf16.msra.mxu0 %v3648
    %4127 = vmatprep.subr.bf16.mxu0 %v3653
    %4128 = vmatpush1.bf16.msra.mxu0 %v3652
    %4129 = vmatprep.subr.bf16.mxu0 %v3657
    %4130 = vmatpush1.bf16.msra.mxu0 %v3656
    %4131 = vmatprep.subr.bf16.mxu0 %v3661
    %4132 = vmatpush1.bf16.msra.mxu0 %v3660
    %4133 = vmatprep.subr.bf16.mxu0 %v3665
    %4134 = vmatpush1.bf16.msra.mxu0 %v3664
    %4135 = vmatprep.subr.bf16.mxu0 %v3669
    %4136 = vmatpush1.bf16.msra.mxu0 %v3668
    %4137 = vmatprep.subr.bf16.mxu0 %v3673
    %4138 = vmatpush1.bf16.msra.mxu0 %v3672
    %4139 = vmatprep.subr.bf16.mxu0 %v3677
    %4140 = vmatpush1.bf16.msra.mxu0 %v3676
    %4141 = vmatprep.subr.bf16.mxu0 %v3681
    %4142 = vmatpush1.bf16.msra.mxu0 %v3680
    %4143 = vmatprep.subr.bf16.mxu0 %v3685
    %4144 = vmatpush1.bf16.msra.mxu0 %v3684
    %4145 = vmatprep.mubr.bf16.mxu0 %v2509
    %4146 = vmatmul.mubr.bf16.gmra.mrb[0].mxu0 %v2508
    %v4147 = vpop.f32.mrb[0].mxu0
    %v4148 = vadd.f32 %v4107, %v4147
    %v4149 = vpop.f32.mrb[0].mxu0
    %v4150 = vadd.f32 %v4109, %v4149
    %v4151 = vpop.f32.mrb[0].mxu0
    %v4152 = vpop.f32.mrb[0].mxu0
    %4153 = vdwg.mxu0
    %4154 = vmatprep.subr.bf16.mxu0 %v3689
    %4155 = vmatpush1.bf16.msra.mxu0 %v3688
    %4156 = vmatprep.subr.bf16.mxu0 %v3693
    %4157 = vmatpush1.bf16.msra.mxu0 %v3692
    %4158 = vmatprep.subr.bf16.mxu0 %v3697
    %4159 = vmatpush1.bf16.msra.mxu0 %v3696
    %4160 = vmatprep.subr.bf16.mxu0 %v3701
    %4161 = vmatpush1.bf16.msra.mxu0 %v3700
    %4162 = vmatprep.subr.bf16.mxu0 %v3705
    %4163 = vmatpush1.bf16.msra.mxu0 %v3704
    %4164 = vmatprep.subr.bf16.mxu0 %v3709
    %4165 = vmatpush1.bf16.msra.mxu0 %v3708
    %4166 = vmatprep.subr.bf16.mxu0 %v3713
    %4167 = vmatpush1.bf16.msra.mxu0 %v3712
    %4168 = vmatprep.subr.bf16.mxu0 %v3717
    %4169 = vmatpush1.bf16.msra.mxu0 %v3716
    %4170 = vmatprep.subr.bf16.mxu0 %v3721
    %4171 = vmatpush1.bf16.msra.mxu0 %v3720
    %4172 = vmatprep.subr.bf16.mxu0 %v3725
    %4173 = vmatpush1.bf16.msra.mxu0 %v3724
    %4174 = vmatprep.subr.bf16.mxu0 %v3729
    %4175 = vmatpush1.bf16.msra.mxu0 %v3728
    %4176 = vmatprep.subr.bf16.mxu0 %v3733
    %4177 = vmatpush1.bf16.msra.mxu0 %v3732
    %4178 = vmatprep.subr.bf16.mxu0 %v3737
    %4179 = vmatpush1.bf16.msra.mxu0 %v3736
    %4180 = vmatprep.subr.bf16.mxu0 %v3741
    %4181 = vmatpush1.bf16.msra.mxu0 %v3740
    %4182 = vmatprep.subr.bf16.mxu0 %v3745
    %4183 = vmatpush1.bf16.msra.mxu0 %v3744
    %4184 = vmatprep.subr.bf16.mxu0 %v3749
    %4185 = vmatpush1.bf16.msra.mxu0 %v3748
    %4186 = vmatprep.mubr.bf16.mxu0 %v2511
    %4187 = vmatmul.mubr.bf16.gmra.mrb[0].mxu0 %v2510
    %v4188 = vpop.f32.mrb[0].mxu0
    %v4189 = vadd.f32 %v4148, %v4188
    %v4190 = vpop.f32.mrb[0].mxu0
    %v4191 = vadd.f32 %v4150, %v4190
    %v4192 = vpop.f32.mrb[0].mxu0
    %v4193 = vpop.f32.mrb[0].mxu0
    %4194 = vdwg.mxu0
    %4195 = vmatprep.subr.bf16.mxu0 %v3753
    %4196 = vmatpush1.bf16.msra.mxu0 %v3752
    %4197 = vmatprep.subr.bf16.mxu0 %v3757
    %4198 = vmatpush1.bf16.msra.mxu0 %v3756
    %4199 = vmatprep.subr.bf16.mxu0 %v3761
    %4200 = vmatpush1.bf16.msra.mxu0 %v3760
    %4201 = vmatprep.subr.bf16.mxu0 %v3765
    %4202 = vmatpush1.bf16.msra.mxu0 %v3764
    %4203 = vmatprep.subr.bf16.mxu0 %v3769
    %4204 = vmatpush1.bf16.msra.mxu0 %v3768
    %4205 = vmatprep.subr.bf16.mxu0 %v3773
    %4206 = vmatpush1.bf16.msra.mxu0 %v3772
    %4207 = vmatprep.subr.bf16.mxu0 %v3777
    %4208 = vmatpush1.bf16.msra.mxu0 %v3776
    %4209 = vmatprep.subr.bf16.mxu0 %v3781
    %4210 = vmatpush1.bf16.msra.mxu0 %v3780
    %4211 = vmatprep.subr.bf16.mxu0 %v3785
    %4212 = vmatpush1.bf16.msra.mxu0 %v3784
    %4213 = vmatprep.subr.bf16.mxu0 %v3789
    %4214 = vmatpush1.bf16.msra.mxu0 %v3788
    %4215 = vmatprep.subr.bf16.mxu0 %v3793
    %4216 = vmatpush1.bf16.msra.mxu0 %v3792
    %4217 = vmatprep.subr.bf16.mxu0 %v3797
    %4218 = vmatpush1.bf16.msra.mxu0 %v3796
    %4219 = vmatprep.subr.bf16.mxu0 %v3801
    %4220 = vmatpush1.bf16.msra.mxu0 %v3800
    %4221 = vmatprep.subr.bf16.mxu0 %v3805
    %4222 = vmatpush1.bf16.msra.mxu0 %v3804
    %4223 = vmatprep.subr.bf16.mxu0 %v3809
    %4224 = vmatpush1.bf16.msra.mxu0 %v3808
    %4225 = vmatprep.subr.bf16.mxu0 %v3813
    %4226 = vmatpush1.bf16.msra.mxu0 %v3812
    %4227 = vmatprep.mubr.bf16.mxu0 %v2513
    %4228 = vmatmul.mubr.bf16.gmra.mrb[0].mxu0 %v2512
    %v4229 = vpop.f32.mrb[0].mxu0
    %v4230 = vadd.f32 %v4189, %v4229
    %v4231 = vpop.f32.mrb[0].mxu0
    %v4232 = vadd.f32 %v4191, %v4231
    %v4233 = vpop.f32.mrb[0].mxu0
    %v4234 = vpop.f32.mrb[0].mxu0
    %4235 = vdwg.mxu0
    %4236 = vmatprep.subr.bf16.mxu0 %v3563
    %4237 = vmatpush1.bf16.msra.mxu0 %v3562
    %4238 = vmatprep.subr.bf16.mxu0 %v3567
    %4239 = vmatpush1.bf16.msra.mxu0 %v3566
    %4240 = vmatprep.subr.bf16.mxu0 %v3571
    %4241 = vmatpush1.bf16.msra.mxu0 %v3570
    %4242 = vmatprep.subr.bf16.mxu0 %v3575
    %4243 = vmatpush1.bf16.msra.mxu0 %v3574
    %4244 = vmatprep.subr.bf16.mxu0 %v3579
    %4245 = vmatpush1.bf16.msra.mxu0 %v3578
    %4246 = vmatprep.subr.bf16.mxu0 %v3583
    %4247 = vmatpush1.bf16.msra.mxu0 %v3582
    %4248 = vmatprep.subr.bf16.mxu0 %v3587
    %4249 = vmatpush1.bf16.msra.mxu0 %v3586
    %4250 = vmatprep.subr.bf16.mxu0 %v3591
    %4251 = vmatpush1.bf16.msra.mxu0 %v3590
    %4252 = vmatprep.subr.bf16.mxu0 %v3595
    %4253 = vmatpush1.bf16.msra.mxu0 %v3594
    %4254 = vmatprep.subr.bf16.mxu0 %v3599
    %4255 = vmatpush1.bf16.msra.mxu0 %v3598
    %4256 = vmatprep.subr.bf16.mxu0 %v3603
    %4257 = vmatpush1.bf16.msra.mxu0 %v3602
    %4258 = vmatprep.subr.bf16.mxu0 %v3607
    %4259 = vmatpush1.bf16.msra.mxu0 %v3606
    %4260 = vmatprep.subr.bf16.mxu0 %v3611
    %4261 = vmatpush1.bf16.msra.mxu0 %v3610
    %4262 = vmatprep.subr.bf16.mxu0 %v3615
    %4263 = vmatpush1.bf16.msra.mxu0 %v3614
    %4264 = vmatprep.subr.bf16.mxu0 %v3619
    %4265 = vmatpush1.bf16.msra.mxu0 %v3618
    %4266 = vmatprep.subr.bf16.mxu0 %v3623
    %4267 = vmatpush1.bf16.msra.mxu0 %v3622
    %4268 = vmatprep.mubr.bf16.mxu0 %v2507
    %4269 = vmatmul.mubr.bf16.gmra.mrb[0].mxu0 %v2506
    %v4270 = vpop.f32.mrb[0].mxu0
    %v4271 = vadd.f32 %v2783, %v4270
    %v4272 = vpop.f32.mrb[0].mxu0
    %v4273 = vadd.f32 %v2787, %v4272
    %v4274 = vpop.f32.mrb[0].mxu0
    %v4275 = vpop.f32.mrb[0].mxu0
    %4276 = vdwg.mxu0
    %4277 = vmatprep.subr.bf16.mxu0 %v3627
    %4278 = vmatpush1.bf16.msra.mxu0 %v3626
    %4279 = vmatprep.subr.bf16.mxu0 %v3631
    %4280 = vmatpush1.bf16.msra.mxu0 %v3630
    %4281 = vmatprep.subr.bf16.mxu0 %v3635
    %4282 = vmatpush1.bf16.msra.mxu0 %v3634
    %4283 = vmatprep.subr.bf16.mxu0 %v3639
    %4284 = vmatpush1.bf16.msra.mxu0 %v3638
    %4285 = vmatprep.subr.bf16.mxu0 %v3643
    %4286 = vmatpush1.bf16.msra.mxu0 %v3642
    %4287 = vmatprep.subr.bf16.mxu0 %v3647
    %4288 = vmatpush1.bf16.msra.mxu0 %v3646
    %4289 = vmatprep.subr.bf16.mxu0 %v3651
    %4290 = vmatpush1.bf16.msra.mxu0 %v3650
    %4291 = vmatprep.subr.bf16.mxu0 %v3655
    %4292 = vmatpush1.bf16.msra.mxu0 %v3654
    %4293 = vmatprep.subr.bf16.mxu0 %v3659
    %4294 = vmatpush1.bf16.msra.mxu0 %v3658
    %4295 = vmatprep.subr.bf16.mxu0 %v3663
    %4296 = vmatpush1.bf16.msra.mxu0 %v3662
    %4297 = vmatprep.subr.bf16.mxu0 %v3667
    %4298 = vmatpush1.bf16.msra.mxu0 %v3666
    %4299 = vmatprep.subr.bf16.mxu0 %v3671
    %4300 = vmatpush1.bf16.msra.mxu0 %v3670
    %4301 = vmatprep.subr.bf16.mxu0 %v3675
    %4302 = vmatpush1.bf16.msra.mxu0 %v3674
    %4303 = vmatprep.subr.bf16.mxu0 %v3679
    %4304 = vmatpush1.bf16.msra.mxu0 %v3678
    %4305 = vmatprep.subr.bf16.mxu0 %v3683
    %4306 = vmatpush1.bf16.msra.mxu0 %v3682
    %4307 = vmatprep.subr.bf16.mxu0 %v3687
    %4308 = vmatpush1.bf16.msra.mxu0 %v3686
    %4309 = vmatprep.mubr.bf16.mxu0 %v2509
    %4310 = vmatmul.mubr.bf16.gmra.mrb[0].mxu0 %v2508
    %v4311 = vpop.f32.mrb[0].mxu0
    %v4312 = vadd.f32 %v4271, %v4311
    %v4313 = vpop.f32.mrb[0].mxu0
    %v4314 = vadd.f32 %v4273, %v4313
    %v4315 = vpop.f32.mrb[0].mxu0
    %v4316 = vpop.f32.mrb[0].mxu0
    %4317 = vdwg.mxu0
    %4318 = vmatprep.subr.bf16.mxu0 %v3691
    %4319 = vmatpush1.bf16.msra.mxu0 %v3690
    %4320 = vmatprep.subr.bf16.mxu0 %v3695
    %4321 = vmatpush1.bf16.msra.mxu0 %v3694
    %4322 = vmatprep.subr.bf16.mxu0 %v3699
    %4323 = vmatpush1.bf16.msra.mxu0 %v3698
    %4324 = vmatprep.subr.bf16.mxu0 %v3703
    %4325 = vmatpush1.bf16.msra.mxu0 %v3702
    %4326 = vmatprep.subr.bf16.mxu0 %v3707
    %4327 = vmatpush1.bf16.msra.mxu0 %v3706
    %4328 = vmatprep.subr.bf16.mxu0 %v3711
    %4329 = vmatpush1.bf16.msra.mxu0 %v3710
    %4330 = vmatprep.subr.bf16.mxu0 %v3715
    %4331 = vmatpush1.bf16.msra.mxu0 %v3714
    %4332 = vmatprep.subr.bf16.mxu0 %v3719
    %4333 = vmatpush1.bf16.msra.mxu0 %v3718
    %4334 = vmatprep.subr.bf16.mxu0 %v3723
    %4335 = vmatpush1.bf16.msra.mxu0 %v3722
    %4336 = vmatprep.subr.bf16.mxu0 %v3727
    %4337 = vmatpush1.bf16.msra.mxu0 %v3726
    %4338 = vmatprep.subr.bf16.mxu0 %v3731
    %4339 = vmatpush1.bf16.msra.mxu0 %v3730
    %4340 = vmatprep.subr.bf16.mxu0 %v3735
    %4341 = vmatpush1.bf16.msra.mxu0 %v3734
    %4342 = vmatprep.subr.bf16.mxu0 %v3739
    %4343 = vmatpush1.bf16.msra.mxu0 %v3738
    %4344 = vmatprep.subr.bf16.mxu0 %v3743
    %4345 = vmatpush1.bf16.msra.mxu0 %v3742
    %4346 = vmatprep.subr.bf16.mxu0 %v3747
    %4347 = vmatpush1.bf16.msra.mxu0 %v3746
    %4348 = vmatprep.subr.bf16.mxu0 %v3751
    %4349 = vmatpush1.bf16.msra.mxu0 %v3750
    %4350 = vmatprep.mubr.bf16.mxu0 %v2511
    %4351 = vmatmul.mubr.bf16.gmra.mrb[0].mxu0 %v2510
    %v4352 = vpop.f32.mrb[0].mxu0
    %v4353 = vadd.f32 %v4312, %v4352
    %v4354 = vpop.f32.mrb[0].mxu0
    %v4355 = vadd.f32 %v4314, %v4354
    %v4356 = vpop.f32.mrb[0].mxu0
    %v4357 = vpop.f32.mrb[0].mxu0
    %4358 = vdwg.mxu0
    %4359 = vmatprep.subr.bf16.mxu0 %v3755
    %4360 = vmatpush1.bf16.msra.mxu0 %v3754
    %4361 = vmatprep.subr.bf16.mxu0 %v3759
    %4362 = vmatpush1.bf16.msra.mxu0 %v3758
    %4363 = vmatprep.subr.bf16.mxu0 %v3763
    %4364 = vmatpush1.bf16.msra.mxu0 %v3762
    %4365 = vmatprep.subr.bf16.mxu0 %v3767
    %4366 = vmatpush1.bf16.msra.mxu0 %v3766
    %4367 = vmatprep.subr.bf16.mxu0 %v3771
    %4368 = vmatpush1.bf16.msra.mxu0 %v3770
    %4369 = vmatprep.subr.bf16.mxu0 %v3775
    %4370 = vmatpush1.bf16.msra.mxu0 %v3774
    %4371 = vmatprep.subr.bf16.mxu0 %v3779
    %4372 = vmatpush1.bf16.msra.mxu0 %v3778
    %4373 = vmatprep.subr.bf16.mxu0 %v3783
    %4374 = vmatpush1.bf16.msra.mxu0 %v3782
    %4375 = vmatprep.subr.bf16.mxu0 %v3787
    %4376 = vmatpush1.bf16.msra.mxu0 %v3786
    %4377 = vmatprep.subr.bf16.mxu0 %v3791
    %4378 = vmatpush1.bf16.msra.mxu0 %v3790
    %4379 = vmatprep.subr.bf16.mxu0 %v3795
    %4380 = vmatpush1.bf16.msra.mxu0 %v3794
    %4381 = vmatprep.subr.bf16.mxu0 %v3799
    %4382 = vmatpush1.bf16.msra.mxu0 %v3798
    %4383 = vmatprep.subr.bf16.mxu0 %v3803
    %4384 = vmatpush1.bf16.msra.mxu0 %v3802
    %4385 = vmatprep.subr.bf16.mxu0 %v3807
    %4386 = vmatpush1.bf16.msra.mxu0 %v3806
    %4387 = vmatprep.subr.bf16.mxu0 %v3811
    %4388 = vmatpush1.bf16.msra.mxu0 %v3810
    %4389 = vmatprep.subr.bf16.mxu0 %v3815
    %4390 = vmatpush1.bf16.msra.mxu0 %v3814
    %4391 = vmatprep.mubr.bf16.mxu0 %v2513
    %4392 = vmatmul.mubr.bf16.gmra.mrb[0].mxu0 %v2512
    %v4393 = vpop.f32.mrb[0].mxu0
    %v4394 = vadd.f32 %v4353, %v4393
    %v4395 = vpop.f32.mrb[0].mxu0
    %v4396 = vadd.f32 %v4355, %v4395
    %v4397 = vpop.f32.mrb[0].mxu0
    %v4398 = vpop.f32.mrb[0].mxu0
    %4399 = vdwg.mxu0
    %v4400 = vpack.c.bf16 %v4230, %v4230
    %v4401 = vpack.c.bf16 %v4232, %v4232
    %v4402 = vpack.c.bf16 %v4394, %v4394
    %v4403 = vpack.c.bf16 %v4396, %v4396
    %v4404 = vld [vmem:[#allocation7] sm:$0xf]
    %v4405 = vld [vmem:[#allocation7 + $0x4] sm:$0xf]
    %v4406 = vld [vmem:[#allocation7 + $0x8] sm:$0xf]
    %v4407 = vld [vmem:[#allocation7 + $0xc] sm:$0xf]
    %v4408 = vld [vmem:[#allocation7 + $0x10] sm:$0xf]
    %v4409 = vld [vmem:[#allocation7 + $0x14] sm:$0xf]
    %v4410 = vld [vmem:[#allocation7 + $0x18] sm:$0xf]
    %v4411 = vld [vmem:[#allocation7 + $0x1c] sm:$0xf]
    %v4412 = vld [vmem:[#allocation7 + $0x20] sm:$0xf]
    %v4413 = vld [vmem:[#allocation7 + $0x24] sm:$0xf]
    %v4414 = vld [vmem:[#allocation7 + $0x28] sm:$0xf]
    %v4415 = vld [vmem:[#allocation7 + $0x2c] sm:$0xf]
    %v4416 = vld [vmem:[#allocation7 + $0x30] sm:$0xf]
    %v4417 = vld [vmem:[#allocation7 + $0x34] sm:$0xf]
    %v4418 = vld [vmem:[#allocation7 + $0x38] sm:$0xf]
    %v4419 = vld [vmem:[#allocation7 + $0x3c] sm:$0xf]
    %v4420 = vld [vmem:[#allocation7 + $0x40] sm:$0xf]
    %v4421 = vld [vmem:[#allocation7 + $0x44] sm:$0xf]
    %v4422 = vld [vmem:[#allocation7 + $0x48] sm:$0xf]
    %v4423 = vld [vmem:[#allocation7 + $0x4c] sm:$0xf]
    %v4424 = vld [vmem:[#allocation7 + $0x50] sm:$0xf]
    %v4425 = vld [vmem:[#allocation7 + $0x54] sm:$0xf]
    %v4426 = vld [vmem:[#allocation7 + $0x58] sm:$0xf]
    %v4427 = vld [vmem:[#allocation7 + $0x5c] sm:$0xf]
    %v4428 = vld [vmem:[#allocation7 + $0x60] sm:$0xf]
    %v4429 = vld [vmem:[#allocation7 + $0x64] sm:$0xf]
    %v4430 = vld [vmem:[#allocation7 + $0x68] sm:$0xf]
    %v4431 = vld [vmem:[#allocation7 + $0x6c] sm:$0xf]
    %v4432 = vld [vmem:[#allocation7 + $0x70] sm:$0xf]
    %v4433 = vld [vmem:[#allocation7 + $0x74] sm:$0xf]
    %v4434 = vld [vmem:[#allocation7 + $0x78] sm:$0xf]
    %v4435 = vld [vmem:[#allocation7 + $0x7c] sm:$0xf]
    %v4436 = vld [vmem:[#allocation7 + $0x80] sm:$0xf]
    %v4437 = vld [vmem:[#allocation7 + $0x84] sm:$0xf]
    %v4438 = vld [vmem:[#allocation7 + $0x88] sm:$0xf]
    %v4439 = vld [vmem:[#allocation7 + $0x8c] sm:$0xf]
    %v4440 = vld [vmem:[#allocation7 + $0x90] sm:$0xf]
    %v4441 = vld [vmem:[#allocation7 + $0x94] sm:$0xf]
    %v4442 = vld [vmem:[#allocation7 + $0x98] sm:$0xf]
    %v4443 = vld [vmem:[#allocation7 + $0x9c] sm:$0xf]
    %v4444 = vld [vmem:[#allocation7 + $0xa0] sm:$0xf]
    %v4445 = vld [vmem:[#allocation7 + $0xa4] sm:$0xf]
    %v4446 = vld [vmem:[#allocation7 + $0xa8] sm:$0xf]
    %v4447 = vld [vmem:[#allocation7 + $0xac] sm:$0xf]
    %v4448 = vld [vmem:[#allocation7 + $0xb0] sm:$0xf]
    %v4449 = vld [vmem:[#allocation7 + $0xb4] sm:$0xf]
    %v4450 = vld [vmem:[#allocation7 + $0xb8] sm:$0xf]
    %v4451 = vld [vmem:[#allocation7 + $0xbc] sm:$0xf]
    %v4452 = vld [vmem:[#allocation7 + $0xc0] sm:$0xf]
    %v4453 = vld [vmem:[#allocation7 + $0xc4] sm:$0xf]
    %v4454 = vld [vmem:[#allocation7 + $0xc8] sm:$0xf]
    %v4455 = vld [vmem:[#allocation7 + $0xcc] sm:$0xf]
    %v4456 = vld [vmem:[#allocation7 + $0xd0] sm:$0xf]
    %v4457 = vld [vmem:[#allocation7 + $0xd4] sm:$0xf]
    %v4458 = vld [vmem:[#allocation7 + $0xd8] sm:$0xf]
    %v4459 = vld [vmem:[#allocation7 + $0xdc] sm:$0xf]
    %v4460 = vld [vmem:[#allocation7 + $0xe0] sm:$0xf]
    %v4461 = vld [vmem:[#allocation7 + $0xe4] sm:$0xf]
    %v4462 = vld [vmem:[#allocation7 + $0xe8] sm:$0xf]
    %v4463 = vld [vmem:[#allocation7 + $0xec] sm:$0xf]
    %v4464 = vld [vmem:[#allocation7 + $0xf0] sm:$0xf]
    %v4465 = vld [vmem:[#allocation7 + $0xf4] sm:$0xf]
    %v4466 = vld [vmem:[#allocation7 + $0xf8] sm:$0xf]
    %v4467 = vld [vmem:[#allocation7 + $0xfc] sm:$0xf]
    %v4468 = vld [vmem:[%s8] sm:$0x1]
    %v4470 = vlaneseq
    %v4471 = vshrl.u32 %v4470, 7
    %v4472 = vsub.s32 0, %v4471
    %v4473 = vrot.slane %v4468, %v4472
    %v4539 = vunpack.c.l.b16 %v4404
    %v4540 = vunpack.c.l.b16 %v4405
    %v4541 = vunpack.c.l.b16 %v4406
    %v4542 = vunpack.c.l.b16 %v4407
    %v4543 = vunpack.c.l.b16 %v4408
    %v4544 = vunpack.c.l.b16 %v4409
    %v4545 = vunpack.c.l.b16 %v4410
    %v4546 = vunpack.c.l.b16 %v4411
    %v4547 = vunpack.c.l.b16 %v4412
    %v4548 = vunpack.c.l.b16 %v4413
    %v4549 = vunpack.c.l.b16 %v4414
    %v4550 = vunpack.c.l.b16 %v4415
    %v4551 = vunpack.c.l.b16 %v4416
    %v4552 = vunpack.c.l.b16 %v4417
    %v4553 = vunpack.c.l.b16 %v4418
    %v4554 = vunpack.c.l.b16 %v4419
    %v4555 = vunpack.c.l.b16 %v4420
    %v4556 = vunpack.c.l.b16 %v4421
    %v4557 = vunpack.c.l.b16 %v4422
    %v4558 = vunpack.c.l.b16 %v4423
    %v4559 = vunpack.c.l.b16 %v4424
    %v4560 = vunpack.c.l.b16 %v4425
    %v4561 = vunpack.c.l.b16 %v4426
    %v4562 = vunpack.c.l.b16 %v4427
    %v4563 = vunpack.c.l.b16 %v4428
    %v4564 = vunpack.c.l.b16 %v4429
    %v4565 = vunpack.c.l.b16 %v4430
    %v4566 = vunpack.c.l.b16 %v4431
    %v4567 = vunpack.c.l.b16 %v4432
    %v4568 = vunpack.c.l.b16 %v4433
    %v4569 = vunpack.c.l.b16 %v4434
    %v4570 = vunpack.c.l.b16 %v4435
    %v4571 = vunpack.c.l.b16 %v4436
    %v4572 = vunpack.c.l.b16 %v4437
    %v4573 = vunpack.c.l.b16 %v4438
    %v4574 = vunpack.c.l.b16 %v4439
    %v4575 = vunpack.c.l.b16 %v4440
    %v4576 = vunpack.c.l.b16 %v4441
    %v4577 = vunpack.c.l.b16 %v4442
    %v4578 = vunpack.c.l.b16 %v4443
    %v4579 = vunpack.c.l.b16 %v4444
    %v4580 = vunpack.c.l.b16 %v4445
    %v4581 = vunpack.c.l.b16 %v4446
    %v4582 = vunpack.c.l.b16 %v4447
    %v4583 = vunpack.c.l.b16 %v4448
    %v4584 = vunpack.c.l.b16 %v4449
    %v4585 = vunpack.c.l.b16 %v4450
    %v4586 = vunpack.c.l.b16 %v4451
    %v4587 = vunpack.c.l.b16 %v4452
    %v4588 = vunpack.c.l.b16 %v4453
    %v4589 = vunpack.c.l.b16 %v4454
    %v4590 = vunpack.c.l.b16 %v4455
    %v4591 = vunpack.c.l.b16 %v4456
    %v4592 = vunpack.c.l.b16 %v4457
    %v4593 = vunpack.c.l.b16 %v4458
    %v4594 = vunpack.c.l.b16 %v4459
    %v4595 = vunpack.c.l.b16 %v4460
    %v4596 = vunpack.c.l.b16 %v4461
    %v4597 = vunpack.c.l.b16 %v4462
    %v4598 = vunpack.c.l.b16 %v4463
    %v4599 = vunpack.c.l.b16 %v4464
    %v4600 = vunpack.c.l.b16 %v4465
    %v4601 = vunpack.c.l.b16 %v4466
    %v4602 = vunpack.c.l.b16 %v4467
    %v4603 = vpack.c.b16 %v4540, %v4539
    %v4604 = vpack.c.b16 %v4542, %v4541
    %v4605 = vpack.c.b16 %v4544, %v4543
    %v4606 = vpack.c.b16 %v4546, %v4545
    %v4607 = vpack.c.b16 %v4548, %v4547
    %v4608 = vpack.c.b16 %v4550, %v4549
    %v4609 = vpack.c.b16 %v4552, %v4551
    %v4610 = vpack.c.b16 %v4554, %v4553
    %v4611 = vpack.c.b16 %v4556, %v4555
    %v4612 = vpack.c.b16 %v4558, %v4557
    %v4613 = vpack.c.b16 %v4560, %v4559
    %v4614 = vpack.c.b16 %v4562, %v4561
    %v4615 = vpack.c.b16 %v4564, %v4563
    %v4616 = vpack.c.b16 %v4566, %v4565
    %v4617 = vpack.c.b16 %v4568, %v4567
    %v4618 = vpack.c.b16 %v4570, %v4569
    %v4619 = vpack.c.b16 %v4572, %v4571
    %v4620 = vpack.c.b16 %v4574, %v4573
    %v4621 = vpack.c.b16 %v4576, %v4575
    %v4622 = vpack.c.b16 %v4578, %v4577
    %v4623 = vpack.c.b16 %v4580, %v4579
    %v4624 = vpack.c.b16 %v4582, %v4581
    %v4625 = vpack.c.b16 %v4584, %v4583
    %v4626 = vpack.c.b16 %v4586, %v4585
    %v4627 = vpack.c.b16 %v4588, %v4587
    %v4628 = vpack.c.b16 %v4590, %v4589
    %v4629 = vpack.c.b16 %v4592, %v4591
    %v4630 = vpack.c.b16 %v4594, %v4593
    %v4631 = vpack.c.b16 %v4596, %v4595
    %v4632 = vpack.c.b16 %v4598, %v4597
    %v4633 = vpack.c.b16 %v4600, %v4599
    %v4634 = vpack.c.b16 %v4602, %v4601
    %4667 = vmatprep.subr.bf16.mxu0 0
    %4668 = vmatpush1.bf16.msra.mxu0 %v4603
    %4669 = vmatprep.subr.bf16.mxu0 0
    %4670 = vmatpush1.bf16.msra.mxu0 %v4604
    %4671 = vmatprep.subr.bf16.mxu0 0
    %4672 = vmatpush1.bf16.msra.mxu0 %v4605
    %4673 = vmatprep.subr.bf16.mxu0 0
    %4674 = vmatpush1.bf16.msra.mxu0 %v4606
    %4675 = vmatprep.subr.bf16.mxu0 0
    %4676 = vmatpush1.bf16.msra.mxu0 %v4607
    %4677 = vmatprep.subr.bf16.mxu0 0
    %4678 = vmatpush1.bf16.msra.mxu0 %v4608
    %4679 = vmatprep.subr.bf16.mxu0 0
    %4680 = vmatpush1.bf16.msra.mxu0 %v4609
    %4681 = vmatprep.subr.bf16.mxu0 0
    %4682 = vmatpush1.bf16.msra.mxu0 %v4610
    %4683 = vmatprep.subr.bf16.mxu0 0
    %4684 = vmatpush1.bf16.msra.mxu0 %v4611
    %4685 = vmatprep.subr.bf16.mxu0 0
    %4686 = vmatpush1.bf16.msra.mxu0 %v4612
    %4687 = vmatprep.subr.bf16.mxu0 0
    %4688 = vmatpush1.bf16.msra.mxu0 %v4613
    %4689 = vmatprep.subr.bf16.mxu0 0
    %4690 = vmatpush1.bf16.msra.mxu0 %v4614
    %4691 = vmatprep.subr.bf16.mxu0 0
    %4692 = vmatpush1.bf16.msra.mxu0 %v4615
    %4693 = vmatprep.subr.bf16.mxu0 0
    %4694 = vmatpush1.bf16.msra.mxu0 %v4616
    %4695 = vmatprep.subr.bf16.mxu0 0
    %4696 = vmatpush1.bf16.msra.mxu0 %v4617
    %4697 = vmatprep.subr.bf16.mxu0 0
    %4698 = vmatpush1.bf16.msra.mxu0 %v4618
    %4699 = vmatprep.mubr.bf16.mxu0 %v4401
    %4700 = vmatmul.mubr.bf16.gmra.mrb[0].mxu0 %v4400
    %v4701 = vpop.f32.mrb[0].mxu0
    %v4702 = vadd.f32 %v4473, %v4701
    %v4703 = vpop.f32.mrb[0].mxu0
    %v4704 = vpop.f32.mrb[0].mxu0
    %v4705 = vpop.f32.mrb[0].mxu0
    %4706 = vdwg.mxu0
    %4707 = vmatprep.subr.bf16.mxu0 0
    %4708 = vmatpush1.bf16.msra.mxu0 %v4619
    %4709 = vmatprep.subr.bf16.mxu0 0
    %4710 = vmatpush1.bf16.msra.mxu0 %v4620
    %4711 = vmatprep.subr.bf16.mxu0 0
    %4712 = vmatpush1.bf16.msra.mxu0 %v4621
    %4713 = vmatprep.subr.bf16.mxu0 0
    %4714 = vmatpush1.bf16.msra.mxu0 %v4622
    %4715 = vmatprep.subr.bf16.mxu0 0
    %4716 = vmatpush1.bf16.msra.mxu0 %v4623
    %4717 = vmatprep.subr.bf16.mxu0 0
    %4718 = vmatpush1.bf16.msra.mxu0 %v4624
    %4719 = vmatprep.subr.bf16.mxu0 0
    %4720 = vmatpush1.bf16.msra.mxu0 %v4625
    %4721 = vmatprep.subr.bf16.mxu0 0
    %4722 = vmatpush1.bf16.msra.mxu0 %v4626
    %4723 = vmatprep.subr.bf16.mxu0 0
    %4724 = vmatpush1.bf16.msra.mxu0 %v4627
    %4725 = vmatprep.subr.bf16.mxu0 0
    %4726 = vmatpush1.bf16.msra.mxu0 %v4628
    %4727 = vmatprep.subr.bf16.mxu0 0
    %4728 = vmatpush1.bf16.msra.mxu0 %v4629
    %4729 = vmatprep.subr.bf16.mxu0 0
    %4730 = vmatpush1.bf16.msra.mxu0 %v4630
    %4731 = vmatprep.subr.bf16.mxu0 0
    %4732 = vmatpush1.bf16.msra.mxu0 %v4631
    %4733 = vmatprep.subr.bf16.mxu0 0
    %4734 = vmatpush1.bf16.msra.mxu0 %v4632
    %4735 = vmatprep.subr.bf16.mxu0 0
    %4736 = vmatpush1.bf16.msra.mxu0 %v4633
    %4737 = vmatprep.subr.bf16.mxu0 0
    %4738 = vmatpush1.bf16.msra.mxu0 %v4634
    %4739 = vmatprep.mubr.bf16.mxu0 %v4403
    %4740 = vmatmul.mubr.bf16.gmra.mrb[0].mxu0 %v4402
    %v4741 = vpop.f32.mrb[0].mxu0
    %v4742 = vadd.f32 %v4702, %v4741
    %v4743 = vpop.f32.mrb[0].mxu0
    %v4744 = vpop.f32.mrb[0].mxu0
    %v4745 = vpop.f32.mrb[0].mxu0
    %4746 = vdwg.mxu0
    %v4747 = vlaneseq
    %v4748 = vand.u32 %v4747, 127
    %vm4749 = vcmp.lt.s32.totalorder %v4748, 6
    %v4750 = vsel %vm4749, %v4742, -1e+30
    %4751 = vmax.xlane.f32.xlu0 %v4750
    %v4752 = vpop.xlane.xlu0 %4751
    %v4753 = vsub.f32 %v4750, %v4752
    %v4754 = vmul.f32 %v4753, 1.442695
    %v4755 = vpow.pop %v4754
    %4756 = vadd.xlane.f32.xlu0 %v4755
    %v4757 = vpop.xlane.xlu0 %4756
    %v4758 = vlog2.pop %v4757
    %v4759 = vmul.f32 %v4758, 0.6931472
    %v4760 = vsub.f32 %v4753, %v4759
    %4761 = vst [vmem:[%s9] sm:$0xff] %v4760
    // Predicated region
    $region54: #{net_tgcn_forward.1} parent=1 // pred_check
      _
    $region55: #{net_tgcn_forward.1} parent=1 // pred_check_branch
      %4763 = sbr.rel (0) target = $region57
    $region56: #{net_tgcn_forward.1} parent=1 // pred_region
      _
    $region57: #{net_tgcn_forward.1} parent=1 // pred_fallthru
      _
    // Predicated region
    $region58: #{net_tgcn_forward.1} parent=1 // pred_check
      _
    $region59: #{net_tgcn_forward.1} parent=1 // pred_check_branch
      %4765 = sbr.rel (0) target = $region61
    $region60: #{net_tgcn_forward.1} parent=1 // pred_region
      _
    $region61: #{net_tgcn_forward.1} parent=1 // pred_fallthru
      _
    %4766 = vsyncpa [#allocation3], 1
    %4767 = vsyncpa [#allocation5], 1
    %4768 = vsyncpa [#allocation8], 1

</llo_original>
